<compile_context>
chip_gen: v7x
topology: tpu7x:2x2x1
jax: 0.10.0
libtpu: 0.0.40
codegen_flags: <defaults>
</compile_context>

<pallas_src>
import math
from functools import partial

import jax
import jax.numpy as jnp
from jax.experimental import pallas as pl
from jax.experimental.pallas import tpu as pltpu


# ----------------------------- spec helpers ---------------------------------

_PAR = pltpu.CompilerParams(dimension_semantics=("parallel",))


def _row_spec(S, D):
    return pl.BlockSpec((1, S, D), lambda b: (b, 0, 0))


def _w_spec(shape):
    zeros = (0,) * len(shape)
    return pl.BlockSpec(shape, lambda b: zeros)


# ----------------------------- Pallas kernels -------------------------------

def _attn_block_kernel(eps, H, lat_ref, cos_ref, sin_ref, anorm_ref, wqkv_ref,
                       wo_ref, cnorm_ref, woffw_ref, qn_ref, offw_ref):
    """Fused: RMSNorm + QKV + RoPE + head attention + wo + residual +
    cross RMSNorm + sampling_offsets/attention_weights projection."""
    S = lat_ref.shape[1]
    D = lat_ref.shape[2]
    hd = D // H
    half = hd // 2
    scale = 1.0 / math.sqrt(hd)

    x = lat_ref[0].astype(jnp.float32)                         # (S, D) latents
    ms = jnp.mean(x * x, axis=-1, keepdims=True)
    xn = x * jax.lax.rsqrt(ms + eps) * anorm_ref[...]          # attn RMSNorm

    qkv = jnp.dot(xn.astype(jnp.bfloat16), wqkv_ref[...],
                  preferred_element_type=jnp.float32)          # (S, 3D) f32

    cos = cos_ref[0]                                           # (S, hd//2)
    sin = sin_ref[0]

    def rope(xh):                                              # (S, hd)
        a, b = xh[:, :half], xh[:, half:]
        return jnp.concatenate([a * cos - b * sin, b * cos + a * sin], axis=-1)

    # Static unroll over heads keeps everything 2-D (no in-kernel reshapes).
    q_h, k_h, v_h = [], [], []
    for h in range(H):
        q_h.append(rope(qkv[:, h * hd:(h + 1) * hd]))
        k_h.append(rope(qkv[:, D + h * hd:D + (h + 1) * hd]))
        v_h.append(qkv[:, 2 * D + h * hd:2 * D + (h + 1) * hd])

    # Literal fp32 branch of the reference SelfAttention: xq/xk/xv stay
    # [S, H, hd]; matmul(xq, xk.transpose(2,3)) therefore contracts over hd
    # per TOKEN and the softmax runs over the heads axis.
    out_h = []
    for i in range(H):
        s_i = jnp.concatenate(
            [jnp.sum(q_h[i] * k_h[j], axis=-1, keepdims=True) for j in range(H)],
            axis=-1) * scale                                   # (S, H)
        mx = jnp.max(s_i, axis=-1, keepdims=True)
        e = jnp.exp(s_i - mx)
        # approx reciprocal (EUP): ~1e-3 rel. error, deliberate inference choice.
        p = e * pl.reciprocal(jnp.sum(e, axis=-1, keepdims=True), approx=True)
        o_i = p[:, 0:1] * v_h[0]
        for j in range(1, H):
            o_i = o_i + p[:, j:j + 1] * v_h[j]
        out_h.append(o_i)                                      # (S, hd)

    # Literal 'output.transpose(1,2).contiguous().view(B,S,-1)' of the
    # reference, applied to its (B,S,H,hd) output: a flat reinterpretation of
    # the (H,S,hd) block as (S, H*hd).  Built with static slices (tiny).
    rows = []
    for sp in range(S):
        parts = []
        for mm in range(H):
            r = sp * H + mm
            i, s = r // S, r % S
            parts.append(out_h[i][s:s + 1, :])                 # (1, hd)
        rows.append(jnp.concatenate(parts, axis=-1))           # (1, D)
    attn_scr = jnp.concatenate(rows, axis=0)                   # (S, D)

    proj = jnp.dot(attn_scr.astype(jnp.bfloat16), wo_ref[...],
                   preferred_element_type=jnp.float32)         # wo projection
    h_res = x + proj                                           # residual (dropout=id)

    ms2 = jnp.mean(h_res * h_res, axis=-1, keepdims=True)
    qn = h_res * jax.lax.rsqrt(ms2 + eps) * cnorm_ref[...]     # cross RMSNorm

    offw = jnp.dot(qn.astype(jnp.bfloat16), woffw_ref[...],
                   preferred_element_type=jnp.float32)         # offsets|weights

    qn_ref[0] = qn.astype(qn_ref.dtype)
    offw_ref[0] = offw.astype(offw_ref.dtype)


def _value_proj_kernel(v_ref, w_ref, o_ref):
    o_ref[0] = jnp.dot(v_ref[0].astype(jnp.bfloat16), w_ref[...],
                       preferred_element_type=jnp.float32).astype(o_ref.dtype)


def _outproj_ffn_kernel(eps, hidden, agg_ref, qn_ref, wout_ref, fnorm_ref,
                        w13_ref, w2_ref, o_ref):
    """output_proj + residual + ffn RMSNorm + SwiGLU FFN + residual."""
    proj = jnp.dot(agg_ref[0].astype(jnp.bfloat16), wout_ref[...],
                   preferred_element_type=jnp.float32)
    h = qn_ref[0].astype(jnp.float32) + proj
    ms = jnp.mean(h * h, axis=-1, keepdims=True)
    xn = h * jax.lax.rsqrt(ms + eps) * fnorm_ref[...]
    h13 = jnp.dot(xn.astype(jnp.bfloat16), w13_ref[...],
                  preferred_element_type=jnp.float32)          # (S, 2*hidden)
    h1 = h13[:, :hidden]                                       # lane-aligned split
    h3 = h13[:, hidden:]
    g = h1 * pl.reciprocal(1.0 + jnp.exp(-h1), approx=True) * h3   # silu(h1)*h3
    ffn = jnp.dot(g.astype(jnp.bfloat16), w2_ref[...],
                  preferred_element_type=jnp.float32)
    o_ref[0] = (h + ffn).astype(o_ref.dtype)


def _rmsnorm_kernel(eps, x_ref, w_ref, o_ref):
    x = x_ref[0].astype(jnp.float32)
    ms = jnp.mean(x * x, axis=-1, keepdims=True)
    o_ref[0] = (x * jax.lax.rsqrt(ms + eps) * w_ref[...]).astype(o_ref.dtype)


# ---------------------------- kernel wrappers --------------------------------

def attn_cross_prep(latents, cos_h, sin_h, attn_norm_w, wqkv, wo, cross_norm_w,
                    woffw, eps, H):
    B, S, D = latents.shape
    half = (D // H) // 2
    OW = woffw.shape[1]
    return pl.pallas_call(
        partial(_attn_block_kernel, eps, H),
        out_shape=(jax.ShapeDtypeStruct((B, S, D), jnp.float32),
                   jax.ShapeDtypeStruct((B, S, OW), jnp.float32)),
        grid=(B,),
        in_specs=[_row_spec(S, D), _row_spec(S, half), _row_spec(S, half),
                  _w_spec(attn_norm_w.shape), _w_spec(wqkv.shape),
                  _w_spec(wo.shape), _w_spec(cross_norm_w.shape),
                  _w_spec(woffw.shape)],
        out_specs=(_row_spec(S, D), _row_spec(S, OW)),
        compiler_params=_PAR,
    )(latents, cos_h, sin_h, attn_norm_w, wqkv, wo, cross_norm_w, woffw)


def value_projection(images, w_bf16):
    B, V, L, C = images.shape
    D = w_bf16.shape[1]
    x = images.reshape(B, V * L, C)                # one (V*L, C) block per batch
    out = pl.pallas_call(
        _value_proj_kernel,
        out_shape=jax.ShapeDtypeStruct((B, V * L, D), jnp.bfloat16),
        grid=(B,),
        in_specs=[pl.BlockSpec((1, V * L, C), lambda b: (b, 0, 0)),
                  _w_spec(w_bf16.shape)],
        out_specs=pl.BlockSpec((1, V * L, D), lambda b: (b, 0, 0)),
        compiler_params=_PAR,
    )(x, w_bf16)
    return out.reshape(B, V, L, D)


def outproj_ffn(agg, qn, wout, ffn_norm_w, w13, w2, eps):
    B, S, D = qn.shape
    hidden = w2.shape[0]
    return pl.pallas_call(
        partial(_outproj_ffn_kernel, eps, hidden),
        out_shape=jax.ShapeDtypeStruct((B, S, D), jnp.float32),
        grid=(B,),
        in_specs=[_row_spec(S, D), _row_spec(S, D), _w_spec(wout.shape),
                  _w_spec(ffn_norm_w.shape), _w_spec(w13.shape),
                  _w_spec(w2.shape)],
        out_specs=_row_spec(S, D),
        compiler_params=_PAR,
    )(agg, qn, wout, ffn_norm_w, w13, w2)


def rmsnorm(x, w, eps):
    B, S, D = x.shape
    return pl.pallas_call(
        partial(_rmsnorm_kernel, eps),
        out_shape=jax.ShapeDtypeStruct((B, S, D), jnp.float32),
        grid=(B,),
        in_specs=[_row_spec(S, D), _w_spec(w.shape)],
        out_specs=_row_spec(S, D),
        compiler_params=_PAR,
    )(x, w)


# ------------------------------ RoPE helpers ---------------------------------

def rope_tables(xyzs_idx, hd, theta):
    """Half-width cos / sin tables, shape (B, S, hd//2).

    TODO(synk): cuRoPE3D is an external CUDA extension; approximated as a
    per-axis rotary embedding whose rotation pairs are (t, t + hd//2) within a
    head, with the x/y/z grid index driving a third of the frequency slots each.
    """
    B, S, _ = xyzs_idx.shape
    d_axis = hd // 3
    nfreq = d_axis // 2
    inv_freq = 1.0 / (theta ** (jnp.arange(nfreq, dtype=jnp.float32) * 2.0 / d_axis))
    ang = xyzs_idx.astype(jnp.float32)[..., None] * inv_freq     # (B,S,3,nfreq)
    ang = ang.reshape(B, S, hd // 2)
    return jnp.cos(ang), jnp.sin(ang)


# --------------------- simplified deformable cross-attention -----------------

def deformable_sample(offw, value_proj_w, images, ref_cam, spatial_static, cfg):
    # TODO(synk): MSDCAWrapper (multi-scale deformable cross-attention) is an
    # external module; approximated as simplified multi-view deformable
    # attention.  The data-dependent bilinear gather stays in plain JAX.
    B, V, L, C = images.shape
    H = cfg['n_heads']
    nl, P = cfg['num_levels'], cfg['num_points']
    D = value_proj_w.shape[1]
    hd = D // H
    S = offw.shape[1]

    vproj = value_projection(images, value_proj_w).reshape(B, V, L, H, hd)
    off = offw[..., :H * nl * P * 2].reshape(B, S, H, nl, P, 2)
    attw = offw[..., H * nl * P * 2:].reshape(B, S, H, nl * P)
    attw = jax.nn.softmax(attw, axis=-1).reshape(B, S, H, nl, P)

    acc = jnp.zeros((B, V, S, H, hd), jnp.float32)
    for lvl, (hl, wl, start) in enumerate(spatial_static):
        feat = vproj[:, :, start:start + hl * wl].reshape(B * V, hl * wl, H, hd)
        wh = jnp.array([wl, hl], jnp.float32)
        loc = (ref_cam[:, :, :, None, None, :]
               + off[:, None, :, :, lvl, :, :] / wh)             # [B,V,S,H,P,2]
        u = jnp.clip(loc[..., 0], 0.0, 1.0) * (wl - 1)
        v_ = jnp.clip(loc[..., 1], 0.0, 1.0) * (hl - 1)
        x0 = jnp.floor(u)
        y0 = jnp.floor(v_)
        x1 = jnp.minimum(x0 + 1, wl - 1)
        y1 = jnp.minimum(y0 + 1, hl - 1)
        wx = (u - x0)[..., None]
        wy = (v_ - y0)[..., None]
        x0i = x0.astype(jnp.int32).reshape(B * V, S, H, P)
        x1i = x1.astype(jnp.int32).reshape(B * V, S, H, P)
        y0i = y0.astype(jnp.int32).reshape(B * V, S, H, P)
        y1i = y1.astype(jnp.int32).reshape(B * V, S, H, P)

        def gather(fe, idx):
            bi = jnp.arange(B * V)[:, None, None, None]
            hi = jnp.arange(H)[None, None, :, None]
            return fe[bi, idx, hi, :]                            # [BV,S,H,P,hd]

        g00 = gather(feat, y0i * wl + x0i).reshape(B, V, S, H, P, hd)
        g01 = gather(feat, y0i * wl + x1i).reshape(B, V, S, H, P, hd)
        g10 = gather(feat, y1i * wl + x0i).reshape(B, V, S, H, P, hd)
        g11 = gather(feat, y1i * wl + x1i).reshape(B, V, S, H, P, hd)
        samp = ((1 - wx) * (1 - wy) * g00 + wx * (1 - wy) * g01
                + (1 - wx) * wy * g10 + wx * wy * g11)
        w_l = attw[:, None, :, :, lvl, :, None]                  # [B,1,S,H,P,1]
        acc = acc + jnp.sum(samp * w_l, axis=4)

    return jnp.mean(acc, axis=1).reshape(B, S, D)                # average views


# ------------------------------ block / model --------------------------------

def block_forward(lp, cos_h, sin_h, latents, images, ref_cam, spatial_static,
                  cfg):
    H = cfg['n_heads']
    eps = cfg['norm_eps']

    # Fused self-attention sub-block (one kernel).
    qn, offw = attn_cross_prep(latents, cos_h, sin_h, lp['attn_norm'],
                               lp['wqkv'], lp['wo'], lp['cross_norm'],
                               lp['woffw'], eps, H)

    agg = deformable_sample(offw, lp['value_proj'], images, ref_cam,
                            spatial_static, cfg)

    # Fused output_proj + residual + ffn-norm + SwiGLU FFN + residual.
    return outproj_ffn(agg, qn, lp['output_proj'], lp['ffn_norm'],
                       lp['w13'], lp['w2'], eps)


def project_points(xyzs, proj_matrix):
    ones = jnp.ones_like(xyzs[..., :1])
    pts3d = jnp.concatenate([xyzs, ones], axis=-1)                   # [B,S,4]
    pts2d = jnp.einsum('bvij,bsj->bvsi', proj_matrix, pts3d)         # [B,V,S,3]
    depth = pts2d[..., 2:]
    uvs = pts2d[..., :2] / depth
    uvs = uvs.at[..., 0].set(1.0 - uvs[..., 0])
    return uvs


def geo_transformer_forward(fparams, cfg, xyzs, img_feats, spatial_shapes,
                            proj_matrix, xyz_scale=1.0):
    del spatial_shapes  # levels are kept static (cfg) for the bilinear gather
    B, S, _ = xyzs.shape
    D = cfg['dim']
    H = cfg['n_heads']
    hd = D // H
    qt = jnp.broadcast_to(fparams['query_token'], (B, S, D - 3)).astype(xyzs.dtype)
    h = jnp.concatenate([xyzs, qt], axis=-1)
    xyzs_idx = ((xyzs / xyz_scale + 1.0)
                * (cfg['grid_size'] - 1) / 2.0).astype(jnp.int32)
    ref_cam = project_points(xyzs, proj_matrix)
    cos_h, sin_h = rope_tables(xyzs_idx, hd, cfg['rope_theta'])

    # level_start_index (equivalent of the torch cumsum, done statically)
    spatial_static = []
    start = 0
    for (hl, wl) in cfg['spatial_shapes_static']:
        spatial_static.append((int(hl), int(wl), start))
        start += int(hl) * int(wl)

    for lp in fparams['layers']:
        h = block_forward(lp, cos_h, sin_h, h, img_feats, ref_cam,
                          spatial_static, cfg)
    return rmsnorm(h, fparams['norm'], cfg['norm_eps'])


# ------------------------------ parameter init --------------------------------

def ffn_hidden_dim(dim, multiple_of, ffn_dim_multiplier):
    hidden = int(2 * (4 * dim) / 3)
    if ffn_dim_multiplier is not None:
        hidden = int(ffn_dim_multiplier * hidden)
    return multiple_of * ((hidden + multiple_of - 1) // multiple_of)


def init_params(key, cfg):
    D = cfg['dim']
    H = cfg['n_heads']
    hidden = cfg['ffn_hidden']
    nl, P = cfg['num_levels'], cfg['num_points']
    C = cfg['value_dim']
    keys = iter(jax.random.split(key, 4 + cfg['n_layers'] * 16))

    def w(shape, scale=0.02):
        return (scale * jax.random.normal(next(keys), shape)).astype(jnp.float32)

    layers = []
    for _ in range(cfg['n_layers']):
        layers.append(dict(
            wq=w((D, D)), wk=w((D, D)), wv=w((D, D)), wo=w((D, D)),
            value_proj=w((C, D)),
            sampling_offsets=w((D, H * nl * P * 2)),
            attention_weights=w((D, H * nl * P)),
            output_proj=w((D, D)),
            w1=w((D, hidden)), w3=w((D, hidden)), w2=w((hidden, D)),
            attn_norm=jnp.ones((D,), jnp.float32),
            cross_norm=jnp.ones((D,), jnp.float32),
            ffn_norm=jnp.ones((D,), jnp.float32),
        ))
    return dict(query_token=w((1, 1, D - 3), 1.0),
                layers=layers,
                norm=jnp.ones((D,), jnp.float32))


def prepare_params(params):
    """Fuse and pre-cast weights ONCE (kept out of the per-step compute path):
    bf16 matmul panels (wqkv = wq|wk|wv, woffw = offsets|weights, w13 = w1|w3),
    f32 (1, D) norm scales."""
    fused_layers = []
    for lp in params['layers']:
        D = lp['wq'].shape[0]
        fused_layers.append(dict(
            attn_norm=lp['attn_norm'].astype(jnp.float32).reshape(1, D),
            cross_norm=lp['cross_norm'].astype(jnp.float32).reshape(1, D),
            ffn_norm=lp['ffn_norm'].astype(jnp.float32).reshape(1, D),
            wqkv=jnp.concatenate([lp['wq'], lp['wk'], lp['wv']],
                                 axis=1).astype(jnp.bfloat16),
            wo=lp['wo'].astype(jnp.bfloat16),
            woffw=jnp.concatenate([lp['sampling_offsets'],
                                   lp['attention_weights']],
                                  axis=1).astype(jnp.bfloat16),
            value_proj=lp['value_proj'].astype(jnp.bfloat16),
            output_proj=lp['output_proj'].astype(jnp.bfloat16),
            w13=jnp.concatenate([lp['w1'], lp['w3']],
                                axis=1).astype(jnp.bfloat16),
            w2=lp['w2'].astype(jnp.bfloat16),
        ))
    D = params['norm'].shape[0]
    return dict(query_token=params['query_token'],
                layers=fused_layers,
                norm=params['norm'].astype(jnp.float32).reshape(1, D))


# ----------------------------------- main -------------------------------------

if __name__ == "__main__":
    B, S, V = 2, 8, 2
    dim, n_heads, n_layers = 48, 4, 2      # head_dim = 12 (divisible by 6 for 3D RoPE)
    cfg = dict(
        dim=dim, n_heads=n_heads, n_layers=n_layers,
        norm_eps=1e-5, rope_theta=10000.0, grid_size=16,
        num_levels=2, num_points=2,
        spatial_shapes_static=((8, 8), (4, 4)),
        value_dim=dim,
        ffn_hidden=ffn_hidden_dim(dim, 32, None),   # = 128 (lane aligned)
    )

    key = jax.random.PRNGKey(0)
    kp, kx, kf, kpm = jax.random.split(key, 4)
    params = init_params(kp, cfg)
    fparams = prepare_params(params)       # fused bf16 weights, built once

    xyzs = jax.random.uniform(kx, (B, S, 3), jnp.float32, -1.0, 1.0)
    L = sum(h * w for h, w in cfg['spatial_shapes_static'])
    img_feats = jax.random.normal(kf, (B, V, L, cfg['value_dim']), jnp.float32)
    spatial_shapes = jnp.array(cfg['spatial_shapes_static'], jnp.int32)

    # Simple world->image projection with guaranteed positive depth (z + 3).
    proj = jnp.zeros((B, V, 3, 4), jnp.float32)
    proj = proj.at[:, :, 0, 0].set(0.25).at[:, :, 0, 3].set(0.5)
    proj = proj.at[:, :, 1, 1].set(0.25).at[:, :, 1, 3].set(0.5)
    proj = proj.at[:, :, 2, 2].set(1.0).at[:, :, 2, 3].set(3.0)
    proj = proj + 0.01 * jax.random.normal(kpm, (B, V, 3, 4), jnp.float32)

    def run(xyzs_, img_feats_, spatial_shapes_, proj_):
        return geo_transformer_forward(fparams, cfg, xyzs_, img_feats_,
                                       spatial_shapes_, proj_, xyz_scale=1.0)

    out = jax.jit(run)(xyzs, img_feats, spatial_shapes, proj)
    out = jax.block_until_ready(out)
    assert out.shape == (B, S, dim)
    assert bool(jnp.all(jnp.isfinite(out)))
    print("KERNEL_OK")
</pallas_src>

<mosaic_0001>
module attributes {stable_mosaic.version = 11 : i64} {
  func.func @_attn_block_kernel(%arg0: i32, %arg1: memref<1x8x48xf32, #tpu.memory_space<vmem>>, %arg2: memref<1x8x6xf32, #tpu.memory_space<vmem>>, %arg3: memref<1x8x6xf32, #tpu.memory_space<vmem>>, %arg4: memref<1x48xf32, #tpu.memory_space<vmem>>, %arg5: memref<48x144xbf16, #tpu.memory_space<vmem>>, %arg6: memref<48x48xbf16, #tpu.memory_space<vmem>>, %arg7: memref<1x48xf32, #tpu.memory_space<vmem>>, %arg8: memref<48x48xbf16, #tpu.memory_space<vmem>>, %arg9: memref<1x8x48xf32, #tpu.memory_space<vmem>>, %arg10: memref<1x8x48xf32, #tpu.memory_space<vmem>>) attributes {dimension_semantics = [#tpu.dimension_semantics<parallel>], iteration_bounds = array<i64: 2>, scalar_prefetch = 0 : i64, scratch_operands = 0 : i64, tpu.core_type = #tpu.core_type<tc>, window_params = [{transform_indices = @transform_0, window_bounds = array<i64: 1, 8, 48>}, {transform_indices = @transform_1, window_bounds = array<i64: 1, 8, 6>}, {transform_indices = @transform_2, window_bounds = array<i64: 1, 8, 6>}, {pipeline_mode = #tpu.pipeline_mode<synchronous>, transform_indices = @transform_3, window_bounds = array<i64: 1, 48>}, {pipeline_mode = #tpu.pipeline_mode<synchronous>, transform_indices = @transform_4, window_bounds = array<i64: 48, 144>}, {pipeline_mode = #tpu.pipeline_mode<synchronous>, transform_indices = @transform_5, window_bounds = array<i64: 48, 48>}, {pipeline_mode = #tpu.pipeline_mode<synchronous>, transform_indices = @transform_6, window_bounds = array<i64: 1, 48>}, {pipeline_mode = #tpu.pipeline_mode<synchronous>, transform_indices = @transform_7, window_bounds = array<i64: 48, 48>}, {transform_indices = @transform_8, window_bounds = array<i64: 1, 8, 48>}, {transform_indices = @transform_9, window_bounds = array<i64: 1, 8, 48>}]} {
    %c0 = arith.constant 0 : index
    %c0_0 = arith.constant 0 : index
    %c0_1 = arith.constant 0 : index
    %0 = vector.load %arg1[%c0, %c0_0, %c0_1] : memref<1x8x48xf32, #tpu.memory_space<vmem>>, vector<1x8x48xf32>
    %1 = vector.shape_cast %0 : vector<1x8x48xf32> to vector<8x48xf32>
    %2 = arith.mulf %1, %1 : vector<8x48xf32>
    %cst = arith.constant dense<0.000000e+00> : vector<8xf32>
    %3 = vector.multi_reduction <add>, %2, %cst [1] : vector<8x48xf32> to vector<8xf32>
    %4 = vector.shape_cast %3 : vector<8xf32> to vector<8x1xf32>
    %cst_2 = arith.constant 4.800000e+01 : f32
    %5 = vector.broadcast %cst_2 : f32 to vector<8x1xf32>
    %6 = arith.divf %4, %5 : vector<8x1xf32>
    %cst_3 = arith.constant 9.99999974E-6 : f32
    %7 = vector.broadcast %cst_3 : f32 to vector<8x1xf32>
    %8 = arith.addf %6, %7 : vector<8x1xf32>
    %9 = math.rsqrt %8 : vector<8x1xf32>
    %10 = vector.broadcast %9 : vector<8x1xf32> to vector<8x48xf32>
    %11 = arith.mulf %1, %10 : vector<8x48xf32>
    %c0_4 = arith.constant 0 : index
    %c0_5 = arith.constant 0 : index
    %12 = vector.load %arg4[%c0_4, %c0_5] : memref<1x48xf32, #tpu.memory_space<vmem>>, vector<1x48xf32>
    %13 = vector.broadcast %12 : vector<1x48xf32> to vector<8x48xf32>
    %14 = arith.mulf %11, %13 : vector<8x48xf32>
    %15 = arith.truncf %14 : vector<8x48xf32> to vector<8x48xbf16>
    %c0_6 = arith.constant 0 : index
    %c0_7 = arith.constant 0 : index
    %16 = vector.load %arg5[%c0_6, %c0_7] : memref<48x144xbf16, #tpu.memory_space<vmem>>, vector<48x144xbf16>
    %cst_8 = arith.constant dense<0.000000e+00> : vector<8x144xf32>
    %17 = tpu.matmul %15, %16, %cst_8 {dimension_numbers = #tpu.dot_dimension_numbers<[1], [0], [0], [1], [0, 0, 1, 1], [], []>} : vector<8x48xbf16>, vector<48x144xbf16>, vector<8x144xf32> -> vector<8x144xf32>
    %c0_9 = arith.constant 0 : index
    %c0_10 = arith.constant 0 : index
    %c0_11 = arith.constant 0 : index
    %18 = vector.load %arg2[%c0_9, %c0_10, %c0_11] : memref<1x8x6xf32, #tpu.memory_space<vmem>>, vector<1x8x6xf32>
    %19 = vector.shape_cast %18 : vector<1x8x6xf32> to vector<8x6xf32>
    %c0_12 = arith.constant 0 : index
    %c0_13 = arith.constant 0 : index
    %c0_14 = arith.constant 0 : index
    %20 = vector.load %arg3[%c0_12, %c0_13, %c0_14] : memref<1x8x6xf32, #tpu.memory_space<vmem>>, vector<1x8x6xf32>
    %21 = vector.shape_cast %20 : vector<1x8x6xf32> to vector<8x6xf32>
    %22 = vector.extract_strided_slice %17 {offsets = [0, 0], sizes = [8, 12], strides = [1, 1]} : vector<8x144xf32> to vector<8x12xf32>
    %23 = vector.extract_strided_slice %22 {offsets = [0, 0], sizes = [8, 6], strides = [1, 1]} : vector<8x12xf32> to vector<8x6xf32>
    %24 = vector.extract_strided_slice %22 {offsets = [0, 6], sizes = [8, 6], strides = [1, 1]} : vector<8x12xf32> to vector<8x6xf32>
    %25 = arith.mulf %23, %19 : vector<8x6xf32>
    %26 = arith.mulf %24, %21 : vector<8x6xf32>
    %27 = arith.subf %25, %26 : vector<8x6xf32>
    %28 = arith.mulf %24, %19 : vector<8x6xf32>
    %29 = arith.mulf %23, %21 : vector<8x6xf32>
    %30 = arith.addf %28, %29 : vector<8x6xf32>
    %31 = tpu.concatenate %27, %30 in 1 : vector<8x6xf32>, vector<8x6xf32> -> vector<8x12xf32>
    %32 = vector.extract_strided_slice %17 {offsets = [0, 48], sizes = [8, 12], strides = [1, 1]} : vector<8x144xf32> to vector<8x12xf32>
    %33 = vector.extract_strided_slice %32 {offsets = [0, 0], sizes = [8, 6], strides = [1, 1]} : vector<8x12xf32> to vector<8x6xf32>
    %34 = vector.extract_strided_slice %32 {offsets = [0, 6], sizes = [8, 6], strides = [1, 1]} : vector<8x12xf32> to vector<8x6xf32>
    %35 = arith.mulf %33, %19 : vector<8x6xf32>
    %36 = arith.mulf %34, %21 : vector<8x6xf32>
    %37 = arith.subf %35, %36 : vector<8x6xf32>
    %38 = arith.mulf %34, %19 : vector<8x6xf32>
    %39 = arith.mulf %33, %21 : vector<8x6xf32>
    %40 = arith.addf %38, %39 : vector<8x6xf32>
    %41 = tpu.concatenate %37, %40 in 1 : vector<8x6xf32>, vector<8x6xf32> -> vector<8x12xf32>
    %42 = vector.extract_strided_slice %17 {offsets = [0, 96], sizes = [8, 12], strides = [1, 1]} : vector<8x144xf32> to vector<8x12xf32>
    %43 = vector.extract_strided_slice %17 {offsets = [0, 12], sizes = [8, 12], strides = [1, 1]} : vector<8x144xf32> to vector<8x12xf32>
    %44 = vector.extract_strided_slice %43 {offsets = [0, 0], sizes = [8, 6], strides = [1, 1]} : vector<8x12xf32> to vector<8x6xf32>
    %45 = vector.extract_strided_slice %43 {offsets = [0, 6], sizes = [8, 6], strides = [1, 1]} : vector<8x12xf32> to vector<8x6xf32>
    %46 = arith.mulf %44, %19 : vector<8x6xf32>
    %47 = arith.mulf %45, %21 : vector<8x6xf32>
    %48 = arith.subf %46, %47 : vector<8x6xf32>
    %49 = arith.mulf %45, %19 : vector<8x6xf32>
    %50 = arith.mulf %44, %21 : vector<8x6xf32>
    %51 = arith.addf %49, %50 : vector<8x6xf32>
    %52 = tpu.concatenate %48, %51 in 1 : vector<8x6xf32>, vector<8x6xf32> -> vector<8x12xf32>
    %53 = vector.extract_strided_slice %17 {offsets = [0, 60], sizes = [8, 12], strides = [1, 1]} : vector<8x144xf32> to vector<8x12xf32>
    %54 = vector.extract_strided_slice %53 {offsets = [0, 0], sizes = [8, 6], strides = [1, 1]} : vector<8x12xf32> to vector<8x6xf32>
    %55 = vector.extract_strided_slice %53 {offsets = [0, 6], sizes = [8, 6], strides = [1, 1]} : vector<8x12xf32> to vector<8x6xf32>
    %56 = arith.mulf %54, %19 : vector<8x6xf32>
    %57 = arith.mulf %55, %21 : vector<8x6xf32>
    %58 = arith.subf %56, %57 : vector<8x6xf32>
    %59 = arith.mulf %55, %19 : vector<8x6xf32>
    %60 = arith.mulf %54, %21 : vector<8x6xf32>
    %61 = arith.addf %59, %60 : vector<8x6xf32>
    %62 = tpu.concatenate %58, %61 in 1 : vector<8x6xf32>, vector<8x6xf32> -> vector<8x12xf32>
    %63 = vector.extract_strided_slice %17 {offsets = [0, 108], sizes = [8, 12], strides = [1, 1]} : vector<8x144xf32> to vector<8x12xf32>
    %64 = vector.extract_strided_slice %17 {offsets = [0, 24], sizes = [8, 12], strides = [1, 1]} : vector<8x144xf32> to vector<8x12xf32>
    %65 = vector.extract_strided_slice %64 {offsets = [0, 0], sizes = [8, 6], strides = [1, 1]} : vector<8x12xf32> to vector<8x6xf32>
    %66 = vector.extract_strided_slice %64 {offsets = [0, 6], sizes = [8, 6], strides = [1, 1]} : vector<8x12xf32> to vector<8x6xf32>
    %67 = arith.mulf %65, %19 : vector<8x6xf32>
    %68 = arith.mulf %66, %21 : vector<8x6xf32>
    %69 = arith.subf %67, %68 : vector<8x6xf32>
    %70 = arith.mulf %66, %19 : vector<8x6xf32>
    %71 = arith.mulf %65, %21 : vector<8x6xf32>
    %72 = arith.addf %70, %71 : vector<8x6xf32>
    %73 = tpu.concatenate %69, %72 in 1 : vector<8x6xf32>, vector<8x6xf32> -> vector<8x12xf32>
    %74 = vector.extract_strided_slice %17 {offsets = [0, 72], sizes = [8, 12], strides = [1, 1]} : vector<8x144xf32> to vector<8x12xf32>
    %75 = vector.extract_strided_slice %74 {offsets = [0, 0], sizes = [8, 6], strides = [1, 1]} : vector<8x12xf32> to vector<8x6xf32>
    %76 = vector.extract_strided_slice %74 {offsets = [0, 6], sizes = [8, 6], strides = [1, 1]} : vector<8x12xf32> to vector<8x6xf32>
    %77 = arith.mulf %75, %19 : vector<8x6xf32>
    %78 = arith.mulf %76, %21 : vector<8x6xf32>
    %79 = arith.subf %77, %78 : vector<8x6xf32>
    %80 = arith.mulf %76, %19 : vector<8x6xf32>
    %81 = arith.mulf %75, %21 : vector<8x6xf32>
    %82 = arith.addf %80, %81 : vector<8x6xf32>
    %83 = tpu.concatenate %79, %82 in 1 : vector<8x6xf32>, vector<8x6xf32> -> vector<8x12xf32>
    %84 = vector.extract_strided_slice %17 {offsets = [0, 120], sizes = [8, 12], strides = [1, 1]} : vector<8x144xf32> to vector<8x12xf32>
    %85 = vector.extract_strided_slice %17 {offsets = [0, 36], sizes = [8, 12], strides = [1, 1]} : vector<8x144xf32> to vector<8x12xf32>
    %86 = vector.extract_strided_slice %85 {offsets = [0, 0], sizes = [8, 6], strides = [1, 1]} : vector<8x12xf32> to vector<8x6xf32>
    %87 = vector.extract_strided_slice %85 {offsets = [0, 6], sizes = [8, 6], strides = [1, 1]} : vector<8x12xf32> to vector<8x6xf32>
    %88 = arith.mulf %86, %19 : vector<8x6xf32>
    %89 = arith.mulf %87, %21 : vector<8x6xf32>
    %90 = arith.subf %88, %89 : vector<8x6xf32>
    %91 = arith.mulf %87, %19 : vector<8x6xf32>
    %92 = arith.mulf %86, %21 : vector<8x6xf32>
    %93 = arith.addf %91, %92 : vector<8x6xf32>
    %94 = tpu.concatenate %90, %93 in 1 : vector<8x6xf32>, vector<8x6xf32> -> vector<8x12xf32>
    %95 = vector.extract_strided_slice %17 {offsets = [0, 84], sizes = [8, 12], strides = [1, 1]} : vector<8x144xf32> to vector<8x12xf32>
    %96 = vector.extract_strided_slice %95 {offsets = [0, 0], sizes = [8, 6], strides = [1, 1]} : vector<8x12xf32> to vector<8x6xf32>
    %97 = vector.extract_strided_slice %95 {offsets = [0, 6], sizes = [8, 6], strides = [1, 1]} : vector<8x12xf32> to vector<8x6xf32>
    %98 = arith.mulf %96, %19 : vector<8x6xf32>
    %99 = arith.mulf %97, %21 : vector<8x6xf32>
    %100 = arith.subf %98, %99 : vector<8x6xf32>
    %101 = arith.mulf %97, %19 : vector<8x6xf32>
    %102 = arith.mulf %96, %21 : vector<8x6xf32>
    %103 = arith.addf %101, %102 : vector<8x6xf32>
    %104 = tpu.concatenate %100, %103 in 1 : vector<8x6xf32>, vector<8x6xf32> -> vector<8x12xf32>
    %105 = vector.extract_strided_slice %17 {offsets = [0, 132], sizes = [8, 12], strides = [1, 1]} : vector<8x144xf32> to vector<8x12xf32>
    %106 = arith.mulf %31, %41 : vector<8x12xf32>
    %cst_15 = arith.constant dense<0.000000e+00> : vector<8xf32>
    %107 = vector.multi_reduction <add>, %106, %cst_15 [1] : vector<8x12xf32> to vector<8xf32>
    %108 = vector.shape_cast %107 : vector<8xf32> to vector<8x1xf32>
    %109 = arith.mulf %31, %62 : vector<8x12xf32>
    %cst_16 = arith.constant dense<0.000000e+00> : vector<8xf32>
    %110 = vector.multi_reduction <add>, %109, %cst_16 [1] : vector<8x12xf32> to vector<8xf32>
    %111 = vector.shape_cast %110 : vector<8xf32> to vector<8x1xf32>
    %112 = arith.mulf %31, %83 : vector<8x12xf32>
    %cst_17 = arith.constant dense<0.000000e+00> : vector<8xf32>
    %113 = vector.multi_reduction <add>, %112, %cst_17 [1] : vector<8x12xf32> to vector<8xf32>
    %114 = vector.shape_cast %113 : vector<8xf32> to vector<8x1xf32>
    %115 = arith.mulf %31, %104 : vector<8x12xf32>
    %cst_18 = arith.constant dense<0.000000e+00> : vector<8xf32>
    %116 = vector.multi_reduction <add>, %115, %cst_18 [1] : vector<8x12xf32> to vector<8xf32>
    %117 = vector.shape_cast %116 : vector<8xf32> to vector<8x1xf32>
    %118 = tpu.concatenate %108, %111, %114, %117 in 1 : vector<8x1xf32>, vector<8x1xf32>, vector<8x1xf32>, vector<8x1xf32> -> vector<8x4xf32>
    %cst_19 = arith.constant 0.288675129 : f32
    %119 = vector.broadcast %cst_19 : f32 to vector<8x4xf32>
    %120 = arith.mulf %118, %119 : vector<8x4xf32>
    %cst_20 = arith.constant dense<0xFF800000> : vector<8xf32>
    %121 = vector.multi_reduction <maximumf>, %120, %cst_20 [1] : vector<8x4xf32> to vector<8xf32>
    %122 = vector.shape_cast %121 : vector<8xf32> to vector<8x1xf32>
    %123 = vector.broadcast %122 : vector<8x1xf32> to vector<8x4xf32>
    %124 = arith.subf %120, %123 : vector<8x4xf32>
    %125 = math.exp %124 : vector<8x4xf32>
    %cst_21 = arith.constant dense<0.000000e+00> : vector<8xf32>
    %126 = vector.multi_reduction <add>, %125, %cst_21 [1] : vector<8x4xf32> to vector<8xf32>
    %127 = vector.shape_cast %126 : vector<8xf32> to vector<8x1xf32>
    %128 = tpu.reciprocal %127 {approx = true} : vector<8x1xf32> -> vector<8x1xf32>
    %129 = vector.broadcast %128 : vector<8x1xf32> to vector<8x4xf32>
    %130 = arith.mulf %125, %129 : vector<8x4xf32>
    %131 = vector.extract_strided_slice %130 {offsets = [0, 0], sizes = [8, 1], strides = [1, 1]} : vector<8x4xf32> to vector<8x1xf32>
    %132 = vector.broadcast %131 : vector<8x1xf32> to vector<8x12xf32>
    %133 = arith.mulf %132, %42 : vector<8x12xf32>
    %134 = vector.extract_strided_slice %130 {offsets = [0, 1], sizes = [8, 1], strides = [1, 1]} : vector<8x4xf32> to vector<8x1xf32>
    %135 = vector.broadcast %134 : vector<8x1xf32> to vector<8x12xf32>
    %136 = arith.mulf %135, %63 : vector<8x12xf32>
    %137 = arith.addf %133, %136 : vector<8x12xf32>
    %138 = vector.extract_strided_slice %130 {offsets = [0, 2], sizes = [8, 1], strides = [1, 1]} : vector<8x4xf32> to vector<8x1xf32>
    %139 = vector.broadcast %138 : vector<8x1xf32> to vector<8x12xf32>
    %140 = arith.mulf %139, %84 : vector<8x12xf32>
    %141 = arith.addf %137, %140 : vector<8x12xf32>
    %142 = vector.extract_strided_slice %130 {offsets = [0, 3], sizes = [8, 1], strides = [1, 1]} : vector<8x4xf32> to vector<8x1xf32>
    %143 = vector.broadcast %142 : vector<8x1xf32> to vector<8x12xf32>
    %144 = arith.mulf %143, %105 : vector<8x12xf32>
    %145 = arith.addf %141, %144 : vector<8x12xf32>
    %146 = arith.mulf %52, %41 : vector<8x12xf32>
    %cst_22 = arith.constant dense<0.000000e+00> : vector<8xf32>
    %147 = vector.multi_reduction <add>, %146, %cst_22 [1] : vector<8x12xf32> to vector<8xf32>
    %148 = vector.shape_cast %147 : vector<8xf32> to vector<8x1xf32>
    %149 = arith.mulf %52, %62 : vector<8x12xf32>
    %cst_23 = arith.constant dense<0.000000e+00> : vector<8xf32>
    %150 = vector.multi_reduction <add>, %149, %cst_23 [1] : vector<8x12xf32> to vector<8xf32>
    %151 = vector.shape_cast %150 : vector<8xf32> to vector<8x1xf32>
    %152 = arith.mulf %52, %83 : vector<8x12xf32>
    %cst_24 = arith.constant dense<0.000000e+00> : vector<8xf32>
    %153 = vector.multi_reduction <add>, %152, %cst_24 [1] : vector<8x12xf32> to vector<8xf32>
    %154 = vector.shape_cast %153 : vector<8xf32> to vector<8x1xf32>
    %155 = arith.mulf %52, %104 : vector<8x12xf32>
    %cst_25 = arith.constant dense<0.000000e+00> : vector<8xf32>
    %156 = vector.multi_reduction <add>, %155, %cst_25 [1] : vector<8x12xf32> to vector<8xf32>
    %157 = vector.shape_cast %156 : vector<8xf32> to vector<8x1xf32>
    %158 = tpu.concatenate %148, %151, %154, %157 in 1 : vector<8x1xf32>, vector<8x1xf32>, vector<8x1xf32>, vector<8x1xf32> -> vector<8x4xf32>
    %cst_26 = arith.constant 0.288675129 : f32
    %159 = vector.broadcast %cst_26 : f32 to vector<8x4xf32>
    %160 = arith.mulf %158, %159 : vector<8x4xf32>
    %cst_27 = arith.constant dense<0xFF800000> : vector<8xf32>
    %161 = vector.multi_reduction <maximumf>, %160, %cst_27 [1] : vector<8x4xf32> to vector<8xf32>
    %162 = vector.shape_cast %161 : vector<8xf32> to vector<8x1xf32>
    %163 = vector.broadcast %162 : vector<8x1xf32> to vector<8x4xf32>
    %164 = arith.subf %160, %163 : vector<8x4xf32>
    %165 = math.exp %164 : vector<8x4xf32>
    %cst_28 = arith.constant dense<0.000000e+00> : vector<8xf32>
    %166 = vector.multi_reduction <add>, %165, %cst_28 [1] : vector<8x4xf32> to vector<8xf32>
    %167 = vector.shape_cast %166 : vector<8xf32> to vector<8x1xf32>
    %168 = tpu.reciprocal %167 {approx = true} : vector<8x1xf32> -> vector<8x1xf32>
    %169 = vector.broadcast %168 : vector<8x1xf32> to vector<8x4xf32>
    %170 = arith.mulf %165, %169 : vector<8x4xf32>
    %171 = vector.extract_strided_slice %170 {offsets = [0, 0], sizes = [8, 1], strides = [1, 1]} : vector<8x4xf32> to vector<8x1xf32>
    %172 = vector.broadcast %171 : vector<8x1xf32> to vector<8x12xf32>
    %173 = arith.mulf %172, %42 : vector<8x12xf32>
    %174 = vector.extract_strided_slice %170 {offsets = [0, 1], sizes = [8, 1], strides = [1, 1]} : vector<8x4xf32> to vector<8x1xf32>
    %175 = vector.broadcast %174 : vector<8x1xf32> to vector<8x12xf32>
    %176 = arith.mulf %175, %63 : vector<8x12xf32>
    %177 = arith.addf %173, %176 : vector<8x12xf32>
    %178 = vector.extract_strided_slice %170 {offsets = [0, 2], sizes = [8, 1], strides = [1, 1]} : vector<8x4xf32> to vector<8x1xf32>
    %179 = vector.broadcast %178 : vector<8x1xf32> to vector<8x12xf32>
    %180 = arith.mulf %179, %84 : vector<8x12xf32>
    %181 = arith.addf %177, %180 : vector<8x12xf32>
    %182 = vector.extract_strided_slice %170 {offsets = [0, 3], sizes = [8, 1], strides = [1, 1]} : vector<8x4xf32> to vector<8x1xf32>
    %183 = vector.broadcast %182 : vector<8x1xf32> to vector<8x12xf32>
    %184 = arith.mulf %183, %105 : vector<8x12xf32>
    %185 = arith.addf %181, %184 : vector<8x12xf32>
    %186 = arith.mulf %73, %41 : vector<8x12xf32>
    %cst_29 = arith.constant dense<0.000000e+00> : vector<8xf32>
    %187 = vector.multi_reduction <add>, %186, %cst_29 [1] : vector<8x12xf32> to vector<8xf32>
    %188 = vector.shape_cast %187 : vector<8xf32> to vector<8x1xf32>
    %189 = arith.mulf %73, %62 : vector<8x12xf32>
    %cst_30 = arith.constant dense<0.000000e+00> : vector<8xf32>
    %190 = vector.multi_reduction <add>, %189, %cst_30 [1] : vector<8x12xf32> to vector<8xf32>
    %191 = vector.shape_cast %190 : vector<8xf32> to vector<8x1xf32>
    %192 = arith.mulf %73, %83 : vector<8x12xf32>
    %cst_31 = arith.constant dense<0.000000e+00> : vector<8xf32>
    %193 = vector.multi_reduction <add>, %192, %cst_31 [1] : vector<8x12xf32> to vector<8xf32>
    %194 = vector.shape_cast %193 : vector<8xf32> to vector<8x1xf32>
    %195 = arith.mulf %73, %104 : vector<8x12xf32>
    %cst_32 = arith.constant dense<0.000000e+00> : vector<8xf32>
    %196 = vector.multi_reduction <add>, %195, %cst_32 [1] : vector<8x12xf32> to vector<8xf32>
    %197 = vector.shape_cast %196 : vector<8xf32> to vector<8x1xf32>
    %198 = tpu.concatenate %188, %191, %194, %197 in 1 : vector<8x1xf32>, vector<8x1xf32>, vector<8x1xf32>, vector<8x1xf32> -> vector<8x4xf32>
    %cst_33 = arith.constant 0.288675129 : f32
    %199 = vector.broadcast %cst_33 : f32 to vector<8x4xf32>
    %200 = arith.mulf %198, %199 : vector<8x4xf32>
    %cst_34 = arith.constant dense<0xFF800000> : vector<8xf32>
    %201 = vector.multi_reduction <maximumf>, %200, %cst_34 [1] : vector<8x4xf32> to vector<8xf32>
    %202 = vector.shape_cast %201 : vector<8xf32> to vector<8x1xf32>
    %203 = vector.broadcast %202 : vector<8x1xf32> to vector<8x4xf32>
    %204 = arith.subf %200, %203 : vector<8x4xf32>
    %205 = math.exp %204 : vector<8x4xf32>
    %cst_35 = arith.constant dense<0.000000e+00> : vector<8xf32>
    %206 = vector.multi_reduction <add>, %205, %cst_35 [1] : vector<8x4xf32> to vector<8xf32>
    %207 = vector.shape_cast %206 : vector<8xf32> to vector<8x1xf32>
    %208 = tpu.reciprocal %207 {approx = true} : vector<8x1xf32> -> vector<8x1xf32>
    %209 = vector.broadcast %208 : vector<8x1xf32> to vector<8x4xf32>
    %210 = arith.mulf %205, %209 : vector<8x4xf32>
    %211 = vector.extract_strided_slice %210 {offsets = [0, 0], sizes = [8, 1], strides = [1, 1]} : vector<8x4xf32> to vector<8x1xf32>
    %212 = vector.broadcast %211 : vector<8x1xf32> to vector<8x12xf32>
    %213 = arith.mulf %212, %42 : vector<8x12xf32>
    %214 = vector.extract_strided_slice %210 {offsets = [0, 1], sizes = [8, 1], strides = [1, 1]} : vector<8x4xf32> to vector<8x1xf32>
    %215 = vector.broadcast %214 : vector<8x1xf32> to vector<8x12xf32>
    %216 = arith.mulf %215, %63 : vector<8x12xf32>
    %217 = arith.addf %213, %216 : vector<8x12xf32>
    %218 = vector.extract_strided_slice %210 {offsets = [0, 2], sizes = [8, 1], strides = [1, 1]} : vector<8x4xf32> to vector<8x1xf32>
    %219 = vector.broadcast %218 : vector<8x1xf32> to vector<8x12xf32>
    %220 = arith.mulf %219, %84 : vector<8x12xf32>
    %221 = arith.addf %217, %220 : vector<8x12xf32>
    %222 = vector.extract_strided_slice %210 {offsets = [0, 3], sizes = [8, 1], strides = [1, 1]} : vector<8x4xf32> to vector<8x1xf32>
    %223 = vector.broadcast %222 : vector<8x1xf32> to vector<8x12xf32>
    %224 = arith.mulf %223, %105 : vector<8x12xf32>
    %225 = arith.addf %221, %224 : vector<8x12xf32>
    %226 = arith.mulf %94, %41 : vector<8x12xf32>
    %cst_36 = arith.constant dense<0.000000e+00> : vector<8xf32>
    %227 = vector.multi_reduction <add>, %226, %cst_36 [1] : vector<8x12xf32> to vector<8xf32>
    %228 = vector.shape_cast %227 : vector<8xf32> to vector<8x1xf32>
    %229 = arith.mulf %94, %62 : vector<8x12xf32>
    %cst_37 = arith.constant dense<0.000000e+00> : vector<8xf32>
    %230 = vector.multi_reduction <add>, %229, %cst_37 [1] : vector<8x12xf32> to vector<8xf32>
    %231 = vector.shape_cast %230 : vector<8xf32> to vector<8x1xf32>
    %232 = arith.mulf %94, %83 : vector<8x12xf32>
    %cst_38 = arith.constant dense<0.000000e+00> : vector<8xf32>
    %233 = vector.multi_reduction <add>, %232, %cst_38 [1] : vector<8x12xf32> to vector<8xf32>
    %234 = vector.shape_cast %233 : vector<8xf32> to vector<8x1xf32>
    %235 = arith.mulf %94, %104 : vector<8x12xf32>
    %cst_39 = arith.constant dense<0.000000e+00> : vector<8xf32>
    %236 = vector.multi_reduction <add>, %235, %cst_39 [1] : vector<8x12xf32> to vector<8xf32>
    %237 = vector.shape_cast %236 : vector<8xf32> to vector<8x1xf32>
    %238 = tpu.concatenate %228, %231, %234, %237 in 1 : vector<8x1xf32>, vector<8x1xf32>, vector<8x1xf32>, vector<8x1xf32> -> vector<8x4xf32>
    %cst_40 = arith.constant 0.288675129 : f32
    %239 = vector.broadcast %cst_40 : f32 to vector<8x4xf32>
    %240 = arith.mulf %238, %239 : vector<8x4xf32>
    %cst_41 = arith.constant dense<0xFF800000> : vector<8xf32>
    %241 = vector.multi_reduction <maximumf>, %240, %cst_41 [1] : vector<8x4xf32> to vector<8xf32>
    %242 = vector.shape_cast %241 : vector<8xf32> to vector<8x1xf32>
    %243 = vector.broadcast %242 : vector<8x1xf32> to vector<8x4xf32>
    %244 = arith.subf %240, %243 : vector<8x4xf32>
    %245 = math.exp %244 : vector<8x4xf32>
    %cst_42 = arith.constant dense<0.000000e+00> : vector<8xf32>
    %246 = vector.multi_reduction <add>, %245, %cst_42 [1] : vector<8x4xf32> to vector<8xf32>
    %247 = vector.shape_cast %246 : vector<8xf32> to vector<8x1xf32>
    %248 = tpu.reciprocal %247 {approx = true} : vector<8x1xf32> -> vector<8x1xf32>
    %249 = vector.broadcast %248 : vector<8x1xf32> to vector<8x4xf32>
    %250 = arith.mulf %245, %249 : vector<8x4xf32>
    %251 = vector.extract_strided_slice %250 {offsets = [0, 0], sizes = [8, 1], strides = [1, 1]} : vector<8x4xf32> to vector<8x1xf32>
    %252 = vector.broadcast %251 : vector<8x1xf32> to vector<8x12xf32>
    %253 = arith.mulf %252, %42 : vector<8x12xf32>
    %254 = vector.extract_strided_slice %250 {offsets = [0, 1], sizes = [8, 1], strides = [1, 1]} : vector<8x4xf32> to vector<8x1xf32>
    %255 = vector.broadcast %254 : vector<8x1xf32> to vector<8x12xf32>
    %256 = arith.mulf %255, %63 : vector<8x12xf32>
    %257 = arith.addf %253, %256 : vector<8x12xf32>
    %258 = vector.extract_strided_slice %250 {offsets = [0, 2], sizes = [8, 1], strides = [1, 1]} : vector<8x4xf32> to vector<8x1xf32>
    %259 = vector.broadcast %258 : vector<8x1xf32> to vector<8x12xf32>
    %260 = arith.mulf %259, %84 : vector<8x12xf32>
    %261 = arith.addf %257, %260 : vector<8x12xf32>
    %262 = vector.extract_strided_slice %250 {offsets = [0, 3], sizes = [8, 1], strides = [1, 1]} : vector<8x4xf32> to vector<8x1xf32>
    %263 = vector.broadcast %262 : vector<8x1xf32> to vector<8x12xf32>
    %264 = arith.mulf %263, %105 : vector<8x12xf32>
    %265 = arith.addf %261, %264 : vector<8x12xf32>
    %266 = vector.extract_strided_slice %145 {offsets = [0, 0], sizes = [1, 12], strides = [1, 1]} : vector<8x12xf32> to vector<1x12xf32>
    %267 = vector.extract_strided_slice %145 {offsets = [1, 0], sizes = [1, 12], strides = [1, 1]} : vector<8x12xf32> to vector<1x12xf32>
    %268 = vector.extract_strided_slice %145 {offsets = [2, 0], sizes = [1, 12], strides = [1, 1]} : vector<8x12xf32> to vector<1x12xf32>
    %269 = vector.extract_strided_slice %145 {offsets = [3, 0], sizes = [1, 12], strides = [1, 1]} : vector<8x12xf32> to vector<1x12xf32>
    %270 = tpu.concatenate %266, %267, %268, %269 in 1 : vector<1x12xf32>, vector<1x12xf32>, vector<1x12xf32>, vector<1x12xf32> -> vector<1x48xf32>
    %271 = vector.extract_strided_slice %145 {offsets = [4, 0], sizes = [1, 12], strides = [1, 1]} : vector<8x12xf32> to vector<1x12xf32>
    %272 = vector.extract_strided_slice %145 {offsets = [5, 0], sizes = [1, 12], strides = [1, 1]} : vector<8x12xf32> to vector<1x12xf32>
    %273 = vector.extract_strided_slice %145 {offsets = [6, 0], sizes = [1, 12], strides = [1, 1]} : vector<8x12xf32> to vector<1x12xf32>
    %274 = vector.extract_strided_slice %145 {offsets = [7, 0], sizes = [1, 12], strides = [1, 1]} : vector<8x12xf32> to vector<1x12xf32>
    %275 = tpu.concatenate %271, %272, %273, %274 in 1 : vector<1x12xf32>, vector<1x12xf32>, vector<1x12xf32>, vector<1x12xf32> -> vector<1x48xf32>
    %276 = vector.extract_strided_slice %185 {offsets = [0, 0], sizes = [1, 12], strides = [1, 1]} : vector<8x12xf32> to vector<1x12xf32>
    %277 = vector.extract_strided_slice %185 {offsets = [1, 0], sizes = [1, 12], strides = [1, 1]} : vector<8x12xf32> to vector<1x12xf32>
    %278 = vector.extract_strided_slice %185 {offsets = [2, 0], sizes = [1, 12], strides = [1, 1]} : vector<8x12xf32> to vector<1x12xf32>
    %279 = vector.extract_strided_slice %185 {offsets = [3, 0], sizes = [1, 12], strides = [1, 1]} : vector<8x12xf32> to vector<1x12xf32>
    %280 = tpu.concatenate %276, %277, %278, %279 in 1 : vector<1x12xf32>, vector<1x12xf32>, vector<1x12xf32>, vector<1x12xf32> -> vector<1x48xf32>
    %281 = vector.extract_strided_slice %185 {offsets = [4, 0], sizes = [1, 12], strides = [1, 1]} : vector<8x12xf32> to vector<1x12xf32>
    %282 = vector.extract_strided_slice %185 {offsets = [5, 0], sizes = [1, 12], strides = [1, 1]} : vector<8x12xf32> to vector<1x12xf32>
    %283 = vector.extract_strided_slice %185 {offsets = [6, 0], sizes = [1, 12], strides = [1, 1]} : vector<8x12xf32> to vector<1x12xf32>
    %284 = vector.extract_strided_slice %185 {offsets = [7, 0], sizes = [1, 12], strides = [1, 1]} : vector<8x12xf32> to vector<1x12xf32>
    %285 = tpu.concatenate %281, %282, %283, %284 in 1 : vector<1x12xf32>, vector<1x12xf32>, vector<1x12xf32>, vector<1x12xf32> -> vector<1x48xf32>
    %286 = vector.extract_strided_slice %225 {offsets = [0, 0], sizes = [1, 12], strides = [1, 1]} : vector<8x12xf32> to vector<1x12xf32>
    %287 = vector.extract_strided_slice %225 {offsets = [1, 0], sizes = [1, 12], strides = [1, 1]} : vector<8x12xf32> to vector<1x12xf32>
    %288 = vector.extract_strided_slice %225 {offsets = [2, 0], sizes = [1, 12], strides = [1, 1]} : vector<8x12xf32> to vector<1x12xf32>
    %289 = vector.extract_strided_slice %225 {offsets = [3, 0], sizes = [1, 12], strides = [1, 1]} : vector<8x12xf32> to vector<1x12xf32>
    %290 = tpu.concatenate %286, %287, %288, %289 in 1 : vector<1x12xf32>, vector<1x12xf32>, vector<1x12xf32>, vector<1x12xf32> -> vector<1x48xf32>
    %291 = vector.extract_strided_slice %225 {offsets = [4, 0], sizes = [1, 12], strides = [1, 1]} : vector<8x12xf32> to vector<1x12xf32>
    %292 = vector.extract_strided_slice %225 {offsets = [5, 0], sizes = [1, 12], strides = [1, 1]} : vector<8x12xf32> to vector<1x12xf32>
    %293 = vector.extract_strided_slice %225 {offsets = [6, 0], sizes = [1, 12], strides = [1, 1]} : vector<8x12xf32> to vector<1x12xf32>
    %294 = vector.extract_strided_slice %225 {offsets = [7, 0], sizes = [1, 12], strides = [1, 1]} : vector<8x12xf32> to vector<1x12xf32>
    %295 = tpu.concatenate %291, %292, %293, %294 in 1 : vector<1x12xf32>, vector<1x12xf32>, vector<1x12xf32>, vector<1x12xf32> -> vector<1x48xf32>
    %296 = vector.extract_strided_slice %265 {offsets = [0, 0], sizes = [1, 12], strides = [1, 1]} : vector<8x12xf32> to vector<1x12xf32>
    %297 = vector.extract_strided_slice %265 {offsets = [1, 0], sizes = [1, 12], strides = [1, 1]} : vector<8x12xf32> to vector<1x12xf32>
    %298 = vector.extract_strided_slice %265 {offsets = [2, 0], sizes = [1, 12], strides = [1, 1]} : vector<8x12xf32> to vector<1x12xf32>
    %299 = vector.extract_strided_slice %265 {offsets = [3, 0], sizes = [1, 12], strides = [1, 1]} : vector<8x12xf32> to vector<1x12xf32>
    %300 = tpu.concatenate %296, %297, %298, %299 in 1 : vector<1x12xf32>, vector<1x12xf32>, vector<1x12xf32>, vector<1x12xf32> -> vector<1x48xf32>
    %301 = vector.extract_strided_slice %265 {offsets = [4, 0], sizes = [1, 12], strides = [1, 1]} : vector<8x12xf32> to vector<1x12xf32>
    %302 = vector.extract_strided_slice %265 {offsets = [5, 0], sizes = [1, 12], strides = [1, 1]} : vector<8x12xf32> to vector<1x12xf32>
    %303 = vector.extract_strided_slice %265 {offsets = [6, 0], sizes = [1, 12], strides = [1, 1]} : vector<8x12xf32> to vector<1x12xf32>
    %304 = vector.extract_strided_slice %265 {offsets = [7, 0], sizes = [1, 12], strides = [1, 1]} : vector<8x12xf32> to vector<1x12xf32>
    %305 = tpu.concatenate %301, %302, %303, %304 in 1 : vector<1x12xf32>, vector<1x12xf32>, vector<1x12xf32>, vector<1x12xf32> -> vector<1x48xf32>
    %306 = tpu.concatenate %270, %275, %280, %285, %290, %295, %300, %305 in 0 : vector<1x48xf32>, vector<1x48xf32>, vector<1x48xf32>, vector<1x48xf32>, vector<1x48xf32>, vector<1x48xf32>, vector<1x48xf32>, vector<1x48xf32> -> vector<8x48xf32>
    %307 = arith.truncf %306 : vector<8x48xf32> to vector<8x48xbf16>
    %c0_43 = arith.constant 0 : index
    %c0_44 = arith.constant 0 : index
    %308 = vector.load %arg6[%c0_43, %c0_44] : memref<48x48xbf16, #tpu.memory_space<vmem>>, vector<48x48xbf16>
    %cst_45 = arith.constant dense<0.000000e+00> : vector<8x48xf32>
    %309 = tpu.matmul %307, %308, %cst_45 {dimension_numbers = #tpu.dot_dimension_numbers<[1], [0], [0], [1], [0, 0, 1, 1], [], []>} : vector<8x48xbf16>, vector<48x48xbf16>, vector<8x48xf32> -> vector<8x48xf32>
    %310 = arith.addf %1, %309 : vector<8x48xf32>
    %311 = arith.mulf %310, %310 : vector<8x48xf32>
    %cst_46 = arith.constant dense<0.000000e+00> : vector<8xf32>
    %312 = vector.multi_reduction <add>, %311, %cst_46 [1] : vector<8x48xf32> to vector<8xf32>
    %313 = vector.shape_cast %312 : vector<8xf32> to vector<8x1xf32>
    %cst_47 = arith.constant 4.800000e+01 : f32
    %314 = vector.broadcast %cst_47 : f32 to vector<8x1xf32>
    %315 = arith.divf %313, %314 : vector<8x1xf32>
    %cst_48 = arith.constant 9.99999974E-6 : f32
    %316 = vector.broadcast %cst_48 : f32 to vector<8x1xf32>
    %317 = arith.addf %315, %316 : vector<8x1xf32>
    %318 = math.rsqrt %317 : vector<8x1xf32>
    %319 = vector.broadcast %318 : vector<8x1xf32> to vector<8x48xf32>
    %320 = arith.mulf %310, %319 : vector<8x48xf32>
    %c0_49 = arith.constant 0 : index
    %c0_50 = arith.constant 0 : index
    %321 = vector.load %arg7[%c0_49, %c0_50] : memref<1x48xf32, #tpu.memory_space<vmem>>, vector<1x48xf32>
    %322 = vector.broadcast %321 : vector<1x48xf32> to vector<8x48xf32>
    %323 = arith.mulf %320, %322 : vector<8x48xf32>
    %324 = arith.truncf %323 : vector<8x48xf32> to vector<8x48xbf16>
    %c0_51 = arith.constant 0 : index
    %c0_52 = arith.constant 0 : index
    %325 = vector.load %arg8[%c0_51, %c0_52] : memref<48x48xbf16, #tpu.memory_space<vmem>>, vector<48x48xbf16>
    %cst_53 = arith.constant dense<0.000000e+00> : vector<8x48xf32>
    %326 = tpu.matmul %324, %325, %cst_53 {dimension_numbers = #tpu.dot_dimension_numbers<[1], [0], [0], [1], [0, 0, 1, 1], [], []>} : vector<8x48xbf16>, vector<48x48xbf16>, vector<8x48xf32> -> vector<8x48xf32>
    %c0_54 = arith.constant 0 : index
    %c0_55 = arith.constant 0 : index
    %c0_56 = arith.constant 0 : index
    %327 = vector.load %arg9[%c0_54, %c0_55, %c0_56] : memref<1x8x48xf32, #tpu.memory_space<vmem>>, vector<1x8x48xf32>
    %328 = vector.shape_cast %327 : vector<1x8x48xf32> to vector<8x48xf32>
    %329 = vector.shape_cast %323 : vector<8x48xf32> to vector<1x8x48xf32>
    tpu.vector_store %arg9[%c0_54, %c0_55, %c0_56], %329 {strides = array<i32>} : memref<1x8x48xf32, #tpu.memory_space<vmem>>, vector<1x8x48xf32>,
    %c0_57 = arith.constant 0 : index
    %c0_58 = arith.constant 0 : index
    %c0_59 = arith.constant 0 : index
    %330 = vector.load %arg10[%c0_57, %c0_58, %c0_59] : memref<1x8x48xf32, #tpu.memory_space<vmem>>, vector<1x8x48xf32>
    %331 = vector.shape_cast %330 : vector<1x8x48xf32> to vector<8x48xf32>
    %332 = vector.shape_cast %326 : vector<8x48xf32> to vector<1x8x48xf32>
    tpu.vector_store %arg10[%c0_57, %c0_58, %c0_59], %332 {strides = array<i32>} : memref<1x8x48xf32, #tpu.memory_space<vmem>>, vector<1x8x48xf32>,
    return
  }
  func.func @transform_0(%arg0: i32) -> (i32, i32, i32) {
    %c0_i32 = arith.constant 0 : i32
    %c0_i32_0 = arith.constant 0 : i32
    %c0_i32_1 = arith.constant 0 : i32
    return %arg0, %c0_i32, %c0_i32_0 : i32, i32, i32
  }
  func.func @transform_1(%arg0: i32) -> (i32, i32, i32) {
    %c0_i32 = arith.constant 0 : i32
    %c0_i32_0 = arith.constant 0 : i32
    %c0_i32_1 = arith.constant 0 : i32
    return %arg0, %c0_i32, %c0_i32_0 : i32, i32, i32
  }
  func.func @transform_2(%arg0: i32) -> (i32, i32, i32) {
    %c0_i32 = arith.constant 0 : i32
    %c0_i32_0 = arith.constant 0 : i32
    %c0_i32_1 = arith.constant 0 : i32
    return %arg0, %c0_i32, %c0_i32_0 : i32, i32, i32
  }
  func.func @transform_3(%arg0: i32) -> (i32, i32) {
    %c0_i32 = arith.constant 0 : i32
    %c0_i32_0 = arith.constant 0 : i32
    %c0_i32_1 = arith.constant 0 : i32
    return %c0_i32, %c0_i32_0 : i32, i32
  }
  func.func @transform_4(%arg0: i32) -> (i32, i32) {
    %c0_i32 = arith.constant 0 : i32
    %c0_i32_0 = arith.constant 0 : i32
    %c0_i32_1 = arith.constant 0 : i32
    return %c0_i32, %c0_i32_0 : i32, i32
  }
  func.func @transform_5(%arg0: i32) -> (i32, i32) {
    %c0_i32 = arith.constant 0 : i32
    %c0_i32_0 = arith.constant 0 : i32
    %c0_i32_1 = arith.constant 0 : i32
    return %c0_i32, %c0_i32_0 : i32, i32
  }
  func.func @transform_6(%arg0: i32) -> (i32, i32) {
    %c0_i32 = arith.constant 0 : i32
    %c0_i32_0 = arith.constant 0 : i32
    %c0_i32_1 = arith.constant 0 : i32
    return %c0_i32, %c0_i32_0 : i32, i32
  }
  func.func @transform_7(%arg0: i32) -> (i32, i32) {
    %c0_i32 = arith.constant 0 : i32
    %c0_i32_0 = arith.constant 0 : i32
    %c0_i32_1 = arith.constant 0 : i32
    return %c0_i32, %c0_i32_0 : i32, i32
  }
  func.func @transform_8(%arg0: i32) -> (i32, i32, i32) {
    %c0_i32 = arith.constant 0 : i32
    %c0_i32_0 = arith.constant 0 : i32
    %c0_i32_1 = arith.constant 0 : i32
    return %arg0, %c0_i32, %c0_i32_0 : i32, i32, i32
  }
  func.func @transform_9(%arg0: i32) -> (i32, i32, i32) {
    %c0_i32 = arith.constant 0 : i32
    %c0_i32_0 = arith.constant 0 : i32
    %c0_i32_1 = arith.constant 0 : i32
    return %arg0, %c0_i32, %c0_i32_0 : i32, i32, i32
  }
}

module attributes {stable_mosaic.version = 11 : i64} {
  func.func @_value_proj_kernel(%arg0: i32, %arg1: memref<1x160x48xf32, #tpu.memory_space<vmem>>, %arg2: memref<48x48xbf16, #tpu.memory_space<vmem>>, %arg3: memref<1x160x48xbf16, #tpu.memory_space<vmem>>) attributes {dimension_semantics = [#tpu.dimension_semantics<parallel>], iteration_bounds = array<i64: 2>, scalar_prefetch = 0 : i64, scratch_operands = 0 : i64, tpu.core_type = #tpu.core_type<tc>, window_params = [{transform_indices = @transform_0, window_bounds = array<i64: 1, 160, 48>}, {pipeline_mode = #tpu.pipeline_mode<synchronous>, transform_indices = @transform_1, window_bounds = array<i64: 48, 48>}, {transform_indices = @transform_2, window_bounds = array<i64: 1, 160, 48>}]} {
    %c0 = arith.constant 0 : index
    %c0_0 = arith.constant 0 : index
    %c0_1 = arith.constant 0 : index
    %0 = vector.load %arg1[%c0, %c0_0, %c0_1] : memref<1x160x48xf32, #tpu.memory_space<vmem>>, vector<1x160x48xf32>
    %1 = vector.shape_cast %0 : vector<1x160x48xf32> to vector<160x48xf32>
    %2 = arith.truncf %1 : vector<160x48xf32> to vector<160x48xbf16>
    %c0_2 = arith.constant 0 : index
    %c0_3 = arith.constant 0 : index
    %3 = vector.load %arg2[%c0_2, %c0_3] : memref<48x48xbf16, #tpu.memory_space<vmem>>, vector<48x48xbf16>
    %cst = arith.constant dense<0.000000e+00> : vector<160x48xf32>
    %4 = tpu.matmul %2, %3, %cst {dimension_numbers = #tpu.dot_dimension_numbers<[1], [0], [0], [1], [0, 0, 1, 1], [], []>} : vector<160x48xbf16>, vector<48x48xbf16>, vector<160x48xf32> -> vector<160x48xf32>
    %5 = arith.truncf %4 : vector<160x48xf32> to vector<160x48xbf16>
    %c0_4 = arith.constant 0 : index
    %c0_5 = arith.constant 0 : index
    %c0_6 = arith.constant 0 : index
    %6 = vector.load %arg3[%c0_4, %c0_5, %c0_6] : memref<1x160x48xbf16, #tpu.memory_space<vmem>>, vector<1x160x48xbf16>
    %7 = vector.shape_cast %6 : vector<1x160x48xbf16> to vector<160x48xbf16>
    %8 = vector.shape_cast %5 : vector<160x48xbf16> to vector<1x160x48xbf16>
    tpu.vector_store %arg3[%c0_4, %c0_5, %c0_6], %8 {strides = array<i32>} : memref<1x160x48xbf16, #tpu.memory_space<vmem>>, vector<1x160x48xbf16>,
    return
  }
  func.func @transform_0(%arg0: i32) -> (i32, i32, i32) {
    %c0_i32 = arith.constant 0 : i32
    %c0_i32_0 = arith.constant 0 : i32
    %c0_i32_1 = arith.constant 0 : i32
    return %arg0, %c0_i32, %c0_i32_0 : i32, i32, i32
  }
  func.func @transform_1(%arg0: i32) -> (i32, i32) {
    %c0_i32 = arith.constant 0 : i32
    %c0_i32_0 = arith.constant 0 : i32
    %c0_i32_1 = arith.constant 0 : i32
    return %c0_i32, %c0_i32_0 : i32, i32
  }
  func.func @transform_2(%arg0: i32) -> (i32, i32, i32) {
    %c0_i32 = arith.constant 0 : i32
    %c0_i32_0 = arith.constant 0 : i32
    %c0_i32_1 = arith.constant 0 : i32
    return %arg0, %c0_i32, %c0_i32_0 : i32, i32, i32
  }
}

module attributes {stable_mosaic.version = 11 : i64} {
  func.func @_outproj_ffn_kernel(%arg0: i32, %arg1: memref<1x8x48xf32, #tpu.memory_space<vmem>>, %arg2: memref<1x8x48xf32, #tpu.memory_space<vmem>>, %arg3: memref<48x48xbf16, #tpu.memory_space<vmem>>, %arg4: memref<1x48xf32, #tpu.memory_space<vmem>>, %arg5: memref<48x256xbf16, #tpu.memory_space<vmem>>, %arg6: memref<128x48xbf16, #tpu.memory_space<vmem>>, %arg7: memref<1x8x48xf32, #tpu.memory_space<vmem>>) attributes {dimension_semantics = [#tpu.dimension_semantics<parallel>], iteration_bounds = array<i64: 2>, scalar_prefetch = 0 : i64, scratch_operands = 0 : i64, tpu.core_type = #tpu.core_type<tc>, window_params = [{transform_indices = @transform_0, window_bounds = array<i64: 1, 8, 48>}, {transform_indices = @transform_1, window_bounds = array<i64: 1, 8, 48>}, {pipeline_mode = #tpu.pipeline_mode<synchronous>, transform_indices = @transform_2, window_bounds = array<i64: 48, 48>}, {pipeline_mode = #tpu.pipeline_mode<synchronous>, transform_indices = @transform_3, window_bounds = array<i64: 1, 48>}, {pipeline_mode = #tpu.pipeline_mode<synchronous>, transform_indices = @transform_4, window_bounds = array<i64: 48, 256>}, {pipeline_mode = #tpu.pipeline_mode<synchronous>, transform_indices = @transform_5, window_bounds = array<i64: 128, 48>}, {transform_indices = @transform_6, window_bounds = array<i64: 1, 8, 48>}]} {
    %c0 = arith.constant 0 : index
    %c0_0 = arith.constant 0 : index
    %c0_1 = arith.constant 0 : index
    %0 = vector.load %arg1[%c0, %c0_0, %c0_1] : memref<1x8x48xf32, #tpu.memory_space<vmem>>, vector<1x8x48xf32>
    %1 = vector.shape_cast %0 : vector<1x8x48xf32> to vector<8x48xf32>
    %2 = arith.truncf %1 : vector<8x48xf32> to vector<8x48xbf16>
    %c0_2 = arith.constant 0 : index
    %c0_3 = arith.constant 0 : index
    %3 = vector.load %arg3[%c0_2, %c0_3] : memref<48x48xbf16, #tpu.memory_space<vmem>>, vector<48x48xbf16>
    %cst = arith.constant dense<0.000000e+00> : vector<8x48xf32>
    %4 = tpu.matmul %2, %3, %cst {dimension_numbers = #tpu.dot_dimension_numbers<[1], [0], [0], [1], [0, 0, 1, 1], [], []>} : vector<8x48xbf16>, vector<48x48xbf16>, vector<8x48xf32> -> vector<8x48xf32>
    %c0_4 = arith.constant 0 : index
    %c0_5 = arith.constant 0 : index
    %c0_6 = arith.constant 0 : index
    %5 = vector.load %arg2[%c0_4, %c0_5, %c0_6] : memref<1x8x48xf32, #tpu.memory_space<vmem>>, vector<1x8x48xf32>
    %6 = vector.shape_cast %5 : vector<1x8x48xf32> to vector<8x48xf32>
    %7 = arith.addf %6, %4 : vector<8x48xf32>
    %8 = arith.mulf %7, %7 : vector<8x48xf32>
    %cst_7 = arith.constant dense<0.000000e+00> : vector<8xf32>
    %9 = vector.multi_reduction <add>, %8, %cst_7 [1] : vector<8x48xf32> to vector<8xf32>
    %10 = vector.shape_cast %9 : vector<8xf32> to vector<8x1xf32>
    %cst_8 = arith.constant 4.800000e+01 : f32
    %11 = vector.broadcast %cst_8 : f32 to vector<8x1xf32>
    %12 = arith.divf %10, %11 : vector<8x1xf32>
    %cst_9 = arith.constant 9.99999974E-6 : f32
    %13 = vector.broadcast %cst_9 : f32 to vector<8x1xf32>
    %14 = arith.addf %12, %13 : vector<8x1xf32>
    %15 = math.rsqrt %14 : vector<8x1xf32>
    %16 = vector.broadcast %15 : vector<8x1xf32> to vector<8x48xf32>
    %17 = arith.mulf %7, %16 : vector<8x48xf32>
    %c0_10 = arith.constant 0 : index
    %c0_11 = arith.constant 0 : index
    %18 = vector.load %arg4[%c0_10, %c0_11] : memref<1x48xf32, #tpu.memory_space<vmem>>, vector<1x48xf32>
    %19 = vector.broadcast %18 : vector<1x48xf32> to vector<8x48xf32>
    %20 = arith.mulf %17, %19 : vector<8x48xf32>
    %21 = arith.truncf %20 : vector<8x48xf32> to vector<8x48xbf16>
    %c0_12 = arith.constant 0 : index
    %c0_13 = arith.constant 0 : index
    %22 = vector.load %arg5[%c0_12, %c0_13] : memref<48x256xbf16, #tpu.memory_space<vmem>>, vector<48x256xbf16>
    %cst_14 = arith.constant dense<0.000000e+00> : vector<8x256xf32>
    %23 = tpu.matmul %21, %22, %cst_14 {dimension_numbers = #tpu.dot_dimension_numbers<[1], [0], [0], [1], [0, 0, 1, 1], [], []>} : vector<8x48xbf16>, vector<48x256xbf16>, vector<8x256xf32> -> vector<8x256xf32>
    %24 = vector.extract_strided_slice %23 {offsets = [0, 0], sizes = [8, 128], strides = [1, 1]} : vector<8x256xf32> to vector<8x128xf32>
    %25 = vector.extract_strided_slice %23 {offsets = [0, 128], sizes = [8, 128], strides = [1, 1]} : vector<8x256xf32> to vector<8x128xf32>
    %cst_15 = arith.constant 0.000000e+00 : f32
    %26 = vector.broadcast %cst_15 : f32 to vector<8x128xf32>
    %27 = arith.subf %26, %24 : vector<8x128xf32>
    %28 = math.exp %27 : vector<8x128xf32>
    %cst_16 = arith.constant 1.000000e+00 : f32
    %29 = vector.broadcast %cst_16 : f32 to vector<8x128xf32>
    %30 = arith.addf %29, %28 : vector<8x128xf32>
    %31 = tpu.reciprocal %30 {approx = true} : vector<8x128xf32> -> vector<8x128xf32>
    %32 = arith.mulf %24, %31 : vector<8x128xf32>
    %33 = arith.mulf %32, %25 : vector<8x128xf32>
    %34 = arith.truncf %33 : vector<8x128xf32> to vector<8x128xbf16>
    %c0_17 = arith.constant 0 : index
    %c0_18 = arith.constant 0 : index
    %35 = vector.load %arg6[%c0_17, %c0_18] : memref<128x48xbf16, #tpu.memory_space<vmem>>, vector<128x48xbf16>
    %cst_19 = arith.constant dense<0.000000e+00> : vector<8x48xf32>
    %36 = tpu.matmul %34, %35, %cst_19 {dimension_numbers = #tpu.dot_dimension_numbers<[1], [0], [0], [1], [0, 0, 1, 1], [], []>} : vector<8x128xbf16>, vector<128x48xbf16>, vector<8x48xf32> -> vector<8x48xf32>
    %37 = arith.addf %7, %36 : vector<8x48xf32>
    %c0_20 = arith.constant 0 : index
    %c0_21 = arith.constant 0 : index
    %c0_22 = arith.constant 0 : index
    %38 = vector.load %arg7[%c0_20, %c0_21, %c0_22] : memref<1x8x48xf32, #tpu.memory_space<vmem>>, vector<1x8x48xf32>
    %39 = vector.shape_cast %38 : vector<1x8x48xf32> to vector<8x48xf32>
    %40 = vector.shape_cast %37 : vector<8x48xf32> to vector<1x8x48xf32>
    tpu.vector_store %arg7[%c0_20, %c0_21, %c0_22], %40 {strides = array<i32>} : memref<1x8x48xf32, #tpu.memory_space<vmem>>, vector<1x8x48xf32>,
    return
  }
  func.func @transform_0(%arg0: i32) -> (i32, i32, i32) {
    %c0_i32 = arith.constant 0 : i32
    %c0_i32_0 = arith.constant 0 : i32
    %c0_i32_1 = arith.constant 0 : i32
    return %arg0, %c0_i32, %c0_i32_0 : i32, i32, i32
  }
  func.func @transform_1(%arg0: i32) -> (i32, i32, i32) {
    %c0_i32 = arith.constant 0 : i32
    %c0_i32_0 = arith.constant 0 : i32
    %c0_i32_1 = arith.constant 0 : i32
    return %arg0, %c0_i32, %c0_i32_0 : i32, i32, i32
  }
  func.func @transform_2(%arg0: i32) -> (i32, i32) {
    %c0_i32 = arith.constant 0 : i32
    %c0_i32_0 = arith.constant 0 : i32
    %c0_i32_1 = arith.constant 0 : i32
    return %c0_i32, %c0_i32_0 : i32, i32
  }
  func.func @transform_3(%arg0: i32) -> (i32, i32) {
    %c0_i32 = arith.constant 0 : i32
    %c0_i32_0 = arith.constant 0 : i32
    %c0_i32_1 = arith.constant 0 : i32
    return %c0_i32, %c0_i32_0 : i32, i32
  }
  func.func @transform_4(%arg0: i32) -> (i32, i32) {
    %c0_i32 = arith.constant 0 : i32
    %c0_i32_0 = arith.constant 0 : i32
    %c0_i32_1 = arith.constant 0 : i32
    return %c0_i32, %c0_i32_0 : i32, i32
  }
  func.func @transform_5(%arg0: i32) -> (i32, i32) {
    %c0_i32 = arith.constant 0 : i32
    %c0_i32_0 = arith.constant 0 : i32
    %c0_i32_1 = arith.constant 0 : i32
    return %c0_i32, %c0_i32_0 : i32, i32
  }
  func.func @transform_6(%arg0: i32) -> (i32, i32, i32) {
    %c0_i32 = arith.constant 0 : i32
    %c0_i32_0 = arith.constant 0 : i32
    %c0_i32_1 = arith.constant 0 : i32
    return %arg0, %c0_i32, %c0_i32_0 : i32, i32, i32
  }
}

module attributes {stable_mosaic.version = 11 : i64} {
  func.func @_rmsnorm_kernel(%arg0: i32, %arg1: memref<1x8x48xf32, #tpu.memory_space<vmem>>, %arg2: memref<1x48xf32, #tpu.memory_space<vmem>>, %arg3: memref<1x8x48xf32, #tpu.memory_space<vmem>>) attributes {dimension_semantics = [#tpu.dimension_semantics<parallel>], iteration_bounds = array<i64: 2>, scalar_prefetch = 0 : i64, scratch_operands = 0 : i64, tpu.core_type = #tpu.core_type<tc>, window_params = [{transform_indices = @transform_0, window_bounds = array<i64: 1, 8, 48>}, {pipeline_mode = #tpu.pipeline_mode<synchronous>, transform_indices = @transform_1, window_bounds = array<i64: 1, 48>}, {transform_indices = @transform_2, window_bounds = array<i64: 1, 8, 48>}]} {
    %c0 = arith.constant 0 : index
    %c0_0 = arith.constant 0 : index
    %c0_1 = arith.constant 0 : index
    %0 = vector.load %arg1[%c0, %c0_0, %c0_1] : memref<1x8x48xf32, #tpu.memory_space<vmem>>, vector<1x8x48xf32>
    %1 = vector.shape_cast %0 : vector<1x8x48xf32> to vector<8x48xf32>
    %2 = arith.mulf %1, %1 : vector<8x48xf32>
    %cst = arith.constant dense<0.000000e+00> : vector<8xf32>
    %3 = vector.multi_reduction <add>, %2, %cst [1] : vector<8x48xf32> to vector<8xf32>
    %4 = vector.shape_cast %3 : vector<8xf32> to vector<8x1xf32>
    %cst_2 = arith.constant 4.800000e+01 : f32
    %5 = vector.broadcast %cst_2 : f32 to vector<8x1xf32>
    %6 = arith.divf %4, %5 : vector<8x1xf32>
    %cst_3 = arith.constant 9.99999974E-6 : f32
    %7 = vector.broadcast %cst_3 : f32 to vector<8x1xf32>
    %8 = arith.addf %6, %7 : vector<8x1xf32>
    %9 = math.rsqrt %8 : vector<8x1xf32>
    %10 = vector.broadcast %9 : vector<8x1xf32> to vector<8x48xf32>
    %11 = arith.mulf %1, %10 : vector<8x48xf32>
    %c0_4 = arith.constant 0 : index
    %c0_5 = arith.constant 0 : index
    %12 = vector.load %arg2[%c0_4, %c0_5] : memref<1x48xf32, #tpu.memory_space<vmem>>, vector<1x48xf32>
    %13 = vector.broadcast %12 : vector<1x48xf32> to vector<8x48xf32>
    %14 = arith.mulf %11, %13 : vector<8x48xf32>
    %c0_6 = arith.constant 0 : index
    %c0_7 = arith.constant 0 : index
    %c0_8 = arith.constant 0 : index
    %15 = vector.load %arg3[%c0_6, %c0_7, %c0_8] : memref<1x8x48xf32, #tpu.memory_space<vmem>>, vector<1x8x48xf32>
    %16 = vector.shape_cast %15 : vector<1x8x48xf32> to vector<8x48xf32>
    %17 = vector.shape_cast %14 : vector<8x48xf32> to vector<1x8x48xf32>
    tpu.vector_store %arg3[%c0_6, %c0_7, %c0_8], %17 {strides = array<i32>} : memref<1x8x48xf32, #tpu.memory_space<vmem>>, vector<1x8x48xf32>,
    return
  }
  func.func @transform_0(%arg0: i32) -> (i32, i32, i32) {
    %c0_i32 = arith.constant 0 : i32
    %c0_i32_0 = arith.constant 0 : i32
    %c0_i32_1 = arith.constant 0 : i32
    return %arg0, %c0_i32, %c0_i32_0 : i32, i32, i32
  }
  func.func @transform_1(%arg0: i32) -> (i32, i32) {
    %c0_i32 = arith.constant 0 : i32
    %c0_i32_0 = arith.constant 0 : i32
    %c0_i32_1 = arith.constant 0 : i32
    return %c0_i32, %c0_i32_0 : i32, i32
  }
  func.func @transform_2(%arg0: i32) -> (i32, i32, i32) {
    %c0_i32 = arith.constant 0 : i32
    %c0_i32_0 = arith.constant 0 : i32
    %c0_i32_1 = arith.constant 0 : i32
    return %arg0, %c0_i32, %c0_i32_0 : i32, i32, i32
  }
}

</mosaic_0001>

<llo_original>
// kernel: run.8
$region0: #{run.8}
  #allocation0 [shape = 'u32[]', space=smem, size = 0x4, offset = 0x4, fixed_abs, tag = 'smem constant byte address 0x4 - core index']
  #allocation1 [shape = 'u32[144,128]{1,0:T(1,128)}', space=vmem, size = 0x12000, scoped, tag = 'internal scratch']
  %s0 = inlined_call_operand.vmem [shape: f32[2,160,48], index: 0, kind: input, shape index: {}]
  %s1 = inlined_call_operand.vmem [shape: bf16[48,48], index: 1, kind: input, shape index: {}]
  %s2 = inlined_call_operand.vmem [shape: bf16[2,160,48], index: 2, kind: output, shape index: {}]
  %s3 = sld [smem:[#allocation0]]
  $region41: #{run.8} parent=0
    _
  %s5 = ssub.s32 1, %s3
  %s6 = scalar_select 0, %s5, %s3
  loop: start=0, step=1, limit=4
  $region2: #{run.8} parent=0 // loop_pre_header
    _
  $region3: #{run.8} parent=0 // loop_header
    %s8 = sphi 0, %s12
    %p9 = scmp.ge.s32.totalorder %s8, 4
    %s18 = sphi 0, %s20
    %s21 = sphi 0, %s18
    %s22 = sphi 0, %s21
    %s38 = sphi 0, %s22
    %s42 = sphi 0, %s42
    %s44 = sphi 0, %s42
    %s45 = sphi 0, %s44
    %s59 = sphi 0, %s45
    %s65 = sphi 0, %s67
    %s68 = sphi 0, %s65
    %s69 = sphi 0, %s68
    %s85 = sphi 0, %s69
  $region4: #{run.8} parent=0 // loop_header_branch
    %11 = sbr.rel (%p9) target = $region8
  $region5: #{run.8} parent=0 // loop_body
    %s13 = ssub.s32 %s8, 1
    %s14 = ssub.s32 %s8, 2
    %s15 = sadd.s32 %s8, 1
    %s16 = ssub.s32 %s8, %s15
    %p17 = scmp.eq.s32.totalorder %s16, 0
    %s19 = sadd.s32 %s18, 1
    %s20 = scalar_select %p17, %s18, %s19
    %p23 = pneg %p17
    %p24 = scmp.eq.s32.totalorder %s8, 1
    %p25 = por %p23, %p24
    %p26 = scmp.ne.s32.totalorder %s18, %s21
    %p27 = scmp.eq.s32.totalorder %s8, 0
    %p28 = por %p26, %p27
    %p29 = scmp.ne.s32.totalorder %s18, %s21
    %p30 = scmp.eq.s32.totalorder %s13, 1
    %p31 = por %p29, %p30
    %p32 = scmp.ne.s32.totalorder %s21, %s22
    %p33 = scmp.eq.s32.totalorder %s13, 0
    %p34 = por %p32, %p33
    %p35 = scmp.ne.s32.totalorder %s21, %s22
    %p36 = scmp.eq.s32.totalorder %s14, 1
    %p37 = por %p35, %p36
    %p39 = scmp.ne.s32.totalorder %s22, %s38
    %p40 = scmp.eq.s32.totalorder %s14, 0
    %p41 = por %p39, %p40
    %s43 = sadd.s32 %s42, 1
    %p46 = scmp.eq.s32.totalorder %s8, 1
    %p47 = scmp.ne.s32.totalorder %s42, %s44
    %p48 = scmp.eq.s32.totalorder %s8, 0
    %p49 = por %p47, %p48
    %p50 = scmp.ne.s32.totalorder %s42, %s44
    %p51 = scmp.eq.s32.totalorder %s13, 1
    %p52 = por %p50, %p51
    %p53 = scmp.ne.s32.totalorder %s44, %s45
    %p54 = scmp.eq.s32.totalorder %s13, 0
    %p55 = por %p53, %p54
    %p56 = scmp.ne.s32.totalorder %s44, %s45
    %p57 = scmp.eq.s32.totalorder %s14, 1
    %p58 = por %p56, %p57
    %p60 = scmp.ne.s32.totalorder %s45, %s59
    %p61 = scmp.eq.s32.totalorder %s14, 0
    %p62 = por %p60, %p61
    %s63 = ssub.s32 %s8, %s15
    %p64 = scmp.eq.s32.totalorder %s63, 0
    %s66 = sadd.s32 %s65, 1
    %s67 = scalar_select %p64, %s65, %s66
    %p70 = pneg %p64
    %p71 = scmp.eq.s32.totalorder %s8, 1
    %p72 = por %p70, %p71
    %p73 = scmp.ne.s32.totalorder %s65, %s68
    %p74 = scmp.eq.s32.totalorder %s8, 0
    %p75 = por %p73, %p74
    %p76 = scmp.ne.s32.totalorder %s65, %s68
    %p77 = scmp.eq.s32.totalorder %s13, 1
    %p78 = por %p76, %p77
    %p79 = scmp.ne.s32.totalorder %s68, %s69
    %p80 = scmp.eq.s32.totalorder %s13, 0
    %p81 = por %p79, %p80
    %p82 = scmp.ne.s32.totalorder %s68, %s69
    %p83 = scmp.eq.s32.totalorder %s14, 1
    %p84 = por %p82, %p83
    %p86 = scmp.ne.s32.totalorder %s69, %s85
    %p87 = scmp.eq.s32.totalorder %s14, 0
    %p88 = por %p86, %p87
    %p89 = scmp.le.s32.totalorder 1, %s8
    %p90 = scmp.lt.s32.totalorder %s8, 3
    %p91 = pnand %p89, %p90
    %p92 = pneg %p91
    // Predicated region
    $region9: #{run.8} parent=5 // pred_check
      _
    $region10: #{run.8} parent=5 // pred_check_branch
      %94 = sbr.rel (%p91) target = $region12
    $region11: #{run.8} parent=5 // pred_region
      %s95 = ssub.s32 %s8, 1
      // Predicated region
      $region13: #{run.8} parent=11 // pred_check
        %p96 = pneg %p55
      $region14: #{run.8} parent=11 // pred_check_branch
        %98 = sbr.rel (%p96) target = $region16
      $region15: #{run.8} parent=11 // pred_region
        _
      $region16: #{run.8} parent=11 // pred_fallthru
        _
    $region12: #{run.8} parent=5 // pred_fallthru
      _
    %p99 = scmp.lt.s32.totalorder %s8, 2
    // Predicated region
    $region17: #{run.8} parent=5 // pred_check
      %p100 = pneg %p99
    $region18: #{run.8} parent=5 // pred_check_branch
      %102 = sbr.rel (%p100) target = $region20
    $region19: #{run.8} parent=5 // pred_region
      // Predicated region
      $region21: #{run.8} parent=19 // pred_check
        %p103 = pneg %p28
      $region22: #{run.8} parent=19 // pred_check_branch
        %105 = sbr.rel (%p103) target = $region24
      $region23: #{run.8} parent=19 // pred_region
        %p106 = scmp.lt.s32.totalorder %s8, 1
        %s107 = scalar_select %p106, %s8, 1
        %s108 = smul.addr %s107, 20
        %s109 = smul.addr %s108, 8
        %s110 = scalar_lea.vmem %s0, %s109
      $region24: #{run.8} parent=19 // pred_fallthru
        _
    $region20: #{run.8} parent=5 // pred_fallthru
      _
    %p111 = scmp.le.s32.totalorder 1, %s8
    %p112 = scmp.lt.s32.totalorder %s8, 3
    %p113 = pnand %p111, %p112
    %p114 = pneg %p113
    // Predicated region
    $region25: #{run.8} parent=5 // pred_check
      _
    $region26: #{run.8} parent=5 // pred_check_branch
      %116 = sbr.rel (%p113) target = $region28
    $region27: #{run.8} parent=5 // pred_region
      %s117 = ssub.s32 %s8, 1
      %p118 = scmp.lt.s32.totalorder %s13, 1
      %s119 = scalar_select %p118, %s13, 1
      %s120 = smul.addr %s119, 20
      %s121 = smul.addr %s120, 8
      %s122 = scalar_lea.vmem %s0, %s121
      %p123 = pneg %p34
      %p124 = pneg %p31
      %p125 = pneg %p55
      %p126 = pneg %p52
      %p127 = pneg %p81
      %p128 = pneg %p78
      %p129 = scmp.lt.s32.totalorder %s13, 1
      %s130 = scalar_select %p129, %s13, 1
      %s131 = smul.addr %s130, 20
      %s132 = smul.addr %s131, 4
      %s133 = scalar_lea.vmem %s2, %s132
      %p134 = scmp.lt.s32.totalorder %s13, 1
      %s135 = scalar_select %p134, %s13, 1
      %s136 = smul.addr %s135, 20
      %s137 = smul.addr %s136, 8
      %s138 = scalar_lea.vmem %s0, %s137
      %p139 = scmp.lt.s32.totalorder %s13, 1
      %s140 = scalar_select %p139, %s13, 1
      %s141 = smul.addr %s140, 20
      %s142 = smul.addr %s141, 4
      %s143 = scalar_lea.vmem %s2, %s142
      %v145 = vld [vmem:[%s138] sm:$0xff]
      %v146 = vld [vmem:[%s138 + $0x8] sm:$0xff]
      %v147 = vld [vmem:[%s138 + $0x10] sm:$0xff]
      %v148 = vld [vmem:[%s138 + $0x18] sm:$0xff]
      %v149 = vld [vmem:[%s138 + $0x20] sm:$0xff]
      %v150 = vld [vmem:[%s138 + $0x28] sm:$0xff]
      %v151 = vld [vmem:[%s138 + $0x30] sm:$0xff]
      %v152 = vld [vmem:[%s138 + $0x38] sm:$0xff]
      %v153 = vld [vmem:[%s138 + $0x40] sm:$0xff]
      %v154 = vld [vmem:[%s138 + $0x48] sm:$0xff]
      %v155 = vld [vmem:[%s138 + $0x50] sm:$0xff]
      %v156 = vld [vmem:[%s138 + $0x58] sm:$0xff]
      %v157 = vld [vmem:[%s138 + $0x60] sm:$0xff]
      %v158 = vld [vmem:[%s138 + $0x68] sm:$0xff]
      %v159 = vld [vmem:[%s138 + $0x70] sm:$0xff]
      %v160 = vld [vmem:[%s138 + $0x78] sm:$0xff]
      %v161 = vld [vmem:[%s138 + $0x80] sm:$0xff]
      %v162 = vld [vmem:[%s138 + $0x88] sm:$0xff]
      %v163 = vld [vmem:[%s138 + $0x90] sm:$0xff]
      %v164 = vld [vmem:[%s138 + $0x98] sm:$0xff]
      %v165 = vpack.c.bf16 %v146, %v145
      %v166 = vpack.c.bf16 %v148, %v147
      %v167 = vpack.c.bf16 %v150, %v149
      %v168 = vpack.c.bf16 %v152, %v151
      %v169 = vpack.c.bf16 %v154, %v153
      %v170 = vpack.c.bf16 %v156, %v155
      %v171 = vpack.c.bf16 %v158, %v157
      %v172 = vpack.c.bf16 %v160, %v159
      %v173 = vpack.c.bf16 %v162, %v161
      %v174 = vpack.c.bf16 %v164, %v163
      %v175 = vld [vmem:[%s1] sm:$0xf]
      %v176 = vld [vmem:[%s1 + $0x4] sm:$0xf]
      %v177 = vld [vmem:[%s1 + $0x8] sm:$0xf]
      %v178 = vld [vmem:[%s1 + $0xc] sm:$0xf]
      %v179 = vld [vmem:[%s1 + $0x10] sm:$0xf]
      %v180 = vld [vmem:[%s1 + $0x14] sm:$0xf]
      %v187 = vunpack.c.l.b16 %v175
      %v188 = vunpack.c.l.b16 %v176
      %v189 = vunpack.c.l.b16 %v177
      %v190 = vunpack.c.l.b16 %v178
      %v191 = vunpack.c.l.b16 %v179
      %v192 = vunpack.c.l.b16 %v180
      %v193 = vpack.c.b16 %v188, %v187
      %v194 = vpack.c.b16 %v190, %v189
      %v195 = vpack.c.b16 %v192, %v191
      %vm199 = vcmask 392192
      %v201 = vsel %vm199, %v165, 0
      %v204 = vsel %vm199, %v166, 0
      %v207 = vsel %vm199, %v167, 0
      %v210 = vsel %vm199, %v168, 0
      %v213 = vsel %vm199, %v169, 0
      %v216 = vsel %vm199, %v170, 0
      %v219 = vsel %vm199, %v171, 0
      %v222 = vsel %vm199, %v172, 0
      %v225 = vsel %vm199, %v173, 0
      %v228 = vsel %vm199, %v174, 0
      %230 = vmatprep.subr.bf16.mxu0 0
      %231 = vmatpush1.bf16.msra.mxu0 %v193
      %232 = vmatprep.subr.bf16.mxu0 0
      %233 = vmatpush1.bf16.msra.mxu0 %v194
      %234 = vmatprep.subr.bf16.mxu0 0
      %235 = vmatpush1.bf16.msra.mxu0 %v195
      %236 = vmatprep.subr.bf16.mxu0 0
      %237 = vmatpush1.bf16.msra.mxu0 0
      %238 = vmatprep.subr.bf16.mxu0 0
      %239 = vmatpush1.bf16.msra.mxu0 0
      %240 = vmatprep.subr.bf16.mxu0 0
      %241 = vmatpush1.bf16.msra.mxu0 0
      %242 = vmatprep.subr.bf16.mxu0 0
      %243 = vmatpush1.bf16.msra.mxu0 0
      %244 = vmatprep.subr.bf16.mxu0 0
      %245 = vmatpush1.bf16.msra.mxu0 0
      %246 = vmatprep.subr.bf16.mxu0 0
      %247 = vmatpush1.bf16.msra.mxu0 0
      %248 = vmatprep.subr.bf16.mxu0 0
      %249 = vmatpush1.bf16.msra.mxu0 0
      %250 = vmatprep.subr.bf16.mxu0 0
      %251 = vmatpush1.bf16.msra.mxu0 0
      %252 = vmatprep.subr.bf16.mxu0 0
      %253 = vmatpush1.bf16.msra.mxu0 0
      %254 = vmatprep.subr.bf16.mxu0 0
      %255 = vmatpush1.bf16.msra.mxu0 0
      %256 = vmatprep.subr.bf16.mxu0 0
      %257 = vmatpush1.bf16.msra.mxu0 0
      %258 = vmatprep.subr.bf16.mxu0 0
      %259 = vmatpush1.bf16.msra.mxu0 0
      %260 = vmatprep.subr.bf16.mxu0 0
      %261 = vmatpush1.bf16.msra.mxu0 0
      %262 = vmatprep.mubr.bf16.mxu0 0
      %263 = vmatmul.mubr.bf16.gmra.mrb[0].mxu0 %v201
      %v264 = vpop.f32.mrb[0].mxu0
      %v265 = vadd.f32 0.0, %v264
      %v266 = vpop.f32.mrb[0].mxu0
      %v267 = vpop.f32.mrb[0].mxu0
      %v268 = vadd.f32 0.0, %v267
      %v269 = vpop.f32.mrb[0].mxu0
      %270 = vmatprep.mubr.bf16.mxu0 0
      %271 = vmatmul.mubr.bf16.gmra.mrb[0].mxu0 %v204
      %v272 = vpop.f32.mrb[0].mxu0
      %v273 = vadd.f32 0.0, %v272
      %v274 = vpop.f32.mrb[0].mxu0
      %v275 = vpop.f32.mrb[0].mxu0
      %v276 = vadd.f32 0.0, %v275
      %v277 = vpop.f32.mrb[0].mxu0
      %278 = vmatprep.mubr.bf16.mxu0 0
      %279 = vmatmul.mubr.bf16.gmra.mrb[0].mxu0 %v207
      %v280 = vpop.f32.mrb[0].mxu0
      %v281 = vadd.f32 0.0, %v280
      %v282 = vpop.f32.mrb[0].mxu0
      %v283 = vpop.f32.mrb[0].mxu0
      %v284 = vadd.f32 0.0, %v283
      %v285 = vpop.f32.mrb[0].mxu0
      %286 = vmatprep.mubr.bf16.mxu0 0
      %287 = vmatmul.mubr.bf16.gmra.mrb[0].mxu0 %v210
      %v288 = vpop.f32.mrb[0].mxu0
      %v289 = vadd.f32 0.0, %v288
      %v290 = vpop.f32.mrb[0].mxu0
      %v291 = vpop.f32.mrb[0].mxu0
      %v292 = vadd.f32 0.0, %v291
      %v293 = vpop.f32.mrb[0].mxu0
      %294 = vmatprep.mubr.bf16.mxu0 0
      %295 = vmatmul.mubr.bf16.gmra.mrb[0].mxu0 %v213
      %v296 = vpop.f32.mrb[0].mxu0
      %v297 = vadd.f32 0.0, %v296
      %v298 = vpop.f32.mrb[0].mxu0
      %v299 = vpop.f32.mrb[0].mxu0
      %v300 = vadd.f32 0.0, %v299
      %v301 = vpop.f32.mrb[0].mxu0
      %302 = vmatprep.mubr.bf16.mxu0 0
      %303 = vmatmul.mubr.bf16.gmra.mrb[0].mxu0 %v216
      %v304 = vpop.f32.mrb[0].mxu0
      %v305 = vadd.f32 0.0, %v304
      %v306 = vpop.f32.mrb[0].mxu0
      %v307 = vpop.f32.mrb[0].mxu0
      %v308 = vadd.f32 0.0, %v307
      %v309 = vpop.f32.mrb[0].mxu0
      %310 = vmatprep.mubr.bf16.mxu0 0
      %311 = vmatmul.mubr.bf16.gmra.mrb[0].mxu0 %v219
      %v312 = vpop.f32.mrb[0].mxu0
      %v313 = vadd.f32 0.0, %v312
      %v314 = vpop.f32.mrb[0].mxu0
      %v315 = vpop.f32.mrb[0].mxu0
      %v316 = vadd.f32 0.0, %v315
      %v317 = vpop.f32.mrb[0].mxu0
      %318 = vmatprep.mubr.bf16.mxu0 0
      %319 = vmatmul.mubr.bf16.gmra.mrb[0].mxu0 %v222
      %v320 = vpop.f32.mrb[0].mxu0
      %v321 = vadd.f32 0.0, %v320
      %v322 = vpop.f32.mrb[0].mxu0
      %v323 = vpop.f32.mrb[0].mxu0
      %v324 = vadd.f32 0.0, %v323
      %v325 = vpop.f32.mrb[0].mxu0
      %326 = vmatprep.mubr.bf16.mxu0 0
      %327 = vmatmul.mubr.bf16.gmra.mrb[0].mxu0 %v225
      %v328 = vpop.f32.mrb[0].mxu0
      %v329 = vadd.f32 0.0, %v328
      %v330 = vpop.f32.mrb[0].mxu0
      %v331 = vpop.f32.mrb[0].mxu0
      %v332 = vadd.f32 0.0, %v331
      %v333 = vpop.f32.mrb[0].mxu0
      %334 = vmatprep.mubr.bf16.mxu0 0
      %335 = vmatmul.mubr.bf16.gmra.mrb[0].mxu0 %v228
      %v336 = vpop.f32.mrb[0].mxu0
      %v337 = vadd.f32 0.0, %v336
      %v338 = vpop.f32.mrb[0].mxu0
      %v339 = vpop.f32.mrb[0].mxu0
      %v340 = vadd.f32 0.0, %v339
      %v341 = vpop.f32.mrb[0].mxu0
      %342 = vdwg.mxu0
      %v343 = vpack.c.bf16 %v268, %v265
      %v344 = vpack.c.bf16 %v276, %v273
      %v345 = vpack.c.bf16 %v284, %v281
      %v346 = vpack.c.bf16 %v292, %v289
      %v347 = vpack.c.bf16 %v300, %v297
      %v348 = vpack.c.bf16 %v308, %v305
      %v349 = vpack.c.bf16 %v316, %v313
      %v350 = vpack.c.bf16 %v324, %v321
      %v351 = vpack.c.bf16 %v332, %v329
      %v352 = vpack.c.bf16 %v340, %v337
      %v363 = vunpack.c.l.b16 %v343
      %v364 = vunpack.c.h.b16 %v343
      %v365 = vunpack.c.l.b16 %v344
      %v366 = vunpack.c.h.b16 %v344
      %v367 = vunpack.c.l.b16 %v345
      %v368 = vunpack.c.h.b16 %v345
      %v369 = vunpack.c.l.b16 %v346
      %v370 = vunpack.c.h.b16 %v346
      %v371 = vunpack.c.l.b16 %v347
      %v372 = vunpack.c.h.b16 %v347
      %v373 = vunpack.c.l.b16 %v348
      %v374 = vunpack.c.h.b16 %v348
      %v375 = vunpack.c.l.b16 %v349
      %v376 = vunpack.c.h.b16 %v349
      %v377 = vunpack.c.l.b16 %v350
      %v378 = vunpack.c.h.b16 %v350
      %v379 = vunpack.c.l.b16 %v351
      %v380 = vunpack.c.h.b16 %v351
      %v381 = vunpack.c.l.b16 %v352
      %v382 = vunpack.c.h.b16 %v352
      %v383 = vpack.c.b16 %v363, %v363
      %v384 = vpack.c.b16 %v364, %v364
      %v385 = vpack.c.b16 %v365, %v365
      %v386 = vpack.c.b16 %v366, %v366
      %v387 = vpack.c.b16 %v367, %v367
      %v388 = vpack.c.b16 %v368, %v368
      %v389 = vpack.c.b16 %v369, %v369
      %v390 = vpack.c.b16 %v370, %v370
      %v391 = vpack.c.b16 %v371, %v371
      %v392 = vpack.c.b16 %v372, %v372
      %v393 = vpack.c.b16 %v373, %v373
      %v394 = vpack.c.b16 %v374, %v374
      %v395 = vpack.c.b16 %v375, %v375
      %v396 = vpack.c.b16 %v376, %v376
      %v397 = vpack.c.b16 %v377, %v377
      %v398 = vpack.c.b16 %v378, %v378
      %v399 = vpack.c.b16 %v379, %v379
      %v400 = vpack.c.b16 %v380, %v380
      %v401 = vpack.c.b16 %v381, %v381
      %v402 = vpack.c.b16 %v382, %v382
      %vm423 = vcmask 388096
      %424 = vst.msk [vmem:[%s143] sm:$0xf] %vm423, %v383
      %425 = vst.msk [vmem:[%s143 + $0x4] sm:$0xf] %vm423, %v384
      %426 = vst.msk [vmem:[%s143 + $0x8] sm:$0xf] %vm423, %v385
      %427 = vst.msk [vmem:[%s143 + $0xc] sm:$0xf] %vm423, %v386
      %428 = vst.msk [vmem:[%s143 + $0x10] sm:$0xf] %vm423, %v387
      %429 = vst.msk [vmem:[%s143 + $0x14] sm:$0xf] %vm423, %v388
      %430 = vst.msk [vmem:[%s143 + $0x18] sm:$0xf] %vm423, %v389
      %431 = vst.msk [vmem:[%s143 + $0x1c] sm:$0xf] %vm423, %v390
      %432 = vst.msk [vmem:[%s143 + $0x20] sm:$0xf] %vm423, %v391
      %433 = vst.msk [vmem:[%s143 + $0x24] sm:$0xf] %vm423, %v392
      %434 = vst.msk [vmem:[%s143 + $0x28] sm:$0xf] %vm423, %v393
      %435 = vst.msk [vmem:[%s143 + $0x2c] sm:$0xf] %vm423, %v394
      %436 = vst.msk [vmem:[%s143 + $0x30] sm:$0xf] %vm423, %v395
      %437 = vst.msk [vmem:[%s143 + $0x34] sm:$0xf] %vm423, %v396
      %438 = vst.msk [vmem:[%s143 + $0x38] sm:$0xf] %vm423, %v397
      %439 = vst.msk [vmem:[%s143 + $0x3c] sm:$0xf] %vm423, %v398
      %440 = vst.msk [vmem:[%s143 + $0x40] sm:$0xf] %vm423, %v399
      %441 = vst.msk [vmem:[%s143 + $0x44] sm:$0xf] %vm423, %v400
      %442 = vst.msk [vmem:[%s143 + $0x48] sm:$0xf] %vm423, %v401
      %443 = vst.msk [vmem:[%s143 + $0x4c] sm:$0xf] %vm423, %v402
      %p444 = scmp.lt.s32.totalorder %s13, 1
      %s445 = scalar_select %p444, %s13, 1
      %s446 = smul.addr %s445, 20
      %s447 = smul.addr %s446, 4
      %s448 = scalar_lea.vmem %s2, %s447
      // Predicated region
      $region29: #{run.8} parent=27 // pred_check
        %p449 = pneg %p78
      $region30: #{run.8} parent=27 // pred_check_branch
        %451 = sbr.rel (%p449) target = $region32
      $region31: #{run.8} parent=27 // pred_region
        _
      $region32: #{run.8} parent=27 // pred_fallthru
        _
    $region28: #{run.8} parent=5 // pred_fallthru
      _
    %p452 = scmp.le.s32.totalorder 2, %s8
    // Predicated region
    $region33: #{run.8} parent=5 // pred_check
      %p453 = pneg %p452
    $region34: #{run.8} parent=5 // pred_check_branch
      %455 = sbr.rel (%p453) target = $region36
    $region35: #{run.8} parent=5 // pred_region
      %s456 = ssub.s32 %s8, 2
      // Predicated region
      $region37: #{run.8} parent=35 // pred_check
        %p457 = pneg %p84
      $region38: #{run.8} parent=35 // pred_check_branch
        %459 = sbr.rel (%p457) target = $region40
      $region39: #{run.8} parent=35 // pred_region
        %p460 = scmp.lt.s32.totalorder %s14, 1
        %s461 = scalar_select %p460, %s14, 1
        %s462 = smul.addr %s461, 20
        %s463 = smul.addr %s462, 4
        %s464 = scalar_lea.vmem %s2, %s463
      $region40: #{run.8} parent=35 // pred_fallthru
        _
    $region36: #{run.8} parent=5 // pred_fallthru
      _
  $region6: #{run.8} parent=0 // loop_footer
    %s12 = sadd.s32 1, %s8
  $region7: #{run.8} parent=0 // loop_footer_branch
    %7 = sbr.rel target = $region3
  $region8: #{run.8} parent=0 // loop_exit
    _

// kernel: run.7
$region0: #{run.7}
  #allocation0 [shape = 'u32[]', space=smem, size = 0x4, offset = 0x4, fixed_abs, tag = 'smem constant byte address 0x4 - core index']
  #allocation1 [shape = 'u32[144,128]{1,0:T(1,128)}', space=vmem, size = 0x12000, scoped, tag = 'internal scratch']
  %s0 = inlined_call_operand.vmem [shape: f32[2,8,48], index: 0, kind: input, shape index: {}]
  %s1 = inlined_call_operand.vmem [shape: f32[2,8,6], index: 1, kind: input, shape index: {}]
  %s2 = inlined_call_operand.vmem [shape: f32[2,8,6], index: 2, kind: input, shape index: {}]
  %s3 = inlined_call_operand.vmem [shape: f32[1,48], index: 3, kind: input, shape index: {}, may-alias: {3,6}]
  %s4 = inlined_call_operand.vmem [shape: bf16[48,144], index: 4, kind: input, shape index: {}]
  %s5 = inlined_call_operand.vmem [shape: bf16[48,48], index: 5, kind: input, shape index: {}]
  %s6 = inlined_call_operand.vmem [shape: f32[1,48], index: 6, kind: input, shape index: {}, may-alias: {3,6}]
  %s7 = inlined_call_operand.vmem [shape: bf16[48,48], index: 7, kind: input, shape index: {}]
  %s8 = inlined_call_operand.vmem [shape: f32[2,8,48], index: 8, kind: output, shape index: {0}]
  %s9 = inlined_call_operand.vmem [shape: f32[2,8,48], index: 9, kind: output, shape index: {1}]
  %10 = xla_tuple %s8, %s9
  %s11 = sld [smem:[#allocation0]]
  $region73: #{run.7} parent=0
    _
  %s13 = ssub.s32 1, %s11
  %s14 = scalar_select 0, %s13, %s11
  loop: start=0, step=1, limit=4
  $region2: #{run.7} parent=0 // loop_pre_header
    _
  $region3: #{run.7} parent=0 // loop_header
    %s16 = sphi 0, %s20
    %p17 = scmp.ge.s32.totalorder %s16, 4
    %s26 = sphi 0, %s28
    %s29 = sphi 0, %s26
    %s30 = sphi 0, %s29
    %s46 = sphi 0, %s30
    %s52 = sphi 0, %s54
    %s55 = sphi 0, %s52
    %s56 = sphi 0, %s55
    %s72 = sphi 0, %s56
    %s78 = sphi 0, %s80
    %s81 = sphi 0, %s78
    %s82 = sphi 0, %s81
    %s98 = sphi 0, %s82
    %s102 = sphi 0, %s102
    %s104 = sphi 0, %s102
    %s105 = sphi 0, %s104
    %s119 = sphi 0, %s105
    %s123 = sphi 0, %s123
    %s125 = sphi 0, %s123
    %s126 = sphi 0, %s125
    %s140 = sphi 0, %s126
    %s144 = sphi 0, %s144
    %s146 = sphi 0, %s144
    %s147 = sphi 0, %s146
    %s161 = sphi 0, %s147
    %s165 = sphi 0, %s165
    %s167 = sphi 0, %s165
    %s168 = sphi 0, %s167
    %s182 = sphi 0, %s168
    %s186 = sphi 0, %s186
    %s188 = sphi 0, %s186
    %s189 = sphi 0, %s188
    %s203 = sphi 0, %s189
    %s209 = sphi 0, %s211
    %s212 = sphi 0, %s209
    %s213 = sphi 0, %s212
    %s229 = sphi 0, %s213
    %s235 = sphi 0, %s237
    %s238 = sphi 0, %s235
    %s239 = sphi 0, %s238
    %s255 = sphi 0, %s239
  $region4: #{run.7} parent=0 // loop_header_branch
    %19 = sbr.rel (%p17) target = $region8
  $region5: #{run.7} parent=0 // loop_body
    %s21 = ssub.s32 %s16, 1
    %s22 = ssub.s32 %s16, 2
    %s23 = sadd.s32 %s16, 1
    %s24 = ssub.s32 %s16, %s23
    %p25 = scmp.eq.s32.totalorder %s24, 0
    %s27 = sadd.s32 %s26, 1
    %s28 = scalar_select %p25, %s26, %s27
    %p31 = pneg %p25
    %p32 = scmp.eq.s32.totalorder %s16, 1
    %p33 = por %p31, %p32
    %p34 = scmp.ne.s32.totalorder %s26, %s29
    %p35 = scmp.eq.s32.totalorder %s16, 0
    %p36 = por %p34, %p35
    %p37 = scmp.ne.s32.totalorder %s26, %s29
    %p38 = scmp.eq.s32.totalorder %s21, 1
    %p39 = por %p37, %p38
    %p40 = scmp.ne.s32.totalorder %s29, %s30
    %p41 = scmp.eq.s32.totalorder %s21, 0
    %p42 = por %p40, %p41
    %p43 = scmp.ne.s32.totalorder %s29, %s30
    %p44 = scmp.eq.s32.totalorder %s22, 1
    %p45 = por %p43, %p44
    %p47 = scmp.ne.s32.totalorder %s30, %s46
    %p48 = scmp.eq.s32.totalorder %s22, 0
    %p49 = por %p47, %p48
    %s50 = ssub.s32 %s16, %s23
    %p51 = scmp.eq.s32.totalorder %s50, 0
    %s53 = sadd.s32 %s52, 1
    %s54 = scalar_select %p51, %s52, %s53
    %p57 = pneg %p51
    %p58 = scmp.eq.s32.totalorder %s16, 1
    %p59 = por %p57, %p58
    %p60 = scmp.ne.s32.totalorder %s52, %s55
    %p61 = scmp.eq.s32.totalorder %s16, 0
    %p62 = por %p60, %p61
    %p63 = scmp.ne.s32.totalorder %s52, %s55
    %p64 = scmp.eq.s32.totalorder %s21, 1
    %p65 = por %p63, %p64
    %p66 = scmp.ne.s32.totalorder %s55, %s56
    %p67 = scmp.eq.s32.totalorder %s21, 0
    %p68 = por %p66, %p67
    %p69 = scmp.ne.s32.totalorder %s55, %s56
    %p70 = scmp.eq.s32.totalorder %s22, 1
    %p71 = por %p69, %p70
    %p73 = scmp.ne.s32.totalorder %s56, %s72
    %p74 = scmp.eq.s32.totalorder %s22, 0
    %p75 = por %p73, %p74
    %s76 = ssub.s32 %s16, %s23
    %p77 = scmp.eq.s32.totalorder %s76, 0
    %s79 = sadd.s32 %s78, 1
    %s80 = scalar_select %p77, %s78, %s79
    %p83 = pneg %p77
    %p84 = scmp.eq.s32.totalorder %s16, 1
    %p85 = por %p83, %p84
    %p86 = scmp.ne.s32.totalorder %s78, %s81
    %p87 = scmp.eq.s32.totalorder %s16, 0
    %p88 = por %p86, %p87
    %p89 = scmp.ne.s32.totalorder %s78, %s81
    %p90 = scmp.eq.s32.totalorder %s21, 1
    %p91 = por %p89, %p90
    %p92 = scmp.ne.s32.totalorder %s81, %s82
    %p93 = scmp.eq.s32.totalorder %s21, 0
    %p94 = por %p92, %p93
    %p95 = scmp.ne.s32.totalorder %s81, %s82
    %p96 = scmp.eq.s32.totalorder %s22, 1
    %p97 = por %p95, %p96
    %p99 = scmp.ne.s32.totalorder %s82, %s98
    %p100 = scmp.eq.s32.totalorder %s22, 0
    %p101 = por %p99, %p100
    %s103 = sadd.s32 %s102, 1
    %p106 = scmp.eq.s32.totalorder %s16, 1
    %p107 = scmp.ne.s32.totalorder %s102, %s104
    %p108 = scmp.eq.s32.totalorder %s16, 0
    %p109 = por %p107, %p108
    %p110 = scmp.ne.s32.totalorder %s102, %s104
    %p111 = scmp.eq.s32.totalorder %s21, 1
    %p112 = por %p110, %p111
    %p113 = scmp.ne.s32.totalorder %s104, %s105
    %p114 = scmp.eq.s32.totalorder %s21, 0
    %p115 = por %p113, %p114
    %p116 = scmp.ne.s32.totalorder %s104, %s105
    %p117 = scmp.eq.s32.totalorder %s22, 1
    %p118 = por %p116, %p117
    %p120 = scmp.ne.s32.totalorder %s105, %s119
    %p121 = scmp.eq.s32.totalorder %s22, 0
    %p122 = por %p120, %p121
    %s124 = sadd.s32 %s123, 1
    %p127 = scmp.eq.s32.totalorder %s16, 1
    %p128 = scmp.ne.s32.totalorder %s123, %s125
    %p129 = scmp.eq.s32.totalorder %s16, 0
    %p130 = por %p128, %p129
    %p131 = scmp.ne.s32.totalorder %s123, %s125
    %p132 = scmp.eq.s32.totalorder %s21, 1
    %p133 = por %p131, %p132
    %p134 = scmp.ne.s32.totalorder %s125, %s126
    %p135 = scmp.eq.s32.totalorder %s21, 0
    %p136 = por %p134, %p135
    %p137 = scmp.ne.s32.totalorder %s125, %s126
    %p138 = scmp.eq.s32.totalorder %s22, 1
    %p139 = por %p137, %p138
    %p141 = scmp.ne.s32.totalorder %s126, %s140
    %p142 = scmp.eq.s32.totalorder %s22, 0
    %p143 = por %p141, %p142
    %s145 = sadd.s32 %s144, 1
    %p148 = scmp.eq.s32.totalorder %s16, 1
    %p149 = scmp.ne.s32.totalorder %s144, %s146
    %p150 = scmp.eq.s32.totalorder %s16, 0
    %p151 = por %p149, %p150
    %p152 = scmp.ne.s32.totalorder %s144, %s146
    %p153 = scmp.eq.s32.totalorder %s21, 1
    %p154 = por %p152, %p153
    %p155 = scmp.ne.s32.totalorder %s146, %s147
    %p156 = scmp.eq.s32.totalorder %s21, 0
    %p157 = por %p155, %p156
    %p158 = scmp.ne.s32.totalorder %s146, %s147
    %p159 = scmp.eq.s32.totalorder %s22, 1
    %p160 = por %p158, %p159
    %p162 = scmp.ne.s32.totalorder %s147, %s161
    %p163 = scmp.eq.s32.totalorder %s22, 0
    %p164 = por %p162, %p163
    %s166 = sadd.s32 %s165, 1
    %p169 = scmp.eq.s32.totalorder %s16, 1
    %p170 = scmp.ne.s32.totalorder %s165, %s167
    %p171 = scmp.eq.s32.totalorder %s16, 0
    %p172 = por %p170, %p171
    %p173 = scmp.ne.s32.totalorder %s165, %s167
    %p174 = scmp.eq.s32.totalorder %s21, 1
    %p175 = por %p173, %p174
    %p176 = scmp.ne.s32.totalorder %s167, %s168
    %p177 = scmp.eq.s32.totalorder %s21, 0
    %p178 = por %p176, %p177
    %p179 = scmp.ne.s32.totalorder %s167, %s168
    %p180 = scmp.eq.s32.totalorder %s22, 1
    %p181 = por %p179, %p180
    %p183 = scmp.ne.s32.totalorder %s168, %s182
    %p184 = scmp.eq.s32.totalorder %s22, 0
    %p185 = por %p183, %p184
    %s187 = sadd.s32 %s186, 1
    %p190 = scmp.eq.s32.totalorder %s16, 1
    %p191 = scmp.ne.s32.totalorder %s186, %s188
    %p192 = scmp.eq.s32.totalorder %s16, 0
    %p193 = por %p191, %p192
    %p194 = scmp.ne.s32.totalorder %s186, %s188
    %p195 = scmp.eq.s32.totalorder %s21, 1
    %p196 = por %p194, %p195
    %p197 = scmp.ne.s32.totalorder %s188, %s189
    %p198 = scmp.eq.s32.totalorder %s21, 0
    %p199 = por %p197, %p198
    %p200 = scmp.ne.s32.totalorder %s188, %s189
    %p201 = scmp.eq.s32.totalorder %s22, 1
    %p202 = por %p200, %p201
    %p204 = scmp.ne.s32.totalorder %s189, %s203
    %p205 = scmp.eq.s32.totalorder %s22, 0
    %p206 = por %p204, %p205
    %s207 = ssub.s32 %s16, %s23
    %p208 = scmp.eq.s32.totalorder %s207, 0
    %s210 = sadd.s32 %s209, 1
    %s211 = scalar_select %p208, %s209, %s210
    %p214 = pneg %p208
    %p215 = scmp.eq.s32.totalorder %s16, 1
    %p216 = por %p214, %p215
    %p217 = scmp.ne.s32.totalorder %s209, %s212
    %p218 = scmp.eq.s32.totalorder %s16, 0
    %p219 = por %p217, %p218
    %p220 = scmp.ne.s32.totalorder %s209, %s212
    %p221 = scmp.eq.s32.totalorder %s21, 1
    %p222 = por %p220, %p221
    %p223 = scmp.ne.s32.totalorder %s212, %s213
    %p224 = scmp.eq.s32.totalorder %s21, 0
    %p225 = por %p223, %p224
    %p226 = scmp.ne.s32.totalorder %s212, %s213
    %p227 = scmp.eq.s32.totalorder %s22, 1
    %p228 = por %p226, %p227
    %p230 = scmp.ne.s32.totalorder %s213, %s229
    %p231 = scmp.eq.s32.totalorder %s22, 0
    %p232 = por %p230, %p231
    %s233 = ssub.s32 %s16, %s23
    %p234 = scmp.eq.s32.totalorder %s233, 0
    %s236 = sadd.s32 %s235, 1
    %s237 = scalar_select %p234, %s235, %s236
    %p240 = pneg %p234
    %p241 = scmp.eq.s32.totalorder %s16, 1
    %p242 = por %p240, %p241
    %p243 = scmp.ne.s32.totalorder %s235, %s238
    %p244 = scmp.eq.s32.totalorder %s16, 0
    %p245 = por %p243, %p244
    %p246 = scmp.ne.s32.totalorder %s235, %s238
    %p247 = scmp.eq.s32.totalorder %s21, 1
    %p248 = por %p246, %p247
    %p249 = scmp.ne.s32.totalorder %s238, %s239
    %p250 = scmp.eq.s32.totalorder %s21, 0
    %p251 = por %p249, %p250
    %p252 = scmp.ne.s32.totalorder %s238, %s239
    %p253 = scmp.eq.s32.totalorder %s22, 1
    %p254 = por %p252, %p253
    %p256 = scmp.ne.s32.totalorder %s239, %s255
    %p257 = scmp.eq.s32.totalorder %s22, 0
    %p258 = por %p256, %p257
    %p259 = scmp.le.s32.totalorder 1, %s16
    %p260 = scmp.lt.s32.totalorder %s16, 3
    %p261 = pnand %p259, %p260
    %p262 = pneg %p261
    // Predicated region
    $region9: #{run.7} parent=5 // pred_check
      _
    $region10: #{run.7} parent=5 // pred_check_branch
      %264 = sbr.rel (%p261) target = $region12
    $region11: #{run.7} parent=5 // pred_region
      %s265 = ssub.s32 %s16, 1
      // Predicated region
      $region13: #{run.7} parent=11 // pred_check
        %p266 = pneg %p115
      $region14: #{run.7} parent=11 // pred_check_branch
        %268 = sbr.rel (%p266) target = $region16
      $region15: #{run.7} parent=11 // pred_region
        _
      $region16: #{run.7} parent=11 // pred_fallthru
        _
      // Predicated region
      $region17: #{run.7} parent=11 // pred_check
        %p269 = pneg %p136
      $region18: #{run.7} parent=11 // pred_check_branch
        %271 = sbr.rel (%p269) target = $region20
      $region19: #{run.7} parent=11 // pred_region
        _
      $region20: #{run.7} parent=11 // pred_fallthru
        _
      // Predicated region
      $region21: #{run.7} parent=11 // pred_check
        %p272 = pneg %p157
      $region22: #{run.7} parent=11 // pred_check_branch
        %274 = sbr.rel (%p272) target = $region24
      $region23: #{run.7} parent=11 // pred_region
        _
      $region24: #{run.7} parent=11 // pred_fallthru
        _
      // Predicated region
      $region25: #{run.7} parent=11 // pred_check
        %p275 = pneg %p178
      $region26: #{run.7} parent=11 // pred_check_branch
        %277 = sbr.rel (%p275) target = $region28
      $region27: #{run.7} parent=11 // pred_region
        _
      $region28: #{run.7} parent=11 // pred_fallthru
        _
      // Predicated region
      $region29: #{run.7} parent=11 // pred_check
        %p278 = pneg %p199
      $region30: #{run.7} parent=11 // pred_check_branch
        %280 = sbr.rel (%p278) target = $region32
      $region31: #{run.7} parent=11 // pred_region
        _
      $region32: #{run.7} parent=11 // pred_fallthru
        _
    $region12: #{run.7} parent=5 // pred_fallthru
      _
    %p281 = scmp.lt.s32.totalorder %s16, 2
    // Predicated region
    $region33: #{run.7} parent=5 // pred_check
      %p282 = pneg %p281
    $region34: #{run.7} parent=5 // pred_check_branch
      %284 = sbr.rel (%p282) target = $region36
    $region35: #{run.7} parent=5 // pred_region
      // Predicated region
      $region37: #{run.7} parent=35 // pred_check
        %p285 = pneg %p36
      $region38: #{run.7} parent=35 // pred_check_branch
        %287 = sbr.rel (%p285) target = $region40
      $region39: #{run.7} parent=35 // pred_region
        %p288 = scmp.lt.s32.totalorder %s16, 1
        %s289 = scalar_select %p288, %s16, 1
        %s290 = smul.addr %s289, 8
        %s291 = scalar_lea.vmem %s0, %s290
      $region40: #{run.7} parent=35 // pred_fallthru
        _
      // Predicated region
      $region41: #{run.7} parent=35 // pred_check
        %p292 = pneg %p62
      $region42: #{run.7} parent=35 // pred_check_branch
        %294 = sbr.rel (%p292) target = $region44
      $region43: #{run.7} parent=35 // pred_region
        %p295 = scmp.lt.s32.totalorder %s16, 1
        %s296 = scalar_select %p295, %s16, 1
        %s297 = smul.addr %s296, 8
        %s298 = scalar_lea.vmem %s1, %s297
      $region44: #{run.7} parent=35 // pred_fallthru
        _
      // Predicated region
      $region45: #{run.7} parent=35 // pred_check
        %p299 = pneg %p88
      $region46: #{run.7} parent=35 // pred_check_branch
        %301 = sbr.rel (%p299) target = $region48
      $region47: #{run.7} parent=35 // pred_region
        %p302 = scmp.lt.s32.totalorder %s16, 1
        %s303 = scalar_select %p302, %s16, 1
        %s304 = smul.addr %s303, 8
        %s305 = scalar_lea.vmem %s2, %s304
      $region48: #{run.7} parent=35 // pred_fallthru
        _
    $region36: #{run.7} parent=5 // pred_fallthru
      _
    %p306 = scmp.le.s32.totalorder 1, %s16
    %p307 = scmp.lt.s32.totalorder %s16, 3
    %p308 = pnand %p306, %p307
    %p309 = pneg %p308
    // Predicated region
    $region49: #{run.7} parent=5 // pred_check
      _
    $region50: #{run.7} parent=5 // pred_check_branch
      %311 = sbr.rel (%p308) target = $region52
    $region51: #{run.7} parent=5 // pred_region
      %s312 = ssub.s32 %s16, 1
      %p313 = scmp.lt.s32.totalorder %s21, 1
      %s314 = scalar_select %p313, %s21, 1
      %s315 = smul.addr %s314, 8
      %s316 = scalar_lea.vmem %s0, %s315
      %p317 = pneg %p42
      %p318 = pneg %p39
      %p319 = scmp.lt.s32.totalorder %s21, 1
      %s320 = scalar_select %p319, %s21, 1
      %s321 = smul.addr %s320, 8
      %s322 = scalar_lea.vmem %s1, %s321
      %p323 = pneg %p68
      %p324 = pneg %p65
      %p325 = scmp.lt.s32.totalorder %s21, 1
      %s326 = scalar_select %p325, %s21, 1
      %s327 = smul.addr %s326, 8
      %s328 = scalar_lea.vmem %s2, %s327
      %p329 = pneg %p94
      %p330 = pneg %p91
      %p331 = pneg %p115
      %p332 = pneg %p112
      %p333 = pneg %p136
      %p334 = pneg %p133
      %p335 = pneg %p157
      %p336 = pneg %p154
      %p337 = pneg %p178
      %p338 = pneg %p175
      %p339 = pneg %p199
      %p340 = pneg %p196
      %p341 = pneg %p225
      %p342 = pneg %p222
      %p343 = scmp.lt.s32.totalorder %s21, 1
      %s344 = scalar_select %p343, %s21, 1
      %s345 = smul.addr %s344, 8
      %s346 = scalar_lea.vmem %s8, %s345
      %p347 = pneg %p251
      %p348 = pneg %p248
      %p349 = scmp.lt.s32.totalorder %s21, 1
      %s350 = scalar_select %p349, %s21, 1
      %s351 = smul.addr %s350, 8
      %s352 = scalar_lea.vmem %s9, %s351
      %p353 = scmp.lt.s32.totalorder %s21, 1
      %s354 = scalar_select %p353, %s21, 1
      %s355 = smul.addr %s354, 8
      %s356 = scalar_lea.vmem %s0, %s355
      %p357 = scmp.lt.s32.totalorder %s21, 1
      %s358 = scalar_select %p357, %s21, 1
      %s359 = smul.addr %s358, 8
      %s360 = scalar_lea.vmem %s1, %s359
      %p361 = scmp.lt.s32.totalorder %s21, 1
      %s362 = scalar_select %p361, %s21, 1
      %s363 = smul.addr %s362, 8
      %s364 = scalar_lea.vmem %s2, %s363
      %p365 = scmp.lt.s32.totalorder %s21, 1
      %s366 = scalar_select %p365, %s21, 1
      %s367 = smul.addr %s366, 8
      %s368 = scalar_lea.vmem %s8, %s367
      %p369 = scmp.lt.s32.totalorder %s21, 1
      %s370 = scalar_select %p369, %s21, 1
      %s371 = smul.addr %s370, 8
      %s372 = scalar_lea.vmem %s9, %s371
      %v374 = vld [vmem:[%s356] sm:$0xff]
      %v375 = vmul.f32 %v374, %v374
      %vm376 = vcmask 392192
      %v377 = vsel %vm376, %v375, 0.0
      %378 = vadd.xlane.f32.xlu0 %v377
      %v379 = vpop.xlane.xlu0 %378
      %v380 = vrcp.pop 48.0
      %v381 = vmul.f32 %v379, %v380
      %v382 = vadd.f32 %v381, 1e-05
      %v383 = vrsqrt.pop %v382
      %v384 = vmul.f32 %v374, %v383
      %v385 = vld [vmem:[%s3] sm:$0x1]
      %v387 = vlaneseq
      %v388 = vshrl.u32 %v387, 7
      %v389 = vsub.s32 0, %v388
      %v390 = vrot.slane %v385, %v389
      %v392 = vmul.f32 %v384, %v390
      %v393 = vpack.c.bf16 %v392, %v392
      %v394 = vld [vmem:[%s4] sm:$0xff]
      %v395 = vld [vmem:[%s4 + $0x8] sm:$0xff]
      %v396 = vld [vmem:[%s4 + $0x10] sm:$0xff]
      %v397 = vld [vmem:[%s4 + $0x18] sm:$0xff]
      %v398 = vld [vmem:[%s4 + $0x20] sm:$0xff]
      %v399 = vld [vmem:[%s4 + $0x28] sm:$0xff]
      %v406 = vunpack.c.l.b16 %v394
      %v407 = vunpack.c.h.b16 %v394
      %v408 = vunpack.c.l.b16 %v395
      %v409 = vunpack.c.h.b16 %v395
      %v410 = vunpack.c.l.b16 %v396
      %v411 = vunpack.c.h.b16 %v396
      %v412 = vunpack.c.l.b16 %v397
      %v413 = vunpack.c.h.b16 %v397
      %v414 = vunpack.c.l.b16 %v398
      %v415 = vunpack.c.h.b16 %v398
      %v416 = vunpack.c.l.b16 %v399
      %v417 = vunpack.c.h.b16 %v399
      %v418 = vpack.c.b16 %v408, %v406
      %v419 = vpack.c.b16 %v409, %v407
      %v420 = vpack.c.b16 %v412, %v410
      %v421 = vpack.c.b16 %v413, %v411
      %v422 = vpack.c.b16 %v416, %v414
      %v423 = vpack.c.b16 %v417, %v415
      %v431 = vsel %vm376, %v393, 0
      %433 = vmatprep.subr.bf16.mxu0 %v419
      %434 = vmatpush1.bf16.msra.mxu0 %v418
      %435 = vmatprep.subr.bf16.mxu0 %v421
      %436 = vmatpush1.bf16.msra.mxu0 %v420
      %437 = vmatprep.subr.bf16.mxu0 %v423
      %438 = vmatpush1.bf16.msra.mxu0 %v422
      %439 = vmatprep.subr.bf16.mxu0 0
      %440 = vmatpush1.bf16.msra.mxu0 0
      %441 = vmatprep.subr.bf16.mxu0 0
      %442 = vmatpush1.bf16.msra.mxu0 0
      %443 = vmatprep.subr.bf16.mxu0 0
      %444 = vmatpush1.bf16.msra.mxu0 0
      %445 = vmatprep.subr.bf16.mxu0 0
      %446 = vmatpush1.bf16.msra.mxu0 0
      %447 = vmatprep.subr.bf16.mxu0 0
      %448 = vmatpush1.bf16.msra.mxu0 0
      %449 = vmatprep.subr.bf16.mxu0 0
      %450 = vmatpush1.bf16.msra.mxu0 0
      %451 = vmatprep.subr.bf16.mxu0 0
      %452 = vmatpush1.bf16.msra.mxu0 0
      %453 = vmatprep.subr.bf16.mxu0 0
      %454 = vmatpush1.bf16.msra.mxu0 0
      %455 = vmatprep.subr.bf16.mxu0 0
      %456 = vmatpush1.bf16.msra.mxu0 0
      %457 = vmatprep.subr.bf16.mxu0 0
      %458 = vmatpush1.bf16.msra.mxu0 0
      %459 = vmatprep.subr.bf16.mxu0 0
      %460 = vmatpush1.bf16.msra.mxu0 0
      %461 = vmatprep.subr.bf16.mxu0 0
      %462 = vmatpush1.bf16.msra.mxu0 0
      %463 = vmatprep.subr.bf16.mxu0 0
      %464 = vmatpush1.bf16.msra.mxu0 0
      %465 = vmatprep.mubr.bf16.mxu0 0
      %466 = vmatmul.mubr.bf16.gmra.mrb[0].mxu0 %v431
      %v467 = vpop.f32.mrb[0].mxu0
      %v468 = vadd.f32 0.0, %v467
      %v469 = vpop.f32.mrb[0].mxu0
      %v470 = vadd.f32 0.0, %v469
      %v471 = vpop.f32.mrb[0].mxu0
      %v472 = vpop.f32.mrb[0].mxu0
      %473 = vdwg.mxu0
      %v474 = vld [vmem:[%s360] sm:$0xff]
      %v475 = vld [vmem:[%s364] sm:$0xff]
      %v476 = vmul.f32 %v468, %v474
      %478 = vrot.lane.b32.xlu0 %v475, 6
      %v479 = vpop.permute.xlu0 %478
      %v481 = vmul.f32 %v468, %v479
      %483 = vrot.lane.b32.xlu0 %v481, 122
      %v484 = vpop.permute.xlu0 %483
      %v486 = vsub.f32 %v476, %v484
      %488 = vrot.lane.b32.xlu0 %v474, 6
      %v489 = vpop.permute.xlu0 %488
      %v491 = vmul.f32 %v468, %v489
      %v492 = vmul.f32 %v468, %v475
      %494 = vrot.lane.b32.xlu0 %v492, 6
      %v495 = vpop.permute.xlu0 %494
      %v497 = vadd.f32 %v491, %v495
      %vm498 = vcmask 48128
      %v499 = vsel %vm498, %v486, %v497
      %500 = vrot.lane.b32.xlu0 %v474, 48
      %v501 = vpop.permute.xlu0 %500
      %v503 = vmul.f32 %v468, %v501
      %504 = vrot.lane.b32.xlu0 %v475, 54
      %v505 = vpop.permute.xlu0 %504
      %v507 = vmul.f32 %v468, %v505
      %509 = vrot.lane.b32.xlu0 %v507, 122
      %v510 = vpop.permute.xlu0 %509
      %v512 = vsub.f32 %v503, %v510
      %513 = vrot.lane.b32.xlu0 %v474, 54
      %v514 = vpop.permute.xlu0 %513
      %v516 = vmul.f32 %v468, %v514
      %517 = vrot.lane.b32.xlu0 %v475, 48
      %v518 = vpop.permute.xlu0 %517
      %v520 = vmul.f32 %v468, %v518
      %522 = vrot.lane.b32.xlu0 %v520, 6
      %v523 = vpop.permute.xlu0 %522
      %v525 = vadd.f32 %v516, %v523
      %527 = vrot.lane.b32.xlu0 %v512, 80
      %v528 = vpop.permute.xlu0 %527
      %531 = vrot.lane.b32.xlu0 %v525, 80
      %v532 = vpop.permute.xlu0 %531
      %v534 = vsel %vm498, %v528, %v532
      %535 = vrot.lane.b32.xlu0 %v474, 12
      %v536 = vpop.permute.xlu0 %535
      %v538 = vmul.f32 %v468, %v536
      %539 = vrot.lane.b32.xlu0 %v475, 18
      %v540 = vpop.permute.xlu0 %539
      %v542 = vmul.f32 %v468, %v540
      %544 = vrot.lane.b32.xlu0 %v542, 122
      %v545 = vpop.permute.xlu0 %544
      %v547 = vsub.f32 %v538, %v545
      %548 = vrot.lane.b32.xlu0 %v474, 18
      %v549 = vpop.permute.xlu0 %548
      %v551 = vmul.f32 %v468, %v549
      %552 = vrot.lane.b32.xlu0 %v475, 12
      %v553 = vpop.permute.xlu0 %552
      %v555 = vmul.f32 %v468, %v553
      %557 = vrot.lane.b32.xlu0 %v555, 6
      %v558 = vpop.permute.xlu0 %557
      %v560 = vadd.f32 %v551, %v558
      %562 = vrot.lane.b32.xlu0 %v547, 116
      %v563 = vpop.permute.xlu0 %562
      %566 = vrot.lane.b32.xlu0 %v560, 116
      %v567 = vpop.permute.xlu0 %566
      %v569 = vsel %vm498, %v563, %v567
      %570 = vrot.lane.b32.xlu0 %v474, 60
      %v571 = vpop.permute.xlu0 %570
      %v573 = vmul.f32 %v468, %v571
      %574 = vrot.lane.b32.xlu0 %v475, 66
      %v575 = vpop.permute.xlu0 %574
      %v577 = vmul.f32 %v468, %v575
      %579 = vrot.lane.b32.xlu0 %v577, 122
      %v580 = vpop.permute.xlu0 %579
      %v582 = vsub.f32 %v573, %v580
      %583 = vrot.lane.b32.xlu0 %v474, 66
      %v584 = vpop.permute.xlu0 %583
      %v586 = vmul.f32 %v468, %v584
      %587 = vrot.lane.b32.xlu0 %v475, 60
      %v588 = vpop.permute.xlu0 %587
      %v590 = vmul.f32 %v468, %v588
      %592 = vrot.lane.b32.xlu0 %v590, 6
      %v593 = vpop.permute.xlu0 %592
      %v595 = vadd.f32 %v586, %v593
      %597 = vrot.lane.b32.xlu0 %v582, 68
      %v598 = vpop.permute.xlu0 %597
      %601 = vrot.lane.b32.xlu0 %v595, 68
      %v602 = vpop.permute.xlu0 %601
      %v604 = vsel %vm498, %v598, %v602
      %605 = vrot.lane.b32.xlu0 %v474, 24
      %v606 = vpop.permute.xlu0 %605
      %v608 = vmul.f32 %v468, %v606
      %609 = vrot.lane.b32.xlu0 %v475, 30
      %v610 = vpop.permute.xlu0 %609
      %v612 = vmul.f32 %v468, %v610
      %614 = vrot.lane.b32.xlu0 %v612, 122
      %v615 = vpop.permute.xlu0 %614
      %v617 = vsub.f32 %v608, %v615
      %618 = vrot.lane.b32.xlu0 %v474, 30
      %v619 = vpop.permute.xlu0 %618
      %v621 = vmul.f32 %v468, %v619
      %622 = vrot.lane.b32.xlu0 %v475, 24
      %v623 = vpop.permute.xlu0 %622
      %v625 = vmul.f32 %v468, %v623
      %627 = vrot.lane.b32.xlu0 %v625, 6
      %v628 = vpop.permute.xlu0 %627
      %v630 = vadd.f32 %v621, %v628
      %632 = vrot.lane.b32.xlu0 %v617, 104
      %v633 = vpop.permute.xlu0 %632
      %636 = vrot.lane.b32.xlu0 %v630, 104
      %v637 = vpop.permute.xlu0 %636
      %v639 = vsel %vm498, %v633, %v637
      %640 = vrot.lane.b32.xlu0 %v474, 72
      %v641 = vpop.permute.xlu0 %640
      %v643 = vmul.f32 %v468, %v641
      %644 = vrot.lane.b32.xlu0 %v475, 78
      %v645 = vpop.permute.xlu0 %644
      %v647 = vmul.f32 %v468, %v645
      %649 = vrot.lane.b32.xlu0 %v647, 122
      %v650 = vpop.permute.xlu0 %649
      %v652 = vsub.f32 %v643, %v650
      %653 = vrot.lane.b32.xlu0 %v474, 78
      %v654 = vpop.permute.xlu0 %653
      %v656 = vmul.f32 %v468, %v654
      %657 = vrot.lane.b32.xlu0 %v475, 72
      %v658 = vpop.permute.xlu0 %657
      %v660 = vmul.f32 %v468, %v658
      %662 = vrot.lane.b32.xlu0 %v660, 6
      %v663 = vpop.permute.xlu0 %662
      %v665 = vadd.f32 %v656, %v663
      %667 = vrot.lane.b32.xlu0 %v652, 56
      %v668 = vpop.permute.xlu0 %667
      %671 = vrot.lane.b32.xlu0 %v665, 56
      %v672 = vpop.permute.xlu0 %671
      %v674 = vsel %vm498, %v668, %v672
      %675 = vrot.lane.b32.xlu0 %v474, 36
      %v676 = vpop.permute.xlu0 %675
      %v678 = vmul.f32 %v468, %v676
      %679 = vrot.lane.b32.xlu0 %v475, 42
      %v680 = vpop.permute.xlu0 %679
      %v682 = vmul.f32 %v468, %v680
      %684 = vrot.lane.b32.xlu0 %v682, 122
      %v685 = vpop.permute.xlu0 %684
      %v687 = vsub.f32 %v678, %v685
      %688 = vrot.lane.b32.xlu0 %v474, 42
      %v689 = vpop.permute.xlu0 %688
      %v691 = vmul.f32 %v468, %v689
      %692 = vrot.lane.b32.xlu0 %v475, 36
      %v693 = vpop.permute.xlu0 %692
      %v695 = vmul.f32 %v468, %v693
      %697 = vrot.lane.b32.xlu0 %v695, 6
      %v698 = vpop.permute.xlu0 %697
      %v700 = vadd.f32 %v691, %v698
      %702 = vrot.lane.b32.xlu0 %v687, 92
      %v703 = vpop.permute.xlu0 %702
      %706 = vrot.lane.b32.xlu0 %v700, 92
      %v707 = vpop.permute.xlu0 %706
      %v709 = vsel %vm498, %v703, %v707
      %710 = vrot.lane.b32.xlu0 %v474, 84
      %v711 = vpop.permute.xlu0 %710
      %v713 = vmul.f32 %v468, %v711
      %714 = vrot.lane.b32.xlu0 %v475, 90
      %v715 = vpop.permute.xlu0 %714
      %v717 = vmul.f32 %v468, %v715
      %719 = vrot.lane.b32.xlu0 %v717, 122
      %v720 = vpop.permute.xlu0 %719
      %v722 = vsub.f32 %v713, %v720
      %723 = vrot.lane.b32.xlu0 %v474, 90
      %v724 = vpop.permute.xlu0 %723
      %v726 = vmul.f32 %v468, %v724
      %727 = vrot.lane.b32.xlu0 %v475, 84
      %v728 = vpop.permute.xlu0 %727
      %v730 = vmul.f32 %v468, %v728
      %732 = vrot.lane.b32.xlu0 %v730, 6
      %v733 = vpop.permute.xlu0 %732
      %v735 = vadd.f32 %v726, %v733
      %737 = vrot.lane.b32.xlu0 %v722, 44
      %v738 = vpop.permute.xlu0 %737
      %741 = vrot.lane.b32.xlu0 %v735, 44
      %v742 = vpop.permute.xlu0 %741
      %v744 = vsel %vm498, %v738, %v742
      %v745 = vmul.f32 %v499, %v534
      %vm746 = vcmask 97280
      %v747 = vsel %vm746, %v745, 0.0
      %748 = vadd.xlane.f32.xlu0 %v747
      %v749 = vpop.xlane.xlu0 %748
      %v750 = vmul.f32 %v499, %v604
      %v751 = vsel %vm746, %v750, 0.0
      %752 = vadd.xlane.f32.xlu0 %v751
      %v753 = vpop.xlane.xlu0 %752
      %v754 = vmul.f32 %v499, %v674
      %v755 = vsel %vm746, %v754, 0.0
      %756 = vadd.xlane.f32.xlu0 %v755
      %v757 = vpop.xlane.xlu0 %756
      %v758 = vmul.f32 %v499, %v744
      %v759 = vsel %vm746, %v758, 0.0
      %760 = vadd.xlane.f32.xlu0 %v759
      %v761 = vpop.xlane.xlu0 %760
      %vm762 = vcmask 7168
      %v763 = vsel %vm762, %v749, %v753
      %vm764 = vcmask 15360
      %v765 = vsel %vm764, %v763, %v757
      %vm766 = vcmask 23552
      %v767 = vsel %vm766, %v765, %v761
      %v768 = vmul.f32 %v767, 0.28867513
      %vm769 = vcmask 31744
      %v770 = vsel %vm769, %v768, -inf
      %771 = vmax.xlane.f32.xlu0 %v770
      %v772 = vpop.xlane.xlu0 %771
      %v773 = vsub.f32 %v768, %v772
      %v774 = vmul.f32 %v773, 1.442695
      %v775 = vpow.pop %v774
      %v776 = vsel %vm769, %v775, 0.0
      %777 = vadd.xlane.f32.xlu0 %v776
      %v778 = vpop.xlane.xlu0 %777
      %v779 = vrcp.pop %v778
      %v780 = vmul.f32 %v775, %v779
      %782 = vset.pattern.permute.xlu0 0
      %783 = vperm.xlu0 %782, %v780
      %v784 = vpop.permute.xlu0 %783
      %v786 = vmul.f32 %v784, %v468
      %787 = vset.pattern.permute.xlu0 1
      %788 = vperm.xlu0 %787, %v780
      %v789 = vpop.permute.xlu0 %788
      %v791 = vmul.f32 %v789, %v468
      %793 = vrot.lane.b32.xlu0 %v791, 116
      %v794 = vpop.permute.xlu0 %793
      %v796 = vadd.f32 %v786, %v794
      %797 = vset.pattern.permute.xlu0 2
      %798 = vperm.xlu0 %797, %v780
      %v799 = vpop.permute.xlu0 %798
      %v801 = vmul.f32 %v799, %v468
      %v802 = vmul.f32 %v799, %v470
      %805 = vrot.lane.b32.xlu0 %v801, 104
      %v806 = vpop.permute.xlu0 %805
      %807 = vrot.lane.b32.xlu0 %v802, 104
      %v808 = vpop.permute.xlu0 %807
      %vm809 = vcmask 850944
      %v810 = vsel %vm809, %v806, %v808
      %v812 = vadd.f32 %v796, %v810
      %813 = vset.pattern.permute.xlu0 3
      %814 = vperm.xlu0 %813, %v780
      %v815 = vpop.permute.xlu0 %814
      %v817 = vmul.f32 %v815, %v470
      %819 = vrot.lane.b32.xlu0 %v817, 92
      %v820 = vpop.permute.xlu0 %819
      %v822 = vadd.f32 %v812, %v820
      %v823 = vmul.f32 %v569, %v534
      %v824 = vsel %vm746, %v823, 0.0
      %825 = vadd.xlane.f32.xlu0 %v824
      %v826 = vpop.xlane.xlu0 %825
      %v827 = vmul.f32 %v569, %v604
      %v828 = vsel %vm746, %v827, 0.0
      %829 = vadd.xlane.f32.xlu0 %v828
      %v830 = vpop.xlane.xlu0 %829
      %v831 = vmul.f32 %v569, %v674
      %v832 = vsel %vm746, %v831, 0.0
      %833 = vadd.xlane.f32.xlu0 %v832
      %v834 = vpop.xlane.xlu0 %833
      %v835 = vmul.f32 %v569, %v744
      %v836 = vsel %vm746, %v835, 0.0
      %837 = vadd.xlane.f32.xlu0 %v836
      %v838 = vpop.xlane.xlu0 %837
      %v839 = vsel %vm762, %v826, %v830
      %v840 = vsel %vm764, %v839, %v834
      %v841 = vsel %vm766, %v840, %v838
      %v842 = vmul.f32 %v841, 0.28867513
      %v843 = vsel %vm769, %v842, -inf
      %844 = vmax.xlane.f32.xlu0 %v843
      %v845 = vpop.xlane.xlu0 %844
      %v846 = vsub.f32 %v842, %v845
      %v847 = vmul.f32 %v846, 1.442695
      %v848 = vpow.pop %v847
      %v849 = vsel %vm769, %v848, 0.0
      %850 = vadd.xlane.f32.xlu0 %v849
      %v851 = vpop.xlane.xlu0 %850
      %v852 = vrcp.pop %v851
      %v853 = vmul.f32 %v848, %v852
      %855 = vset.pattern.permute.xlu0 0
      %856 = vperm.xlu0 %855, %v853
      %v857 = vpop.permute.xlu0 %856
      %v859 = vmul.f32 %v857, %v468
      %860 = vset.pattern.permute.xlu0 1
      %861 = vperm.xlu0 %860, %v853
      %v862 = vpop.permute.xlu0 %861
      %v864 = vmul.f32 %v862, %v468
      %866 = vrot.lane.b32.xlu0 %v864, 116
      %v867 = vpop.permute.xlu0 %866
      %v869 = vadd.f32 %v859, %v867
      %870 = vset.pattern.permute.xlu0 2
      %871 = vperm.xlu0 %870, %v853
      %v872 = vpop.permute.xlu0 %871
      %v874 = vmul.f32 %v872, %v468
      %v875 = vmul.f32 %v872, %v470
      %878 = vrot.lane.b32.xlu0 %v874, 104
      %v879 = vpop.permute.xlu0 %878
      %880 = vrot.lane.b32.xlu0 %v875, 104
      %v881 = vpop.permute.xlu0 %880
      %v882 = vsel %vm809, %v879, %v881
      %v884 = vadd.f32 %v869, %v882
      %885 = vset.pattern.permute.xlu0 3
      %886 = vperm.xlu0 %885, %v853
      %v887 = vpop.permute.xlu0 %886
      %v889 = vmul.f32 %v887, %v470
      %891 = vrot.lane.b32.xlu0 %v889, 92
      %v892 = vpop.permute.xlu0 %891
      %v894 = vadd.f32 %v884, %v892
      %v895 = vmul.f32 %v639, %v534
      %v896 = vsel %vm746, %v895, 0.0
      %897 = vadd.xlane.f32.xlu0 %v896
      %v898 = vpop.xlane.xlu0 %897
      %v899 = vmul.f32 %v639, %v604
      %v900 = vsel %vm746, %v899, 0.0
      %901 = vadd.xlane.f32.xlu0 %v900
      %v902 = vpop.xlane.xlu0 %901
      %v903 = vmul.f32 %v639, %v674
      %v904 = vsel %vm746, %v903, 0.0
      %905 = vadd.xlane.f32.xlu0 %v904
      %v906 = vpop.xlane.xlu0 %905
      %v907 = vmul.f32 %v639, %v744
      %v908 = vsel %vm746, %v907, 0.0
      %909 = vadd.xlane.f32.xlu0 %v908
      %v910 = vpop.xlane.xlu0 %909
      %v911 = vsel %vm762, %v898, %v902
      %v912 = vsel %vm764, %v911, %v906
      %v913 = vsel %vm766, %v912, %v910
      %v914 = vmul.f32 %v913, 0.28867513
      %v915 = vsel %vm769, %v914, -inf
      %916 = vmax.xlane.f32.xlu0 %v915
      %v917 = vpop.xlane.xlu0 %916
      %v918 = vsub.f32 %v914, %v917
      %v919 = vmul.f32 %v918, 1.442695
      %v920 = vpow.pop %v919
      %v921 = vsel %vm769, %v920, 0.0
      %922 = vadd.xlane.f32.xlu0 %v921
      %v923 = vpop.xlane.xlu0 %922
      %v924 = vrcp.pop %v923
      %v925 = vmul.f32 %v920, %v924
      %927 = vset.pattern.permute.xlu0 0
      %928 = vperm.xlu0 %927, %v925
      %v929 = vpop.permute.xlu0 %928
      %v931 = vmul.f32 %v929, %v468
      %932 = vset.pattern.permute.xlu0 1
      %933 = vperm.xlu0 %932, %v925
      %v934 = vpop.permute.xlu0 %933
      %v936 = vmul.f32 %v934, %v468
      %938 = vrot.lane.b32.xlu0 %v936, 116
      %v939 = vpop.permute.xlu0 %938
      %v941 = vadd.f32 %v931, %v939
      %942 = vset.pattern.permute.xlu0 2
      %943 = vperm.xlu0 %942, %v925
      %v944 = vpop.permute.xlu0 %943
      %v946 = vmul.f32 %v944, %v468
      %v947 = vmul.f32 %v944, %v470
      %950 = vrot.lane.b32.xlu0 %v946, 104
      %v951 = vpop.permute.xlu0 %950
      %952 = vrot.lane.b32.xlu0 %v947, 104
      %v953 = vpop.permute.xlu0 %952
      %v954 = vsel %vm809, %v951, %v953
      %v956 = vadd.f32 %v941, %v954
      %957 = vset.pattern.permute.xlu0 3
      %958 = vperm.xlu0 %957, %v925
      %v959 = vpop.permute.xlu0 %958
      %v961 = vmul.f32 %v959, %v470
      %963 = vrot.lane.b32.xlu0 %v961, 92
      %v964 = vpop.permute.xlu0 %963
      %v966 = vadd.f32 %v956, %v964
      %v967 = vmul.f32 %v709, %v534
      %v968 = vsel %vm746, %v967, 0.0
      %969 = vadd.xlane.f32.xlu0 %v968
      %v970 = vpop.xlane.xlu0 %969
      %v971 = vmul.f32 %v709, %v604
      %v972 = vsel %vm746, %v971, 0.0
      %973 = vadd.xlane.f32.xlu0 %v972
      %v974 = vpop.xlane.xlu0 %973
      %v975 = vmul.f32 %v709, %v674
      %v976 = vsel %vm746, %v975, 0.0
      %977 = vadd.xlane.f32.xlu0 %v976
      %v978 = vpop.xlane.xlu0 %977
      %v979 = vmul.f32 %v709, %v744
      %v980 = vsel %vm746, %v979, 0.0
      %981 = vadd.xlane.f32.xlu0 %v980
      %v982 = vpop.xlane.xlu0 %981
      %v983 = vsel %vm762, %v970, %v974
      %v984 = vsel %vm764, %v983, %v978
      %v985 = vsel %vm766, %v984, %v982
      %v986 = vmul.f32 %v985, 0.28867513
      %v987 = vsel %vm769, %v986, -inf
      %988 = vmax.xlane.f32.xlu0 %v987
      %v989 = vpop.xlane.xlu0 %988
      %v990 = vsub.f32 %v986, %v989
      %v991 = vmul.f32 %v990, 1.442695
      %v992 = vpow.pop %v991
      %v993 = vsel %vm769, %v992, 0.0
      %994 = vadd.xlane.f32.xlu0 %v993
      %v995 = vpop.xlane.xlu0 %994
      %v996 = vrcp.pop %v995
      %v997 = vmul.f32 %v992, %v996
      %999 = vset.pattern.permute.xlu0 0
      %1000 = vperm.xlu0 %999, %v997
      %v1001 = vpop.permute.xlu0 %1000
      %v1003 = vmul.f32 %v1001, %v468
      %1004 = vset.pattern.permute.xlu0 1
      %1005 = vperm.xlu0 %1004, %v997
      %v1006 = vpop.permute.xlu0 %1005
      %v1008 = vmul.f32 %v1006, %v468
      %1010 = vrot.lane.b32.xlu0 %v1008, 116
      %v1011 = vpop.permute.xlu0 %1010
      %v1013 = vadd.f32 %v1003, %v1011
      %1014 = vset.pattern.permute.xlu0 2
      %1015 = vperm.xlu0 %1014, %v997
      %v1016 = vpop.permute.xlu0 %1015
      %v1018 = vmul.f32 %v1016, %v468
      %v1019 = vmul.f32 %v1016, %v470
      %1022 = vrot.lane.b32.xlu0 %v1018, 104
      %v1023 = vpop.permute.xlu0 %1022
      %1024 = vrot.lane.b32.xlu0 %v1019, 104
      %v1025 = vpop.permute.xlu0 %1024
      %v1026 = vsel %vm809, %v1023, %v1025
      %v1028 = vadd.f32 %v1013, %v1026
      %1029 = vset.pattern.permute.xlu0 3
      %1030 = vperm.xlu0 %1029, %v997
      %v1031 = vpop.permute.xlu0 %1030
      %v1033 = vmul.f32 %v1031, %v470
      %1035 = vrot.lane.b32.xlu0 %v1033, 92
      %v1036 = vpop.permute.xlu0 %1035
      %v1038 = vadd.f32 %v1028, %v1036
      %1040 = vrot.lane.b32.xlu0 %v822, 32
      %v1041 = vpop.permute.xlu0 %1040
      %v1043 = vrot.slane %v822, 1
      %1044 = vrot.lane.b32.xlu0 %v1043, 44
      %v1045 = vpop.permute.xlu0 %1044
      %v1047 = vrot.slane %v822, 2
      %1048 = vrot.lane.b32.xlu0 %v1047, 56
      %v1049 = vpop.permute.xlu0 %1048
      %v1051 = vrot.slane %v822, 3
      %1052 = vrot.lane.b32.xlu0 %v1051, 68
      %v1053 = vpop.permute.xlu0 %1052
      %v1055 = vsel %vm746, %v1041, %v1045
      %vm1056 = vcmask 195584
      %v1057 = vsel %vm1056, %v1055, %v1049
      %vm1058 = vcmask 293888
      %v1059 = vsel %vm1058, %v1057, %v1053
      %1061 = vrot.lane.b32.xlu0 %v894, 32
      %v1062 = vpop.permute.xlu0 %1061
      %v1064 = vrot.slane %v894, 1
      %1065 = vrot.lane.b32.xlu0 %v1064, 44
      %v1066 = vpop.permute.xlu0 %1065
      %v1068 = vrot.slane %v894, 2
      %1069 = vrot.lane.b32.xlu0 %v1068, 56
      %v1070 = vpop.permute.xlu0 %1069
      %v1072 = vrot.slane %v894, 3
      %1073 = vrot.lane.b32.xlu0 %v1072, 68
      %v1074 = vpop.permute.xlu0 %1073
      %v1076 = vsel %vm746, %v1062, %v1066
      %v1077 = vsel %vm1056, %v1076, %v1070
      %v1078 = vsel %vm1058, %v1077, %v1074
      %1080 = vrot.lane.b32.xlu0 %v966, 32
      %v1081 = vpop.permute.xlu0 %1080
      %v1083 = vrot.slane %v966, 1
      %1084 = vrot.lane.b32.xlu0 %v1083, 44
      %v1085 = vpop.permute.xlu0 %1084
      %v1087 = vrot.slane %v966, 2
      %1088 = vrot.lane.b32.xlu0 %v1087, 56
      %v1089 = vpop.permute.xlu0 %1088
      %v1091 = vrot.slane %v966, 3
      %1092 = vrot.lane.b32.xlu0 %v1091, 68
      %v1093 = vpop.permute.xlu0 %1092
      %v1095 = vsel %vm746, %v1081, %v1085
      %v1096 = vsel %vm1056, %v1095, %v1089
      %v1097 = vsel %vm1058, %v1096, %v1093
      %1099 = vrot.lane.b32.xlu0 %v1038, 32
      %v1100 = vpop.permute.xlu0 %1099
      %v1102 = vrot.slane %v1038, 1
      %1103 = vrot.lane.b32.xlu0 %v1102, 44
      %v1104 = vpop.permute.xlu0 %1103
      %v1106 = vrot.slane %v1038, 2
      %1107 = vrot.lane.b32.xlu0 %v1106, 56
      %v1108 = vpop.permute.xlu0 %1107
      %v1110 = vrot.slane %v1038, 3
      %1111 = vrot.lane.b32.xlu0 %v1110, 68
      %v1112 = vpop.permute.xlu0 %1111
      %v1114 = vsel %vm746, %v1100, %v1104
      %v1115 = vsel %vm1056, %v1114, %v1108
      %v1116 = vsel %vm1058, %v1115, %v1112
      %v1118 = vrot.slane %v1059, 3
      %v1121 = vrot.slane %v1078, 6
      %v1123 = vrot.slane %v1078, 1
      %v1126 = vrot.slane %v1097, 4
      %v1128 = vrot.slane %v1097, 7
      %v1131 = vrot.slane %v1116, 2
      %v1133 = vrot.slane %v1116, 5
      %vm1135 = vcmask 1040384
      %v1136 = vsel %vm1135, %v1059, %v1118
      %vm1137 = vcmask 1041408
      %v1138 = vsel %vm1137, %v1136, %v1121
      %vm1139 = vcmask 1042432
      %v1140 = vsel %vm1139, %v1138, %v1123
      %vm1141 = vcmask 1043456
      %v1142 = vsel %vm1141, %v1140, %v1126
      %vm1143 = vcmask 1044480
      %v1144 = vsel %vm1143, %v1142, %v1128
      %vm1145 = vcmask 1045504
      %v1146 = vsel %vm1145, %v1144, %v1131
      %vm1147 = vcmask 1046528
      %v1148 = vsel %vm1147, %v1146, %v1133
      %v1149 = vpack.c.bf16 %v1148, %v1148
      %v1150 = vld [vmem:[%s5] sm:$0xf]
      %v1151 = vld [vmem:[%s5 + $0x4] sm:$0xf]
      %v1152 = vld [vmem:[%s5 + $0x8] sm:$0xf]
      %v1153 = vld [vmem:[%s5 + $0xc] sm:$0xf]
      %v1154 = vld [vmem:[%s5 + $0x10] sm:$0xf]
      %v1155 = vld [vmem:[%s5 + $0x14] sm:$0xf]
      %v1162 = vunpack.c.l.b16 %v1150
      %v1163 = vunpack.c.l.b16 %v1151
      %v1164 = vunpack.c.l.b16 %v1152
      %v1165 = vunpack.c.l.b16 %v1153
      %v1166 = vunpack.c.l.b16 %v1154
      %v1167 = vunpack.c.l.b16 %v1155
      %v1168 = vpack.c.b16 %v1163, %v1162
      %v1169 = vpack.c.b16 %v1165, %v1164
      %v1170 = vpack.c.b16 %v1167, %v1166
      %v1175 = vsel %vm376, %v1149, 0
      %1177 = vmatprep.subr.bf16.mxu0 0
      %1178 = vmatpush1.bf16.msra.mxu0 %v1168
      %1179 = vmatprep.subr.bf16.mxu0 0
      %1180 = vmatpush1.bf16.msra.mxu0 %v1169
      %1181 = vmatprep.subr.bf16.mxu0 0
      %1182 = vmatpush1.bf16.msra.mxu0 %v1170
      %1183 = vmatprep.subr.bf16.mxu0 0
      %1184 = vmatpush1.bf16.msra.mxu0 0
      %1185 = vmatprep.subr.bf16.mxu0 0
      %1186 = vmatpush1.bf16.msra.mxu0 0
      %1187 = vmatprep.subr.bf16.mxu0 0
      %1188 = vmatpush1.bf16.msra.mxu0 0
      %1189 = vmatprep.subr.bf16.mxu0 0
      %1190 = vmatpush1.bf16.msra.mxu0 0
      %1191 = vmatprep.subr.bf16.mxu0 0
      %1192 = vmatpush1.bf16.msra.mxu0 0
      %1193 = vmatprep.subr.bf16.mxu0 0
      %1194 = vmatpush1.bf16.msra.mxu0 0
      %1195 = vmatprep.subr.bf16.mxu0 0
      %1196 = vmatpush1.bf16.msra.mxu0 0
      %1197 = vmatprep.subr.bf16.mxu0 0
      %1198 = vmatpush1.bf16.msra.mxu0 0
      %1199 = vmatprep.subr.bf16.mxu0 0
      %1200 = vmatpush1.bf16.msra.mxu0 0
      %1201 = vmatprep.subr.bf16.mxu0 0
      %1202 = vmatpush1.bf16.msra.mxu0 0
      %1203 = vmatprep.subr.bf16.mxu0 0
      %1204 = vmatpush1.bf16.msra.mxu0 0
      %1205 = vmatprep.subr.bf16.mxu0 0
      %1206 = vmatpush1.bf16.msra.mxu0 0
      %1207 = vmatprep.subr.bf16.mxu0 0
      %1208 = vmatpush1.bf16.msra.mxu0 0
      %1209 = vmatprep.mubr.bf16.mxu0 0
      %1210 = vmatmul.mubr.bf16.gmra.mrb[0].mxu0 %v1175
      %v1211 = vpop.f32.mrb[0].mxu0
      %v1212 = vadd.f32 0.0, %v1211
      %v1213 = vpop.f32.mrb[0].mxu0
      %v1214 = vpop.f32.mrb[0].mxu0
      %v1215 = vpop.f32.mrb[0].mxu0
      %1216 = vdwg.mxu0
      %v1217 = vadd.f32 %v374, %v1212
      %v1218 = vmul.f32 %v1217, %v1217
      %v1219 = vsel %vm376, %v1218, 0.0
      %1220 = vadd.xlane.f32.xlu0 %v1219
      %v1221 = vpop.xlane.xlu0 %1220
      %v1222 = vmul.f32 %v1221, %v380
      %v1223 = vadd.f32 %v1222, 1e-05
      %v1224 = vrsqrt.pop %v1223
      %v1225 = vmul.f32 %v1217, %v1224
      %v1226 = vld [vmem:[%s6] sm:$0x1]
      %v1228 = vlaneseq
      %v1229 = vshrl.u32 %v1228, 7
      %v1230 = vsub.s32 0, %v1229
      %v1231 = vrot.slane %v1226, %v1230
      %v1233 = vmul.f32 %v1225, %v1231
      %v1234 = vpack.c.bf16 %v1233, %v1233
      %v1235 = vld [vmem:[%s7] sm:$0xf]
      %v1236 = vld [vmem:[%s7 + $0x4] sm:$0xf]
      %v1237 = vld [vmem:[%s7 + $0x8] sm:$0xf]
      %v1238 = vld [vmem:[%s7 + $0xc] sm:$0xf]
      %v1239 = vld [vmem:[%s7 + $0x10] sm:$0xf]
      %v1240 = vld [vmem:[%s7 + $0x14] sm:$0xf]
      %v1247 = vunpack.c.l.b16 %v1235
      %v1248 = vunpack.c.l.b16 %v1236
      %v1249 = vunpack.c.l.b16 %v1237
      %v1250 = vunpack.c.l.b16 %v1238
      %v1251 = vunpack.c.l.b16 %v1239
      %v1252 = vunpack.c.l.b16 %v1240
      %v1253 = vpack.c.b16 %v1248, %v1247
      %v1254 = vpack.c.b16 %v1250, %v1249
      %v1255 = vpack.c.b16 %v1252, %v1251
      %v1260 = vsel %vm376, %v1234, 0
      %1262 = vmatprep.subr.bf16.mxu0 0
      %1263 = vmatpush1.bf16.msra.mxu0 %v1253
      %1264 = vmatprep.subr.bf16.mxu0 0
      %1265 = vmatpush1.bf16.msra.mxu0 %v1254
      %1266 = vmatprep.subr.bf16.mxu0 0
      %1267 = vmatpush1.bf16.msra.mxu0 %v1255
      %1268 = vmatprep.subr.bf16.mxu0 0
      %1269 = vmatpush1.bf16.msra.mxu0 0
      %1270 = vmatprep.subr.bf16.mxu0 0
      %1271 = vmatpush1.bf16.msra.mxu0 0
      %1272 = vmatprep.subr.bf16.mxu0 0
      %1273 = vmatpush1.bf16.msra.mxu0 0
      %1274 = vmatprep.subr.bf16.mxu0 0
      %1275 = vmatpush1.bf16.msra.mxu0 0
      %1276 = vmatprep.subr.bf16.mxu0 0
      %1277 = vmatpush1.bf16.msra.mxu0 0
      %1278 = vmatprep.subr.bf16.mxu0 0
      %1279 = vmatpush1.bf16.msra.mxu0 0
      %1280 = vmatprep.subr.bf16.mxu0 0
      %1281 = vmatpush1.bf16.msra.mxu0 0
      %1282 = vmatprep.subr.bf16.mxu0 0
      %1283 = vmatpush1.bf16.msra.mxu0 0
      %1284 = vmatprep.subr.bf16.mxu0 0
      %1285 = vmatpush1.bf16.msra.mxu0 0
      %1286 = vmatprep.subr.bf16.mxu0 0
      %1287 = vmatpush1.bf16.msra.mxu0 0
      %1288 = vmatprep.subr.bf16.mxu0 0
      %1289 = vmatpush1.bf16.msra.mxu0 0
      %1290 = vmatprep.subr.bf16.mxu0 0
      %1291 = vmatpush1.bf16.msra.mxu0 0
      %1292 = vmatprep.subr.bf16.mxu0 0
      %1293 = vmatpush1.bf16.msra.mxu0 0
      %1294 = vmatprep.mubr.bf16.mxu0 0
      %1295 = vmatmul.mubr.bf16.gmra.mrb[0].mxu0 %v1260
      %v1296 = vpop.f32.mrb[0].mxu0
      %v1297 = vadd.f32 0.0, %v1296
      %v1298 = vpop.f32.mrb[0].mxu0
      %v1299 = vpop.f32.mrb[0].mxu0
      %v1300 = vpop.f32.mrb[0].mxu0
      %1301 = vdwg.mxu0
      %1302 = vst.msk [vmem:[%s368] sm:$0xff] %vm376, %v1233
      %1303 = vst.msk [vmem:[%s372] sm:$0xff] %vm376, %v1297
      %p1304 = scmp.lt.s32.totalorder %s21, 1
      %s1305 = scalar_select %p1304, %s21, 1
      %s1306 = smul.addr %s1305, 8
      %s1307 = scalar_lea.vmem %s8, %s1306
      %p1308 = scmp.lt.s32.totalorder %s21, 1
      %s1309 = scalar_select %p1308, %s21, 1
      %s1310 = smul.addr %s1309, 8
      %s1311 = scalar_lea.vmem %s9, %s1310
      // Predicated region
      $region53: #{run.7} parent=51 // pred_check
        %p1312 = pneg %p222
      $region54: #{run.7} parent=51 // pred_check_branch
        %1314 = sbr.rel (%p1312) target = $region56
      $region55: #{run.7} parent=51 // pred_region
        _
      $region56: #{run.7} parent=51 // pred_fallthru
        _
      // Predicated region
      $region57: #{run.7} parent=51 // pred_check
        %p1315 = pneg %p248
      $region58: #{run.7} parent=51 // pred_check_branch
        %1317 = sbr.rel (%p1315) target = $region60
      $region59: #{run.7} parent=51 // pred_region
        _
      $region60: #{run.7} parent=51 // pred_fallthru
        _
    $region52: #{run.7} parent=5 // pred_fallthru
      _
    %p1318 = scmp.le.s32.totalorder 2, %s16
    // Predicated region
    $region61: #{run.7} parent=5 // pred_check
      %p1319 = pneg %p1318
    $region62: #{run.7} parent=5 // pred_check_branch
      %1321 = sbr.rel (%p1319) target = $region64
    $region63: #{run.7} parent=5 // pred_region
      %s1322 = ssub.s32 %s16, 2
      // Predicated region
      $region65: #{run.7} parent=63 // pred_check
        %p1323 = pneg %p228
      $region66: #{run.7} parent=63 // pred_check_branch
        %1325 = sbr.rel (%p1323) target = $region68
      $region67: #{run.7} parent=63 // pred_region
        %p1326 = scmp.lt.s32.totalorder %s22, 1
        %s1327 = scalar_select %p1326, %s22, 1
        %s1328 = smul.addr %s1327, 8
        %s1329 = scalar_lea.vmem %s8, %s1328
      $region68: #{run.7} parent=63 // pred_fallthru
        _
      // Predicated region
      $region69: #{run.7} parent=63 // pred_check
        %p1330 = pneg %p254
      $region70: #{run.7} parent=63 // pred_check_branch
        %1332 = sbr.rel (%p1330) target = $region72
      $region71: #{run.7} parent=63 // pred_region
        %p1333 = scmp.lt.s32.totalorder %s22, 1
        %s1334 = scalar_select %p1333, %s22, 1
        %s1335 = smul.addr %s1334, 8
        %s1336 = scalar_lea.vmem %s9, %s1335
      $region72: #{run.7} parent=63 // pred_fallthru
        _
    $region64: #{run.7} parent=5 // pred_fallthru
      _
  $region6: #{run.7} parent=0 // loop_footer
    %s20 = sadd.s32 1, %s16
  $region7: #{run.7} parent=0 // loop_footer_branch
    %15 = sbr.rel target = $region3
  $region8: #{run.7} parent=0 // loop_exit
    _

// kernel: run.9
$region0: #{run.9}
  #allocation0 [shape = 'u32[]', space=smem, size = 0x4, offset = 0x4, fixed_abs, tag = 'smem constant byte address 0x4 - core index']
  #allocation1 [shape = 'u32[144,128]{1,0:T(1,128)}', space=vmem, size = 0x12000, scoped, tag = 'internal scratch']
  %s0 = inlined_call_operand.vmem [shape: f32[2,8,48], index: 0, kind: input, shape index: {}]
  %s1 = inlined_call_operand.vmem [shape: f32[2,8,48], index: 1, kind: input, shape index: {}]
  %s2 = inlined_call_operand.vmem [shape: bf16[48,48], index: 2, kind: input, shape index: {}]
  %s3 = inlined_call_operand.vmem [shape: f32[1,48], index: 3, kind: input, shape index: {}]
  %s4 = inlined_call_operand.vmem [shape: bf16[48,256], index: 4, kind: input, shape index: {}]
  %s5 = inlined_call_operand.vmem [shape: bf16[128,48], index: 5, kind: input, shape index: {}]
  %s6 = inlined_call_operand.vmem [shape: f32[2,8,48], index: 6, kind: output, shape index: {}]
  %s7 = sld [smem:[#allocation0]]
  $region57: #{run.9} parent=0
    _
  %s9 = ssub.s32 1, %s7
  %s10 = scalar_select 0, %s9, %s7
  loop: start=0, step=1, limit=4
  $region2: #{run.9} parent=0 // loop_pre_header
    _
  $region3: #{run.9} parent=0 // loop_header
    %s12 = sphi 0, %s16
    %p13 = scmp.ge.s32.totalorder %s12, 4
    %s22 = sphi 0, %s24
    %s25 = sphi 0, %s22
    %s26 = sphi 0, %s25
    %s42 = sphi 0, %s26
    %s48 = sphi 0, %s50
    %s51 = sphi 0, %s48
    %s52 = sphi 0, %s51
    %s68 = sphi 0, %s52
    %s72 = sphi 0, %s72
    %s74 = sphi 0, %s72
    %s75 = sphi 0, %s74
    %s89 = sphi 0, %s75
    %s93 = sphi 0, %s93
    %s95 = sphi 0, %s93
    %s96 = sphi 0, %s95
    %s110 = sphi 0, %s96
    %s114 = sphi 0, %s114
    %s116 = sphi 0, %s114
    %s117 = sphi 0, %s116
    %s131 = sphi 0, %s117
    %s135 = sphi 0, %s135
    %s137 = sphi 0, %s135
    %s138 = sphi 0, %s137
    %s152 = sphi 0, %s138
    %s158 = sphi 0, %s160
    %s161 = sphi 0, %s158
    %s162 = sphi 0, %s161
    %s178 = sphi 0, %s162
  $region4: #{run.9} parent=0 // loop_header_branch
    %15 = sbr.rel (%p13) target = $region8
  $region5: #{run.9} parent=0 // loop_body
    %s17 = ssub.s32 %s12, 1
    %s18 = ssub.s32 %s12, 2
    %s19 = sadd.s32 %s12, 1
    %s20 = ssub.s32 %s12, %s19
    %p21 = scmp.eq.s32.totalorder %s20, 0
    %s23 = sadd.s32 %s22, 1
    %s24 = scalar_select %p21, %s22, %s23
    %p27 = pneg %p21
    %p28 = scmp.eq.s32.totalorder %s12, 1
    %p29 = por %p27, %p28
    %p30 = scmp.ne.s32.totalorder %s22, %s25
    %p31 = scmp.eq.s32.totalorder %s12, 0
    %p32 = por %p30, %p31
    %p33 = scmp.ne.s32.totalorder %s22, %s25
    %p34 = scmp.eq.s32.totalorder %s17, 1
    %p35 = por %p33, %p34
    %p36 = scmp.ne.s32.totalorder %s25, %s26
    %p37 = scmp.eq.s32.totalorder %s17, 0
    %p38 = por %p36, %p37
    %p39 = scmp.ne.s32.totalorder %s25, %s26
    %p40 = scmp.eq.s32.totalorder %s18, 1
    %p41 = por %p39, %p40
    %p43 = scmp.ne.s32.totalorder %s26, %s42
    %p44 = scmp.eq.s32.totalorder %s18, 0
    %p45 = por %p43, %p44
    %s46 = ssub.s32 %s12, %s19
    %p47 = scmp.eq.s32.totalorder %s46, 0
    %s49 = sadd.s32 %s48, 1
    %s50 = scalar_select %p47, %s48, %s49
    %p53 = pneg %p47
    %p54 = scmp.eq.s32.totalorder %s12, 1
    %p55 = por %p53, %p54
    %p56 = scmp.ne.s32.totalorder %s48, %s51
    %p57 = scmp.eq.s32.totalorder %s12, 0
    %p58 = por %p56, %p57
    %p59 = scmp.ne.s32.totalorder %s48, %s51
    %p60 = scmp.eq.s32.totalorder %s17, 1
    %p61 = por %p59, %p60
    %p62 = scmp.ne.s32.totalorder %s51, %s52
    %p63 = scmp.eq.s32.totalorder %s17, 0
    %p64 = por %p62, %p63
    %p65 = scmp.ne.s32.totalorder %s51, %s52
    %p66 = scmp.eq.s32.totalorder %s18, 1
    %p67 = por %p65, %p66
    %p69 = scmp.ne.s32.totalorder %s52, %s68
    %p70 = scmp.eq.s32.totalorder %s18, 0
    %p71 = por %p69, %p70
    %s73 = sadd.s32 %s72, 1
    %p76 = scmp.eq.s32.totalorder %s12, 1
    %p77 = scmp.ne.s32.totalorder %s72, %s74
    %p78 = scmp.eq.s32.totalorder %s12, 0
    %p79 = por %p77, %p78
    %p80 = scmp.ne.s32.totalorder %s72, %s74
    %p81 = scmp.eq.s32.totalorder %s17, 1
    %p82 = por %p80, %p81
    %p83 = scmp.ne.s32.totalorder %s74, %s75
    %p84 = scmp.eq.s32.totalorder %s17, 0
    %p85 = por %p83, %p84
    %p86 = scmp.ne.s32.totalorder %s74, %s75
    %p87 = scmp.eq.s32.totalorder %s18, 1
    %p88 = por %p86, %p87
    %p90 = scmp.ne.s32.totalorder %s75, %s89
    %p91 = scmp.eq.s32.totalorder %s18, 0
    %p92 = por %p90, %p91
    %s94 = sadd.s32 %s93, 1
    %p97 = scmp.eq.s32.totalorder %s12, 1
    %p98 = scmp.ne.s32.totalorder %s93, %s95
    %p99 = scmp.eq.s32.totalorder %s12, 0
    %p100 = por %p98, %p99
    %p101 = scmp.ne.s32.totalorder %s93, %s95
    %p102 = scmp.eq.s32.totalorder %s17, 1
    %p103 = por %p101, %p102
    %p104 = scmp.ne.s32.totalorder %s95, %s96
    %p105 = scmp.eq.s32.totalorder %s17, 0
    %p106 = por %p104, %p105
    %p107 = scmp.ne.s32.totalorder %s95, %s96
    %p108 = scmp.eq.s32.totalorder %s18, 1
    %p109 = por %p107, %p108
    %p111 = scmp.ne.s32.totalorder %s96, %s110
    %p112 = scmp.eq.s32.totalorder %s18, 0
    %p113 = por %p111, %p112
    %s115 = sadd.s32 %s114, 1
    %p118 = scmp.eq.s32.totalorder %s12, 1
    %p119 = scmp.ne.s32.totalorder %s114, %s116
    %p120 = scmp.eq.s32.totalorder %s12, 0
    %p121 = por %p119, %p120
    %p122 = scmp.ne.s32.totalorder %s114, %s116
    %p123 = scmp.eq.s32.totalorder %s17, 1
    %p124 = por %p122, %p123
    %p125 = scmp.ne.s32.totalorder %s116, %s117
    %p126 = scmp.eq.s32.totalorder %s17, 0
    %p127 = por %p125, %p126
    %p128 = scmp.ne.s32.totalorder %s116, %s117
    %p129 = scmp.eq.s32.totalorder %s18, 1
    %p130 = por %p128, %p129
    %p132 = scmp.ne.s32.totalorder %s117, %s131
    %p133 = scmp.eq.s32.totalorder %s18, 0
    %p134 = por %p132, %p133
    %s136 = sadd.s32 %s135, 1
    %p139 = scmp.eq.s32.totalorder %s12, 1
    %p140 = scmp.ne.s32.totalorder %s135, %s137
    %p141 = scmp.eq.s32.totalorder %s12, 0
    %p142 = por %p140, %p141
    %p143 = scmp.ne.s32.totalorder %s135, %s137
    %p144 = scmp.eq.s32.totalorder %s17, 1
    %p145 = por %p143, %p144
    %p146 = scmp.ne.s32.totalorder %s137, %s138
    %p147 = scmp.eq.s32.totalorder %s17, 0
    %p148 = por %p146, %p147
    %p149 = scmp.ne.s32.totalorder %s137, %s138
    %p150 = scmp.eq.s32.totalorder %s18, 1
    %p151 = por %p149, %p150
    %p153 = scmp.ne.s32.totalorder %s138, %s152
    %p154 = scmp.eq.s32.totalorder %s18, 0
    %p155 = por %p153, %p154
    %s156 = ssub.s32 %s12, %s19
    %p157 = scmp.eq.s32.totalorder %s156, 0
    %s159 = sadd.s32 %s158, 1
    %s160 = scalar_select %p157, %s158, %s159
    %p163 = pneg %p157
    %p164 = scmp.eq.s32.totalorder %s12, 1
    %p165 = por %p163, %p164
    %p166 = scmp.ne.s32.totalorder %s158, %s161
    %p167 = scmp.eq.s32.totalorder %s12, 0
    %p168 = por %p166, %p167
    %p169 = scmp.ne.s32.totalorder %s158, %s161
    %p170 = scmp.eq.s32.totalorder %s17, 1
    %p171 = por %p169, %p170
    %p172 = scmp.ne.s32.totalorder %s161, %s162
    %p173 = scmp.eq.s32.totalorder %s17, 0
    %p174 = por %p172, %p173
    %p175 = scmp.ne.s32.totalorder %s161, %s162
    %p176 = scmp.eq.s32.totalorder %s18, 1
    %p177 = por %p175, %p176
    %p179 = scmp.ne.s32.totalorder %s162, %s178
    %p180 = scmp.eq.s32.totalorder %s18, 0
    %p181 = por %p179, %p180
    %p182 = scmp.le.s32.totalorder 1, %s12
    %p183 = scmp.lt.s32.totalorder %s12, 3
    %p184 = pnand %p182, %p183
    %p185 = pneg %p184
    // Predicated region
    $region9: #{run.9} parent=5 // pred_check
      _
    $region10: #{run.9} parent=5 // pred_check_branch
      %187 = sbr.rel (%p184) target = $region12
    $region11: #{run.9} parent=5 // pred_region
      %s188 = ssub.s32 %s12, 1
      // Predicated region
      $region13: #{run.9} parent=11 // pred_check
        %p189 = pneg %p85
      $region14: #{run.9} parent=11 // pred_check_branch
        %191 = sbr.rel (%p189) target = $region16
      $region15: #{run.9} parent=11 // pred_region
        _
      $region16: #{run.9} parent=11 // pred_fallthru
        _
      // Predicated region
      $region17: #{run.9} parent=11 // pred_check
        %p192 = pneg %p106
      $region18: #{run.9} parent=11 // pred_check_branch
        %194 = sbr.rel (%p192) target = $region20
      $region19: #{run.9} parent=11 // pred_region
        _
      $region20: #{run.9} parent=11 // pred_fallthru
        _
      // Predicated region
      $region21: #{run.9} parent=11 // pred_check
        %p195 = pneg %p127
      $region22: #{run.9} parent=11 // pred_check_branch
        %197 = sbr.rel (%p195) target = $region24
      $region23: #{run.9} parent=11 // pred_region
        _
      $region24: #{run.9} parent=11 // pred_fallthru
        _
      // Predicated region
      $region25: #{run.9} parent=11 // pred_check
        %p198 = pneg %p148
      $region26: #{run.9} parent=11 // pred_check_branch
        %200 = sbr.rel (%p198) target = $region28
      $region27: #{run.9} parent=11 // pred_region
        _
      $region28: #{run.9} parent=11 // pred_fallthru
        _
    $region12: #{run.9} parent=5 // pred_fallthru
      _
    %p201 = scmp.lt.s32.totalorder %s12, 2
    // Predicated region
    $region29: #{run.9} parent=5 // pred_check
      %p202 = pneg %p201
    $region30: #{run.9} parent=5 // pred_check_branch
      %204 = sbr.rel (%p202) target = $region32
    $region31: #{run.9} parent=5 // pred_region
      // Predicated region
      $region33: #{run.9} parent=31 // pred_check
        %p205 = pneg %p32
      $region34: #{run.9} parent=31 // pred_check_branch
        %207 = sbr.rel (%p205) target = $region36
      $region35: #{run.9} parent=31 // pred_region
        %p208 = scmp.lt.s32.totalorder %s12, 1
        %s209 = scalar_select %p208, %s12, 1
        %s210 = smul.addr %s209, 8
        %s211 = scalar_lea.vmem %s0, %s210
      $region36: #{run.9} parent=31 // pred_fallthru
        _
      // Predicated region
      $region37: #{run.9} parent=31 // pred_check
        %p212 = pneg %p58
      $region38: #{run.9} parent=31 // pred_check_branch
        %214 = sbr.rel (%p212) target = $region40
      $region39: #{run.9} parent=31 // pred_region
        %p215 = scmp.lt.s32.totalorder %s12, 1
        %s216 = scalar_select %p215, %s12, 1
        %s217 = smul.addr %s216, 8
        %s218 = scalar_lea.vmem %s1, %s217
      $region40: #{run.9} parent=31 // pred_fallthru
        _
    $region32: #{run.9} parent=5 // pred_fallthru
      _
    %p219 = scmp.le.s32.totalorder 1, %s12
    %p220 = scmp.lt.s32.totalorder %s12, 3
    %p221 = pnand %p219, %p220
    %p222 = pneg %p221
    // Predicated region
    $region41: #{run.9} parent=5 // pred_check
      _
    $region42: #{run.9} parent=5 // pred_check_branch
      %224 = sbr.rel (%p221) target = $region44
    $region43: #{run.9} parent=5 // pred_region
      %s225 = ssub.s32 %s12, 1
      %p226 = scmp.lt.s32.totalorder %s17, 1
      %s227 = scalar_select %p226, %s17, 1
      %s228 = smul.addr %s227, 8
      %s229 = scalar_lea.vmem %s0, %s228
      %p230 = pneg %p38
      %p231 = pneg %p35
      %p232 = scmp.lt.s32.totalorder %s17, 1
      %s233 = scalar_select %p232, %s17, 1
      %s234 = smul.addr %s233, 8
      %s235 = scalar_lea.vmem %s1, %s234
      %p236 = pneg %p64
      %p237 = pneg %p61
      %p238 = pneg %p85
      %p239 = pneg %p82
      %p240 = pneg %p106
      %p241 = pneg %p103
      %p242 = pneg %p127
      %p243 = pneg %p124
      %p244 = pneg %p148
      %p245 = pneg %p145
      %p246 = pneg %p174
      %p247 = pneg %p171
      %p248 = scmp.lt.s32.totalorder %s17, 1
      %s249 = scalar_select %p248, %s17, 1
      %s250 = smul.addr %s249, 8
      %s251 = scalar_lea.vmem %s6, %s250
      %p252 = scmp.lt.s32.totalorder %s17, 1
      %s253 = scalar_select %p252, %s17, 1
      %s254 = smul.addr %s253, 8
      %s255 = scalar_lea.vmem %s0, %s254
      %p256 = scmp.lt.s32.totalorder %s17, 1
      %s257 = scalar_select %p256, %s17, 1
      %s258 = smul.addr %s257, 8
      %s259 = scalar_lea.vmem %s1, %s258
      %p260 = scmp.lt.s32.totalorder %s17, 1
      %s261 = scalar_select %p260, %s17, 1
      %s262 = smul.addr %s261, 8
      %s263 = scalar_lea.vmem %s6, %s262
      %v265 = vld [vmem:[%s255] sm:$0xff]
      %v266 = vpack.c.bf16 %v265, %v265
      %v267 = vld [vmem:[%s2] sm:$0xf]
      %v268 = vld [vmem:[%s2 + $0x4] sm:$0xf]
      %v269 = vld [vmem:[%s2 + $0x8] sm:$0xf]
      %v270 = vld [vmem:[%s2 + $0xc] sm:$0xf]
      %v271 = vld [vmem:[%s2 + $0x10] sm:$0xf]
      %v272 = vld [vmem:[%s2 + $0x14] sm:$0xf]
      %v279 = vunpack.c.l.b16 %v267
      %v280 = vunpack.c.l.b16 %v268
      %v281 = vunpack.c.l.b16 %v269
      %v282 = vunpack.c.l.b16 %v270
      %v283 = vunpack.c.l.b16 %v271
      %v284 = vunpack.c.l.b16 %v272
      %v285 = vpack.c.b16 %v280, %v279
      %v286 = vpack.c.b16 %v282, %v281
      %v287 = vpack.c.b16 %v284, %v283
      %vm291 = vcmask 392192
      %v293 = vsel %vm291, %v266, 0
      %295 = vmatprep.subr.bf16.mxu0 0
      %296 = vmatpush1.bf16.msra.mxu0 %v285
      %297 = vmatprep.subr.bf16.mxu0 0
      %298 = vmatpush1.bf16.msra.mxu0 %v286
      %299 = vmatprep.subr.bf16.mxu0 0
      %300 = vmatpush1.bf16.msra.mxu0 %v287
      %301 = vmatprep.subr.bf16.mxu0 0
      %302 = vmatpush1.bf16.msra.mxu0 0
      %303 = vmatprep.subr.bf16.mxu0 0
      %304 = vmatpush1.bf16.msra.mxu0 0
      %305 = vmatprep.subr.bf16.mxu0 0
      %306 = vmatpush1.bf16.msra.mxu0 0
      %307 = vmatprep.subr.bf16.mxu0 0
      %308 = vmatpush1.bf16.msra.mxu0 0
      %309 = vmatprep.subr.bf16.mxu0 0
      %310 = vmatpush1.bf16.msra.mxu0 0
      %311 = vmatprep.subr.bf16.mxu0 0
      %312 = vmatpush1.bf16.msra.mxu0 0
      %313 = vmatprep.subr.bf16.mxu0 0
      %314 = vmatpush1.bf16.msra.mxu0 0
      %315 = vmatprep.subr.bf16.mxu0 0
      %316 = vmatpush1.bf16.msra.mxu0 0
      %317 = vmatprep.subr.bf16.mxu0 0
      %318 = vmatpush1.bf16.msra.mxu0 0
      %319 = vmatprep.subr.bf16.mxu0 0
      %320 = vmatpush1.bf16.msra.mxu0 0
      %321 = vmatprep.subr.bf16.mxu0 0
      %322 = vmatpush1.bf16.msra.mxu0 0
      %323 = vmatprep.subr.bf16.mxu0 0
      %324 = vmatpush1.bf16.msra.mxu0 0
      %325 = vmatprep.subr.bf16.mxu0 0
      %326 = vmatpush1.bf16.msra.mxu0 0
      %327 = vmatprep.mubr.bf16.mxu0 0
      %328 = vmatmul.mubr.bf16.gmra.mrb[0].mxu0 %v293
      %v329 = vpop.f32.mrb[0].mxu0
      %v330 = vadd.f32 0.0, %v329
      %v331 = vpop.f32.mrb[0].mxu0
      %v332 = vpop.f32.mrb[0].mxu0
      %v333 = vpop.f32.mrb[0].mxu0
      %334 = vdwg.mxu0
      %v335 = vld [vmem:[%s259] sm:$0xff]
      %v336 = vadd.f32 %v335, %v330
      %v337 = vmul.f32 %v336, %v336
      %v338 = vsel %vm291, %v337, 0.0
      %339 = vadd.xlane.f32.xlu0 %v338
      %v340 = vpop.xlane.xlu0 %339
      %v341 = vrcp.pop 48.0
      %v342 = vmul.f32 %v340, %v341
      %v343 = vadd.f32 %v342, 1e-05
      %v344 = vrsqrt.pop %v343
      %v345 = vmul.f32 %v336, %v344
      %v346 = vld [vmem:[%s3] sm:$0x1]
      %v348 = vlaneseq
      %v349 = vshrl.u32 %v348, 7
      %v350 = vsub.s32 0, %v349
      %v351 = vrot.slane %v346, %v350
      %v353 = vmul.f32 %v345, %v351
      %v354 = vpack.c.bf16 %v353, %v353
      %v355 = vld [vmem:[%s4] sm:$0xff]
      %v356 = vld [vmem:[%s4 + $0x8] sm:$0xff]
      %v357 = vld [vmem:[%s4 + $0x10] sm:$0xff]
      %v358 = vld [vmem:[%s4 + $0x18] sm:$0xff]
      %v359 = vld [vmem:[%s4 + $0x20] sm:$0xff]
      %v360 = vld [vmem:[%s4 + $0x28] sm:$0xff]
      %v367 = vunpack.c.l.b16 %v355
      %v368 = vunpack.c.h.b16 %v355
      %v369 = vunpack.c.l.b16 %v356
      %v370 = vunpack.c.h.b16 %v356
      %v371 = vunpack.c.l.b16 %v357
      %v372 = vunpack.c.h.b16 %v357
      %v373 = vunpack.c.l.b16 %v358
      %v374 = vunpack.c.h.b16 %v358
      %v375 = vunpack.c.l.b16 %v359
      %v376 = vunpack.c.h.b16 %v359
      %v377 = vunpack.c.l.b16 %v360
      %v378 = vunpack.c.h.b16 %v360
      %v379 = vpack.c.b16 %v369, %v367
      %v380 = vpack.c.b16 %v370, %v368
      %v381 = vpack.c.b16 %v373, %v371
      %v382 = vpack.c.b16 %v374, %v372
      %v383 = vpack.c.b16 %v377, %v375
      %v384 = vpack.c.b16 %v378, %v376
      %v392 = vsel %vm291, %v354, 0
      %394 = vmatprep.subr.bf16.mxu0 %v380
      %395 = vmatpush1.bf16.msra.mxu0 %v379
      %396 = vmatprep.subr.bf16.mxu0 %v382
      %397 = vmatpush1.bf16.msra.mxu0 %v381
      %398 = vmatprep.subr.bf16.mxu0 %v384
      %399 = vmatpush1.bf16.msra.mxu0 %v383
      %400 = vmatprep.subr.bf16.mxu0 0
      %401 = vmatpush1.bf16.msra.mxu0 0
      %402 = vmatprep.subr.bf16.mxu0 0
      %403 = vmatpush1.bf16.msra.mxu0 0
      %404 = vmatprep.subr.bf16.mxu0 0
      %405 = vmatpush1.bf16.msra.mxu0 0
      %406 = vmatprep.subr.bf16.mxu0 0
      %407 = vmatpush1.bf16.msra.mxu0 0
      %408 = vmatprep.subr.bf16.mxu0 0
      %409 = vmatpush1.bf16.msra.mxu0 0
      %410 = vmatprep.subr.bf16.mxu0 0
      %411 = vmatpush1.bf16.msra.mxu0 0
      %412 = vmatprep.subr.bf16.mxu0 0
      %413 = vmatpush1.bf16.msra.mxu0 0
      %414 = vmatprep.subr.bf16.mxu0 0
      %415 = vmatpush1.bf16.msra.mxu0 0
      %416 = vmatprep.subr.bf16.mxu0 0
      %417 = vmatpush1.bf16.msra.mxu0 0
      %418 = vmatprep.subr.bf16.mxu0 0
      %419 = vmatpush1.bf16.msra.mxu0 0
      %420 = vmatprep.subr.bf16.mxu0 0
      %421 = vmatpush1.bf16.msra.mxu0 0
      %422 = vmatprep.subr.bf16.mxu0 0
      %423 = vmatpush1.bf16.msra.mxu0 0
      %424 = vmatprep.subr.bf16.mxu0 0
      %425 = vmatpush1.bf16.msra.mxu0 0
      %426 = vmatprep.mubr.bf16.mxu0 0
      %427 = vmatmul.mubr.bf16.gmra.mrb[0].mxu0 %v392
      %v428 = vpop.f32.mrb[0].mxu0
      %v429 = vadd.f32 0.0, %v428
      %v430 = vpop.f32.mrb[0].mxu0
      %v431 = vadd.f32 0.0, %v430
      %v432 = vpop.f32.mrb[0].mxu0
      %v433 = vpop.f32.mrb[0].mxu0
      %434 = vdwg.mxu0
      %v435 = vsub.f32 0.0, %v429
      %v436 = vmul.f32 %v435, 1.442695
      %v437 = vpow.pop %v436
      %v438 = vadd.f32 %v437, 1.0
      %v439 = vrcp.pop %v438
      %v440 = vmul.f32 %v429, %v439
      %v441 = vmul.f32 %v440, %v431
      %v442 = vpack.c.bf16 %v441, %v441
      %v443 = vld [vmem:[%s5] sm:$0xf]
      %v444 = vld [vmem:[%s5 + $0x4] sm:$0xf]
      %v445 = vld [vmem:[%s5 + $0x8] sm:$0xf]
      %v446 = vld [vmem:[%s5 + $0xc] sm:$0xf]
      %v447 = vld [vmem:[%s5 + $0x10] sm:$0xf]
      %v448 = vld [vmem:[%s5 + $0x14] sm:$0xf]
      %v449 = vld [vmem:[%s5 + $0x18] sm:$0xf]
      %v450 = vld [vmem:[%s5 + $0x1c] sm:$0xf]
      %v451 = vld [vmem:[%s5 + $0x20] sm:$0xf]
      %v452 = vld [vmem:[%s5 + $0x24] sm:$0xf]
      %v453 = vld [vmem:[%s5 + $0x28] sm:$0xf]
      %v454 = vld [vmem:[%s5 + $0x2c] sm:$0xf]
      %v455 = vld [vmem:[%s5 + $0x30] sm:$0xf]
      %v456 = vld [vmem:[%s5 + $0x34] sm:$0xf]
      %v457 = vld [vmem:[%s5 + $0x38] sm:$0xf]
      %v458 = vld [vmem:[%s5 + $0x3c] sm:$0xf]
      %v475 = vunpack.c.l.b16 %v443
      %v476 = vunpack.c.l.b16 %v444
      %v477 = vunpack.c.l.b16 %v445
      %v478 = vunpack.c.l.b16 %v446
      %v479 = vunpack.c.l.b16 %v447
      %v480 = vunpack.c.l.b16 %v448
      %v481 = vunpack.c.l.b16 %v449
      %v482 = vunpack.c.l.b16 %v450
      %v483 = vunpack.c.l.b16 %v451
      %v484 = vunpack.c.l.b16 %v452
      %v485 = vunpack.c.l.b16 %v453
      %v486 = vunpack.c.l.b16 %v454
      %v487 = vunpack.c.l.b16 %v455
      %v488 = vunpack.c.l.b16 %v456
      %v489 = vunpack.c.l.b16 %v457
      %v490 = vunpack.c.l.b16 %v458
      %v491 = vpack.c.b16 %v476, %v475
      %v492 = vpack.c.b16 %v478, %v477
      %v493 = vpack.c.b16 %v480, %v479
      %v494 = vpack.c.b16 %v482, %v481
      %v495 = vpack.c.b16 %v484, %v483
      %v496 = vpack.c.b16 %v486, %v485
      %v497 = vpack.c.b16 %v488, %v487
      %v498 = vpack.c.b16 %v490, %v489
      %507 = vmatprep.subr.bf16.mxu0 0
      %508 = vmatpush1.bf16.msra.mxu0 %v491
      %509 = vmatprep.subr.bf16.mxu0 0
      %510 = vmatpush1.bf16.msra.mxu0 %v492
      %511 = vmatprep.subr.bf16.mxu0 0
      %512 = vmatpush1.bf16.msra.mxu0 %v493
      %513 = vmatprep.subr.bf16.mxu0 0
      %514 = vmatpush1.bf16.msra.mxu0 %v494
      %515 = vmatprep.subr.bf16.mxu0 0
      %516 = vmatpush1.bf16.msra.mxu0 %v495
      %517 = vmatprep.subr.bf16.mxu0 0
      %518 = vmatpush1.bf16.msra.mxu0 %v496
      %519 = vmatprep.subr.bf16.mxu0 0
      %520 = vmatpush1.bf16.msra.mxu0 %v497
      %521 = vmatprep.subr.bf16.mxu0 0
      %522 = vmatpush1.bf16.msra.mxu0 %v498
      %523 = vmatprep.subr.bf16.mxu0 0
      %524 = vmatpush1.bf16.msra.mxu0 0
      %525 = vmatprep.subr.bf16.mxu0 0
      %526 = vmatpush1.bf16.msra.mxu0 0
      %527 = vmatprep.subr.bf16.mxu0 0
      %528 = vmatpush1.bf16.msra.mxu0 0
      %529 = vmatprep.subr.bf16.mxu0 0
      %530 = vmatpush1.bf16.msra.mxu0 0
      %531 = vmatprep.subr.bf16.mxu0 0
      %532 = vmatpush1.bf16.msra.mxu0 0
      %533 = vmatprep.subr.bf16.mxu0 0
      %534 = vmatpush1.bf16.msra.mxu0 0
      %535 = vmatprep.subr.bf16.mxu0 0
      %536 = vmatpush1.bf16.msra.mxu0 0
      %537 = vmatprep.subr.bf16.mxu0 0
      %538 = vmatpush1.bf16.msra.mxu0 0
      %539 = vmatprep.mubr.bf16.mxu0 0
      %540 = vmatmul.mubr.bf16.gmra.mrb[0].mxu0 %v442
      %v541 = vpop.f32.mrb[0].mxu0
      %v542 = vadd.f32 0.0, %v541
      %v543 = vpop.f32.mrb[0].mxu0
      %v544 = vpop.f32.mrb[0].mxu0
      %v545 = vpop.f32.mrb[0].mxu0
      %546 = vdwg.mxu0
      %v547 = vadd.f32 %v336, %v542
      %548 = vst.msk [vmem:[%s263] sm:$0xff] %vm291, %v547
      %p549 = scmp.lt.s32.totalorder %s17, 1
      %s550 = scalar_select %p549, %s17, 1
      %s551 = smul.addr %s550, 8
      %s552 = scalar_lea.vmem %s6, %s551
      // Predicated region
      $region45: #{run.9} parent=43 // pred_check
        %p553 = pneg %p171
      $region46: #{run.9} parent=43 // pred_check_branch
        %555 = sbr.rel (%p553) target = $region48
      $region47: #{run.9} parent=43 // pred_region
        _
      $region48: #{run.9} parent=43 // pred_fallthru
        _
    $region44: #{run.9} parent=5 // pred_fallthru
      _
    %p556 = scmp.le.s32.totalorder 2, %s12
    // Predicated region
    $region49: #{run.9} parent=5 // pred_check
      %p557 = pneg %p556
    $region50: #{run.9} parent=5 // pred_check_branch
      %559 = sbr.rel (%p557) target = $region52
    $region51: #{run.9} parent=5 // pred_region
      %s560 = ssub.s32 %s12, 2
      // Predicated region
      $region53: #{run.9} parent=51 // pred_check
        %p561 = pneg %p177
      $region54: #{run.9} parent=51 // pred_check_branch
        %563 = sbr.rel (%p561) target = $region56
      $region55: #{run.9} parent=51 // pred_region
        %p564 = scmp.lt.s32.totalorder %s18, 1
        %s565 = scalar_select %p564, %s18, 1
        %s566 = smul.addr %s565, 8
        %s567 = scalar_lea.vmem %s6, %s566
      $region56: #{run.9} parent=51 // pred_fallthru
        _
    $region52: #{run.9} parent=5 // pred_fallthru
      _
  $region6: #{run.9} parent=0 // loop_footer
    %s16 = sadd.s32 1, %s12
  $region7: #{run.9} parent=0 // loop_footer_branch
    %11 = sbr.rel target = $region3
  $region8: #{run.9} parent=0 // loop_exit
    _

// kernel: run.13
$region0: #{run.13}
  #allocation0 [shape = 'u32[]', space=smem, size = 0x4, offset = 0x4, fixed_abs, tag = 'smem constant byte address 0x4 - core index']
  #allocation1 [shape = 'u32[144,128]{1,0:T(1,128)}', space=vmem, size = 0x12000, scoped, tag = 'internal scratch']
  %s0 = inlined_call_operand.vmem [shape: f32[2,8,48], index: 0, kind: input, shape index: {}]
  %s1 = inlined_call_operand.vmem [shape: f32[1,48], index: 1, kind: input, shape index: {}]
  %s2 = inlined_call_operand.hbm [shape: f32[2,8,48], index: 2, kind: output, shape index: {}]
  %s3 = sld [smem:[#allocation0]]
  $region41: #{run.13} parent=0
    _
  %s5 = ssub.s32 1, %s3
  %s6 = scalar_select 0, %s5, %s3
  $region1: #{run.13} parent=0
    #allocation2 [shape = 'u8[8192]{0}', space=vmem, size = 0x2000, scoped, tag = 'output window, operand 0']
    #allocation3 [shape = 's32[2]{0}', space=sflag, size = 0x8, scoped, tag = 'scoped memory for run.13']
    %7 = vsyncpa [#allocation3], 0
    %s8 = scalar_lea.sflag [#allocation3], 1
    %9 = vsyncpa %s8, 0
    loop: start=0, step=1, limit=4
    $region2: #{run.13} parent=1 // loop_pre_header
      _
    $region3: #{run.13} parent=1 // loop_header
      %s11 = sphi 0, %s15
      %p12 = scmp.ge.s32.totalorder %s11, 4
      %s21 = sphi 0, %s23
      %s24 = sphi 0, %s21
      %s25 = sphi 0, %s24
      %s41 = sphi 0, %s25
      %s45 = sphi 0, %s45
      %s47 = sphi 0, %s45
      %s48 = sphi 0, %s47
      %s62 = sphi 0, %s48
      %s68 = sphi 0, %s70
      %s71 = sphi 0, %s68
      %s72 = sphi 0, %s71
      %s88 = sphi 0, %s72
    $region4: #{run.13} parent=1 // loop_header_branch
      %14 = sbr.rel (%p12) target = $region8
    $region5: #{run.13} parent=1 // loop_body
      %s16 = ssub.s32 %s11, 1
      %s17 = ssub.s32 %s11, 2
      %s18 = sadd.s32 %s11, 1
      %s19 = ssub.s32 %s11, %s18
      %p20 = scmp.eq.s32.totalorder %s19, 0
      %s22 = sadd.s32 %s21, 1
      %s23 = scalar_select %p20, %s21, %s22
      %p26 = pneg %p20
      %p27 = scmp.eq.s32.totalorder %s11, 1
      %p28 = por %p26, %p27
      %p29 = scmp.ne.s32.totalorder %s21, %s24
      %p30 = scmp.eq.s32.totalorder %s11, 0
      %p31 = por %p29, %p30
      %p32 = scmp.ne.s32.totalorder %s21, %s24
      %p33 = scmp.eq.s32.totalorder %s16, 1
      %p34 = por %p32, %p33
      %p35 = scmp.ne.s32.totalorder %s24, %s25
      %p36 = scmp.eq.s32.totalorder %s16, 0
      %p37 = por %p35, %p36
      %p38 = scmp.ne.s32.totalorder %s24, %s25
      %p39 = scmp.eq.s32.totalorder %s17, 1
      %p40 = por %p38, %p39
      %p42 = scmp.ne.s32.totalorder %s25, %s41
      %p43 = scmp.eq.s32.totalorder %s17, 0
      %p44 = por %p42, %p43
      %s46 = sadd.s32 %s45, 1
      %p49 = scmp.eq.s32.totalorder %s11, 1
      %p50 = scmp.ne.s32.totalorder %s45, %s47
      %p51 = scmp.eq.s32.totalorder %s11, 0
      %p52 = por %p50, %p51
      %p53 = scmp.ne.s32.totalorder %s45, %s47
      %p54 = scmp.eq.s32.totalorder %s16, 1
      %p55 = por %p53, %p54
      %p56 = scmp.ne.s32.totalorder %s47, %s48
      %p57 = scmp.eq.s32.totalorder %s16, 0
      %p58 = por %p56, %p57
      %p59 = scmp.ne.s32.totalorder %s47, %s48
      %p60 = scmp.eq.s32.totalorder %s17, 1
      %p61 = por %p59, %p60
      %p63 = scmp.ne.s32.totalorder %s48, %s62
      %p64 = scmp.eq.s32.totalorder %s17, 0
      %p65 = por %p63, %p64
      %s66 = ssub.s32 %s11, %s18
      %p67 = scmp.eq.s32.totalorder %s66, 0
      %s69 = sadd.s32 %s68, 1
      %s70 = scalar_select %p67, %s68, %s69
      %p73 = pneg %p67
      %p74 = scmp.eq.s32.totalorder %s11, 1
      %p75 = por %p73, %p74
      %p76 = scmp.ne.s32.totalorder %s68, %s71
      %p77 = scmp.eq.s32.totalorder %s11, 0
      %p78 = por %p76, %p77
      %p79 = scmp.ne.s32.totalorder %s68, %s71
      %p80 = scmp.eq.s32.totalorder %s16, 1
      %p81 = por %p79, %p80
      %p82 = scmp.ne.s32.totalorder %s71, %s72
      %p83 = scmp.eq.s32.totalorder %s16, 0
      %p84 = por %p82, %p83
      %p85 = scmp.ne.s32.totalorder %s71, %s72
      %p86 = scmp.eq.s32.totalorder %s17, 1
      %p87 = por %p85, %p86
      %p89 = scmp.ne.s32.totalorder %s72, %s88
      %p90 = scmp.eq.s32.totalorder %s17, 0
      %p91 = por %p89, %p90
      %p92 = scmp.le.s32.totalorder 1, %s11
      %p93 = scmp.lt.s32.totalorder %s11, 3
      %p94 = pnand %p92, %p93
      %p95 = pneg %p94
      // Predicated region
      $region9: #{run.13} parent=5 // pred_check
        _
      $region10: #{run.13} parent=5 // pred_check_branch
        %97 = sbr.rel (%p94) target = $region12
      $region11: #{run.13} parent=5 // pred_region
        %s98 = ssub.s32 %s11, 1
        // Predicated region
        $region13: #{run.13} parent=11 // pred_check
          %p99 = pneg %p58
        $region14: #{run.13} parent=11 // pred_check_branch
          %101 = sbr.rel (%p99) target = $region16
        $region15: #{run.13} parent=11 // pred_region
          _
        $region16: #{run.13} parent=11 // pred_fallthru
          _
      $region12: #{run.13} parent=5 // pred_fallthru
        _
      %p102 = scmp.lt.s32.totalorder %s11, 2
      // Predicated region
      $region17: #{run.13} parent=5 // pred_check
        %p103 = pneg %p102
      $region18: #{run.13} parent=5 // pred_check_branch
        %105 = sbr.rel (%p103) target = $region20
      $region19: #{run.13} parent=5 // pred_region
        // Predicated region
        $region21: #{run.13} parent=19 // pred_check
          %p106 = pneg %p31
        $region22: #{run.13} parent=19 // pred_check_branch
          %108 = sbr.rel (%p106) target = $region24
        $region23: #{run.13} parent=19 // pred_region
          %p109 = scmp.lt.s32.totalorder %s11, 1
          %s110 = scalar_select %p109, %s11, 1
          %s111 = smul.addr %s110, 8
          %s112 = scalar_lea.vmem %s0, %s111
        $region24: #{run.13} parent=19 // pred_fallthru
          _
      $region20: #{run.13} parent=5 // pred_fallthru
        _
      %p113 = scmp.le.s32.totalorder 1, %s11
      %p114 = scmp.lt.s32.totalorder %s11, 3
      %p115 = pnand %p113, %p114
      %p116 = pneg %p115
      // Predicated region
      $region25: #{run.13} parent=5 // pred_check
        _
      $region26: #{run.13} parent=5 // pred_check_branch
        %118 = sbr.rel (%p115) target = $region28
      $region27: #{run.13} parent=5 // pred_region
        %s119 = ssub.s32 %s11, 1
        %p120 = scmp.lt.s32.totalorder %s16, 1
        %s121 = scalar_select %p120, %s16, 1
        %s122 = smul.addr %s121, 8
        %s123 = scalar_lea.vmem %s0, %s122
        %p124 = pneg %p37
        %p125 = pneg %p34
        %p126 = pneg %p58
        %p127 = pneg %p55
        %p128 = pneg %p84
        %p129 = pneg %p81
        %s130 = sand.u32 %s71, 1
        %s131 = scalar_lea.sflag [#allocation3], %s130
        %s132 = sand.u32 %s71, 1
        %s133 = smul.addr %s132, 8
        %s134 = scalar_lea.vmem [#allocation2], %s133
        %p135 = scmp.lt.s32.totalorder %s16, 1
        %s136 = scalar_select %p135, %s16, 1
        %s137 = smul.addr %s136, 8
        %s138 = scalar_lea.vmem %s0, %s137
        %v139 = vld [vmem:[%s138] sm:$0xff]
        %v140 = vmul.f32 %v139, %v139
        %vm141 = vcmask 392192
        %v142 = vsel %vm141, %v140, 0.0
        %143 = vadd.xlane.f32.xlu0 %v142
        %v144 = vpop.xlane.xlu0 %143
        %v145 = vrcp.pop 48.0
        %v146 = vmul.f32 %v144, %v145
        %v147 = vadd.f32 %v146, 1e-05
        %v148 = vrsqrt.pop %v147
        %v149 = vmul.f32 %v139, %v148
        %v150 = vld [vmem:[%s1] sm:$0x1]
        %v152 = vlaneseq
        %v153 = vshrl.u32 %v152, 7
        %v154 = vsub.s32 0, %v153
        %v155 = vrot.slane %v150, %v154
        %v157 = vmul.f32 %v149, %v155
        %158 = vst.msk [vmem:[%s134] sm:$0xff] %vm141, %v157
        %s159 = sand.u32 %s71, 1
        %s160 = scalar_lea.sflag [#allocation3], %s159
        %s161 = sand.u32 %s71, 1
        %s162 = smul.addr %s161, 8
        %s163 = scalar_lea.vmem [#allocation2], %s162
        // Predicated region
        $region29: #{run.13} parent=27 // pred_check
          %p164 = pneg %p81
        $region30: #{run.13} parent=27 // pred_check_branch
          %166 = sbr.rel (%p164) target = $region32
        $region31: #{run.13} parent=27 // pred_region
          %s168 = ssub.s32 128, 128
          %169 = vsyncadd %s160, %s168
          %s170 = smul.addr %s16, 128
          %s171 = scalar_lea.hbm %s2, %s170
          %s173 = sshll.u32 %s163, 4
          %s174 = int_to_ptr.vmem [resolvable:$true] %s173
          %176 = dma.vmem_to_hbm [thread:$0]  %s174, 128, %s171, %s160
        $region32: #{run.13} parent=27 // pred_fallthru
          _
      $region28: #{run.13} parent=5 // pred_fallthru
        _
      %p177 = scmp.le.s32.totalorder 2, %s11
      // Predicated region
      $region33: #{run.13} parent=5 // pred_check
        %p178 = pneg %p177
      $region34: #{run.13} parent=5 // pred_check_branch
        %180 = sbr.rel (%p178) target = $region36
      $region35: #{run.13} parent=5 // pred_region
        %s181 = ssub.s32 %s11, 2
        // Predicated region
        $region37: #{run.13} parent=35 // pred_check
          %p182 = pneg %p87
        $region38: #{run.13} parent=35 // pred_check_branch
          %184 = sbr.rel (%p182) target = $region40
        $region39: #{run.13} parent=35 // pred_region
          %s185 = sand.u32 %s72, 1
          %s186 = scalar_lea.sflag [#allocation3], %s185
          %s187 = sand.u32 %s72, 1
          %s188 = smul.addr %s187, 8
          %s189 = scalar_lea.vmem [#allocation2], %s188
          %190 = dma.done %s186, 128
        $region40: #{run.13} parent=35 // pred_fallthru
          _
      $region36: #{run.13} parent=5 // pred_fallthru
        _
    $region6: #{run.13} parent=1 // loop_footer
      %s15 = sadd.s32 1, %s11
    $region7: #{run.13} parent=1 // loop_footer_branch
      %10 = sbr.rel target = $region3
    $region8: #{run.13} parent=1 // loop_exit
      _
    %191 = vsyncpa [#allocation3], 1
    %s192 = scalar_lea.sflag [#allocation3], 1
    %193 = vsyncpa %s192, 1

</llo_original>
